<compile_context>
chip_gen: v7x
topology: tpu7x:2x2x1
jax: 0.10.0
libtpu: 0.0.40
codegen_flags: <defaults>
</compile_context>

<pallas_src>
import functools

import jax
import jax.numpy as jnp
from jax.experimental import pallas as pl
from jax.experimental.pallas import tpu as pltpu

DIM = 128
LEAKY_SLOPE = 0.01  # nn.LeakyReLU() default negative_slope
VMEM_LIMIT = 32 * 1024 * 1024


def _pick_tb(B, tb_max):
    """Largest divisor of B that is <= tb_max while keeping >= 2 grid steps
    (so both v7x TensorCores get work on the 'parallel' axis) when B > 1."""
    best = 1
    for tb in range(1, min(B, tb_max) + 1):
        if B % tb == 0 and (B // tb >= 2 or B == 1):
            best = tb
    return best


# ---------------------------------------------------------------------------
# XLA glue: stride-2, pad-1, 3x3 im2col (lane-dense K = 9*Cin, tap-major)
# ---------------------------------------------------------------------------
def _im2col_3x3_s2(x_nhwc):
    """(B, H, W, C) -> (B*Ho*Wo, 9*C) bf16; column t*C+c holds tap t=(di*3+dj),
    channel c, i.e. x_padded[2*ho+di, 2*wo+dj, c]."""
    B, H, W, C = x_nhwc.shape
    Ho, Wo = H // 2, W // 2
    xp = jnp.pad(x_nhwc, ((0, 0), (1, 1), (1, 1), (0, 0)))
    taps = [xp[:, di:di + 2 * Ho:2, dj:dj + 2 * Wo:2, :]
            for di in range(3) for dj in range(3)]
    col = jnp.concatenate(taps, axis=-1)          # (B, Ho, Wo, 9*C)
    return col.reshape(B * Ho * Wo, 9 * C).astype(jnp.bfloat16)


def _conv_weight(w_oihw):
    """(Cout, Cin, 3, 3) -> (9*Cin, Cout) bf16, row = (di*3+dj)*Cin + c."""
    cout, cin = w_oihw.shape[0], w_oihw.shape[1]
    wk = jnp.transpose(w_oihw, (2, 3, 1, 0)).reshape(9 * cin, cout)
    return wk.astype(jnp.bfloat16)


# ---------------------------------------------------------------------------
# Pallas kernels: one long-K matmul + f32 bias + LeakyReLU (+ fused head)
# ---------------------------------------------------------------------------
def _conv_mm_kernel(leaky_slope, x_ref, w_ref, b_ref, o_ref):
    # x_ref: (TM, K) bf16   w_ref: (K, Cout) bf16   b_ref: (1, Cout) f32
    acc = jnp.dot(x_ref[...], w_ref[...], preferred_element_type=jnp.float32)
    acc = acc + b_ref[...]
    acc = jnp.where(acc >= 0, acc, leaky_slope * acc)
    o_ref[...] = acc.astype(o_ref.dtype)


def _conv_mm_head_kernel(leaky_slope, x_ref, w_ref, b_ref, wl_ref, o_ref):
    # Same matmul epilogue, then fuse the Linear(8192->1) head: multiply the
    # f32 activation tile by the permuted head weight (f32) and lane-reduce.
    # o_ref: (TM, 1) f32 per-output-pixel partial head contributions.
    acc = jnp.dot(x_ref[...], w_ref[...], preferred_element_type=jnp.float32)
    acc = acc + b_ref[...]
    acc = jnp.where(acc >= 0, acc, leaky_slope * acc)
    o_ref[...] = jnp.sum(acc * wl_ref[...], axis=-1, keepdims=True)


def _conv_layer(col, wk, b2, *, B, rpb, tb_max, leaky_slope=LEAKY_SLOPE, wl=None):
    """col: (B*rpb, K) bf16 im2col; wk: (K, Cout) bf16; b2: (1, Cout) f32.
    wl=None  -> returns (B*rpb, Cout) bf16 activation.
    wl given -> (rpb, Cout) f32 head weight; returns (B*rpb, 1) f32 partials."""
    M, K = col.shape
    Cout = wk.shape[1]
    TB = _pick_tb(B, tb_max)
    TM = TB * rpb
    grid = (B // TB,)
    cparams = pltpu.CompilerParams(
        dimension_semantics=("parallel",),
        vmem_limit_bytes=VMEM_LIMIT,
    )

    if wl is None:
        return pl.pallas_call(
            functools.partial(_conv_mm_kernel, leaky_slope),
            out_shape=jax.ShapeDtypeStruct((M, Cout), jnp.bfloat16),
            grid_spec=pltpu.PrefetchScalarGridSpec(
                num_scalar_prefetch=0,
                grid=grid,
                in_specs=[
                    pl.BlockSpec((TM, K), lambda i: (i, 0)),
                    pl.BlockSpec((K, Cout), lambda i: (0, 0)),
                    pl.BlockSpec((1, Cout), lambda i: (0, 0)),
                ],
                out_specs=pl.BlockSpec((TM, Cout), lambda i: (i, 0)),
            ),
            compiler_params=cparams,
        )(col, wk, b2)

    # Fused linear head: grid-invariant (TM, Cout) f32 head weight tile.
    wl_tiled = jnp.tile(wl, (TB, 1))
    return pl.pallas_call(
        functools.partial(_conv_mm_head_kernel, leaky_slope),
        out_shape=jax.ShapeDtypeStruct((M, 1), jnp.float32),
        grid_spec=pltpu.PrefetchScalarGridSpec(
            num_scalar_prefetch=0,
            grid=grid,
            in_specs=[
                pl.BlockSpec((TM, K), lambda i: (i, 0)),
                pl.BlockSpec((K, Cout), lambda i: (0, 0)),
                pl.BlockSpec((1, Cout), lambda i: (0, 0)),
                pl.BlockSpec((TM, Cout), lambda i: (0, 0)),
            ],
            out_specs=pl.BlockSpec((TM, 1), lambda i: (i, 0)),
        ),
        compiler_params=cparams,
    )(col, wk, b2, wl_tiled)


# ---------------------------------------------------------------------------
# Full Discriminator forward
# ---------------------------------------------------------------------------
def init_params(key):
    ks = jax.random.split(key, 8)

    def norm(k, shape, scale):
        return scale * jax.random.normal(k, shape, dtype=jnp.float32)

    return {
        "w1": norm(ks[0], (DIM, 3, 3, 3), 0.05),
        "b1": norm(ks[1], (DIM,), 0.05),
        "w2": norm(ks[2], (2 * DIM, DIM, 3, 3), 0.05),
        "b2": norm(ks[3], (2 * DIM,), 0.05),
        "w3": norm(ks[4], (4 * DIM, 2 * DIM, 3, 3), 0.05),
        "b3": norm(ks[5], (4 * DIM,), 0.05),
        "wl": norm(ks[6], (1, 4 * 4 * 4 * DIM), 0.05),
        "bl": norm(ks[7], (1,), 0.05),
    }


@jax.jit
def discriminator_forward(params, x_nchw):
    B = x_nchw.shape[0]
    # NCHW (PyTorch) -> NHWC (lane-dense channels), bf16 MXU operand.
    x = jnp.transpose(x_nchw, (0, 2, 3, 1)).astype(jnp.bfloat16)

    # conv1: (B, 32, 32, 3) -> (B, 16, 16, 128), K = 27
    col1 = _im2col_3x3_s2(x)
    h1 = _conv_layer(col1, _conv_weight(params["w1"]),
                     params["b1"].reshape(1, -1).astype(jnp.float32),
                     B=B, rpb=16 * 16, tb_max=16)
    h1 = h1.reshape(B, 16, 16, DIM)

    # conv2: (B, 16, 16, 128) -> (B, 8, 8, 256), K = 1152
    col2 = _im2col_3x3_s2(h1)
    h2 = _conv_layer(col2, _conv_weight(params["w2"]),
                     params["b2"].reshape(1, -1).astype(jnp.float32),
                     B=B, rpb=8 * 8, tb_max=32)
    h2 = h2.reshape(B, 8, 8, 2 * DIM)

    # conv3 + fused Linear(8192 -> 1) head: K = 2304, output = head partials.
    # PyTorch flattens (C, H, W); permute the head weight once to the NHWC
    # flatten order so the in-kernel multiply needs no activation transpose.
    col3 = _im2col_3x3_s2(h2)
    wl_perm = params["wl"].reshape(4 * DIM, 4, 4)
    wl_perm = jnp.transpose(wl_perm, (1, 2, 0)).reshape(16, 4 * DIM)
    part = _conv_layer(col3, _conv_weight(params["w3"]),
                       params["b3"].reshape(1, -1).astype(jnp.float32),
                       B=B, rpb=4 * 4, tb_max=32,
                       wl=wl_perm.astype(jnp.float32))          # (B*16, 1) f32

    out = part.reshape(B, 16).sum(axis=-1, keepdims=True)
    return out + params["bl"].reshape(1, 1).astype(jnp.float32)  # (B, 1) f32


if __name__ == "__main__":
    key = jax.random.PRNGKey(0)
    k_params, k_x = jax.random.split(key)
    params = init_params(k_params)

    # Input must be (B, 3, 32, 32): three stride-2 convs -> 4x4 spatial,
    # matching the 4*4*4*DIM linear layer.
    x = jax.random.normal(k_x, (2, 3, 32, 32), dtype=jnp.float32)

    out = discriminator_forward(params, x)
    out = jax.block_until_ready(out)
    assert out.shape == (2, 1), out.shape
    print("KERNEL_OK")
</pallas_src>

<mosaic_0001>
module attributes {stable_mosaic.version = 11 : i64} {
  func.func @_conv_mm_kernel(%arg0: i32, %arg1: memref<256x27xbf16, #tpu.memory_space<vmem>>, %arg2: memref<27x128xbf16, #tpu.memory_space<vmem>>, %arg3: memref<1x128xf32, #tpu.memory_space<vmem>>, %arg4: memref<256x128xbf16, #tpu.memory_space<vmem>>) attributes {dimension_semantics = [#tpu.dimension_semantics<parallel>], iteration_bounds = array<i64: 2>, scalar_prefetch = 0 : i64, scratch_operands = 0 : i64, tpu.core_type = #tpu.core_type<tc>, window_params = [{transform_indices = @transform_0, window_bounds = array<i64: 256, 27>}, {pipeline_mode = #tpu.pipeline_mode<synchronous>, transform_indices = @transform_1, window_bounds = array<i64: 27, 128>}, {pipeline_mode = #tpu.pipeline_mode<synchronous>, transform_indices = @transform_2, window_bounds = array<i64: 1, 128>}, {transform_indices = @transform_3, window_bounds = array<i64: 256, 128>}]} {
    %c0 = arith.constant 0 : index
    %c0_0 = arith.constant 0 : index
    %0 = vector.load %arg1[%c0, %c0_0] : memref<256x27xbf16, #tpu.memory_space<vmem>>, vector<256x27xbf16>
    %c0_1 = arith.constant 0 : index
    %c0_2 = arith.constant 0 : index
    %1 = vector.load %arg2[%c0_1, %c0_2] : memref<27x128xbf16, #tpu.memory_space<vmem>>, vector<27x128xbf16>
    %cst = arith.constant dense<0.000000e+00> : vector<256x128xf32>
    %2 = tpu.matmul %0, %1, %cst {dimension_numbers = #tpu.dot_dimension_numbers<[1], [0], [0], [1], [0, 0, 1, 1], [], []>} : vector<256x27xbf16>, vector<27x128xbf16>, vector<256x128xf32> -> vector<256x128xf32>
    %c0_3 = arith.constant 0 : index
    %c0_4 = arith.constant 0 : index
    %3 = vector.load %arg3[%c0_3, %c0_4] : memref<1x128xf32, #tpu.memory_space<vmem>>, vector<1x128xf32>
    %4 = vector.broadcast %3 : vector<1x128xf32> to vector<256x128xf32>
    %5 = arith.addf %2, %4 : vector<256x128xf32>
    %cst_5 = arith.constant 0.000000e+00 : f32
    %6 = vector.broadcast %cst_5 : f32 to vector<256x128xf32>
    %7 = arith.cmpf oge, %5, %6 : vector<256x128xf32>
    %cst_6 = arith.constant 0.00999999977 : f32
    %8 = vector.broadcast %cst_6 : f32 to vector<256x128xf32>
    %9 = arith.mulf %8, %5 : vector<256x128xf32>
    %10 = arith.select %7, %5, %9 : vector<256x128xi1>, vector<256x128xf32>
    %11 = arith.truncf %10 : vector<256x128xf32> to vector<256x128xbf16>
    %c0_7 = arith.constant 0 : index
    %c0_8 = arith.constant 0 : index
    %12 = vector.load %arg4[%c0_7, %c0_8] : memref<256x128xbf16, #tpu.memory_space<vmem>>, vector<256x128xbf16>
    tpu.vector_store %arg4[%c0_7, %c0_8], %11 {strides = array<i32>} : memref<256x128xbf16, #tpu.memory_space<vmem>>, vector<256x128xbf16>,
    return
  }
  func.func @transform_0(%arg0: i32) -> (i32, i32) {
    %c0_i32 = arith.constant 0 : i32
    %c0_i32_0 = arith.constant 0 : i32
    return %arg0, %c0_i32 : i32, i32
  }
  func.func @transform_1(%arg0: i32) -> (i32, i32) {
    %c0_i32 = arith.constant 0 : i32
    %c0_i32_0 = arith.constant 0 : i32
    %c0_i32_1 = arith.constant 0 : i32
    return %c0_i32, %c0_i32_0 : i32, i32
  }
  func.func @transform_2(%arg0: i32) -> (i32, i32) {
    %c0_i32 = arith.constant 0 : i32
    %c0_i32_0 = arith.constant 0 : i32
    %c0_i32_1 = arith.constant 0 : i32
    return %c0_i32, %c0_i32_0 : i32, i32
  }
  func.func @transform_3(%arg0: i32) -> (i32, i32) {
    %c0_i32 = arith.constant 0 : i32
    %c0_i32_0 = arith.constant 0 : i32
    return %arg0, %c0_i32 : i32, i32
  }
}

module attributes {stable_mosaic.version = 11 : i64} {
  func.func @_conv_mm_kernel(%arg0: i32, %arg1: memref<64x1152xbf16, #tpu.memory_space<vmem>>, %arg2: memref<1152x256xbf16, #tpu.memory_space<vmem>>, %arg3: memref<1x256xf32, #tpu.memory_space<vmem>>, %arg4: memref<64x256xbf16, #tpu.memory_space<vmem>>) attributes {dimension_semantics = [#tpu.dimension_semantics<parallel>], iteration_bounds = array<i64: 2>, scalar_prefetch = 0 : i64, scratch_operands = 0 : i64, tpu.core_type = #tpu.core_type<tc>, window_params = [{transform_indices = @transform_0, window_bounds = array<i64: 64, 1152>}, {pipeline_mode = #tpu.pipeline_mode<synchronous>, transform_indices = @transform_1, window_bounds = array<i64: 1152, 256>}, {pipeline_mode = #tpu.pipeline_mode<synchronous>, transform_indices = @transform_2, window_bounds = array<i64: 1, 256>}, {transform_indices = @transform_3, window_bounds = array<i64: 64, 256>}]} {
    %c0 = arith.constant 0 : index
    %c0_0 = arith.constant 0 : index
    %0 = vector.load %arg1[%c0, %c0_0] : memref<64x1152xbf16, #tpu.memory_space<vmem>>, vector<64x1152xbf16>
    %c0_1 = arith.constant 0 : index
    %c0_2 = arith.constant 0 : index
    %1 = vector.load %arg2[%c0_1, %c0_2] : memref<1152x256xbf16, #tpu.memory_space<vmem>>, vector<1152x256xbf16>
    %cst = arith.constant dense<0.000000e+00> : vector<64x256xf32>
    %2 = tpu.matmul %0, %1, %cst {dimension_numbers = #tpu.dot_dimension_numbers<[1], [0], [0], [1], [0, 0, 1, 1], [], []>} : vector<64x1152xbf16>, vector<1152x256xbf16>, vector<64x256xf32> -> vector<64x256xf32>
    %c0_3 = arith.constant 0 : index
    %c0_4 = arith.constant 0 : index
    %3 = vector.load %arg3[%c0_3, %c0_4] : memref<1x256xf32, #tpu.memory_space<vmem>>, vector<1x256xf32>
    %4 = vector.broadcast %3 : vector<1x256xf32> to vector<64x256xf32>
    %5 = arith.addf %2, %4 : vector<64x256xf32>
    %cst_5 = arith.constant 0.000000e+00 : f32
    %6 = vector.broadcast %cst_5 : f32 to vector<64x256xf32>
    %7 = arith.cmpf oge, %5, %6 : vector<64x256xf32>
    %cst_6 = arith.constant 0.00999999977 : f32
    %8 = vector.broadcast %cst_6 : f32 to vector<64x256xf32>
    %9 = arith.mulf %8, %5 : vector<64x256xf32>
    %10 = arith.select %7, %5, %9 : vector<64x256xi1>, vector<64x256xf32>
    %11 = arith.truncf %10 : vector<64x256xf32> to vector<64x256xbf16>
    %c0_7 = arith.constant 0 : index
    %c0_8 = arith.constant 0 : index
    %12 = vector.load %arg4[%c0_7, %c0_8] : memref<64x256xbf16, #tpu.memory_space<vmem>>, vector<64x256xbf16>
    tpu.vector_store %arg4[%c0_7, %c0_8], %11 {strides = array<i32>} : memref<64x256xbf16, #tpu.memory_space<vmem>>, vector<64x256xbf16>,
    return
  }
  func.func @transform_0(%arg0: i32) -> (i32, i32) {
    %c0_i32 = arith.constant 0 : i32
    %c0_i32_0 = arith.constant 0 : i32
    return %arg0, %c0_i32 : i32, i32
  }
  func.func @transform_1(%arg0: i32) -> (i32, i32) {
    %c0_i32 = arith.constant 0 : i32
    %c0_i32_0 = arith.constant 0 : i32
    %c0_i32_1 = arith.constant 0 : i32
    return %c0_i32, %c0_i32_0 : i32, i32
  }
  func.func @transform_2(%arg0: i32) -> (i32, i32) {
    %c0_i32 = arith.constant 0 : i32
    %c0_i32_0 = arith.constant 0 : i32
    %c0_i32_1 = arith.constant 0 : i32
    return %c0_i32, %c0_i32_0 : i32, i32
  }
  func.func @transform_3(%arg0: i32) -> (i32, i32) {
    %c0_i32 = arith.constant 0 : i32
    %c0_i32_0 = arith.constant 0 : i32
    return %arg0, %c0_i32 : i32, i32
  }
}

module attributes {stable_mosaic.version = 11 : i64} {
  func.func @_conv_mm_head_kernel(%arg0: i32, %arg1: memref<16x2304xbf16, #tpu.memory_space<vmem>>, %arg2: memref<2304x512xbf16, #tpu.memory_space<vmem>>, %arg3: memref<1x512xf32, #tpu.memory_space<vmem>>, %arg4: memref<16x512xf32, #tpu.memory_space<vmem>>, %arg5: memref<16x1xf32, #tpu.memory_space<vmem>>) attributes {dimension_semantics = [#tpu.dimension_semantics<parallel>], iteration_bounds = array<i64: 2>, scalar_prefetch = 0 : i64, scratch_operands = 0 : i64, tpu.core_type = #tpu.core_type<tc>, window_params = [{transform_indices = @transform_0, window_bounds = array<i64: 16, 2304>}, {pipeline_mode = #tpu.pipeline_mode<synchronous>, transform_indices = @transform_1, window_bounds = array<i64: 2304, 512>}, {pipeline_mode = #tpu.pipeline_mode<synchronous>, transform_indices = @transform_2, window_bounds = array<i64: 1, 512>}, {pipeline_mode = #tpu.pipeline_mode<synchronous>, transform_indices = @transform_3, window_bounds = array<i64: 16, 512>}, {transform_indices = @transform_4, window_bounds = array<i64: 16, 1>}]} {
    %c0 = arith.constant 0 : index
    %c0_0 = arith.constant 0 : index
    %0 = vector.load %arg1[%c0, %c0_0] : memref<16x2304xbf16, #tpu.memory_space<vmem>>, vector<16x2304xbf16>
    %c0_1 = arith.constant 0 : index
    %c0_2 = arith.constant 0 : index
    %1 = vector.load %arg2[%c0_1, %c0_2] : memref<2304x512xbf16, #tpu.memory_space<vmem>>, vector<2304x512xbf16>
    %cst = arith.constant dense<0.000000e+00> : vector<16x512xf32>
    %2 = tpu.matmul %0, %1, %cst {dimension_numbers = #tpu.dot_dimension_numbers<[1], [0], [0], [1], [0, 0, 1, 1], [], []>} : vector<16x2304xbf16>, vector<2304x512xbf16>, vector<16x512xf32> -> vector<16x512xf32>
    %c0_3 = arith.constant 0 : index
    %c0_4 = arith.constant 0 : index
    %3 = vector.load %arg3[%c0_3, %c0_4] : memref<1x512xf32, #tpu.memory_space<vmem>>, vector<1x512xf32>
    %4 = vector.broadcast %3 : vector<1x512xf32> to vector<16x512xf32>
    %5 = arith.addf %2, %4 : vector<16x512xf32>
    %cst_5 = arith.constant 0.000000e+00 : f32
    %6 = vector.broadcast %cst_5 : f32 to vector<16x512xf32>
    %7 = arith.cmpf oge, %5, %6 : vector<16x512xf32>
    %cst_6 = arith.constant 0.00999999977 : f32
    %8 = vector.broadcast %cst_6 : f32 to vector<16x512xf32>
    %9 = arith.mulf %8, %5 : vector<16x512xf32>
    %10 = arith.select %7, %5, %9 : vector<16x512xi1>, vector<16x512xf32>
    %c0_7 = arith.constant 0 : index
    %c0_8 = arith.constant 0 : index
    %11 = vector.load %arg4[%c0_7, %c0_8] : memref<16x512xf32, #tpu.memory_space<vmem>>, vector<16x512xf32>
    %12 = arith.mulf %10, %11 : vector<16x512xf32>
    %cst_9 = arith.constant dense<0.000000e+00> : vector<16xf32>
    %13 = vector.multi_reduction <add>, %12, %cst_9 [1] : vector<16x512xf32> to vector<16xf32>
    %14 = vector.shape_cast %13 : vector<16xf32> to vector<16x1xf32>
    %c0_10 = arith.constant 0 : index
    %c0_11 = arith.constant 0 : index
    %15 = vector.load %arg5[%c0_10, %c0_11] : memref<16x1xf32, #tpu.memory_space<vmem>>, vector<16x1xf32>
    tpu.vector_store %arg5[%c0_10, %c0_11], %14 {strides = array<i32>} : memref<16x1xf32, #tpu.memory_space<vmem>>, vector<16x1xf32>,
    return
  }
  func.func @transform_0(%arg0: i32) -> (i32, i32) {
    %c0_i32 = arith.constant 0 : i32
    %c0_i32_0 = arith.constant 0 : i32
    return %arg0, %c0_i32 : i32, i32
  }
  func.func @transform_1(%arg0: i32) -> (i32, i32) {
    %c0_i32 = arith.constant 0 : i32
    %c0_i32_0 = arith.constant 0 : i32
    %c0_i32_1 = arith.constant 0 : i32
    return %c0_i32, %c0_i32_0 : i32, i32
  }
  func.func @transform_2(%arg0: i32) -> (i32, i32) {
    %c0_i32 = arith.constant 0 : i32
    %c0_i32_0 = arith.constant 0 : i32
    %c0_i32_1 = arith.constant 0 : i32
    return %c0_i32, %c0_i32_0 : i32, i32
  }
  func.func @transform_3(%arg0: i32) -> (i32, i32) {
    %c0_i32 = arith.constant 0 : i32
    %c0_i32_0 = arith.constant 0 : i32
    %c0_i32_1 = arith.constant 0 : i32
    return %c0_i32, %c0_i32_0 : i32, i32
  }
  func.func @transform_4(%arg0: i32) -> (i32, i32) {
    %c0_i32 = arith.constant 0 : i32
    %c0_i32_0 = arith.constant 0 : i32
    return %arg0, %c0_i32 : i32, i32
  }
}

</mosaic_0001>

<llo_original>
// kernel: discriminator_forward.3
$region0: #{discriminator_forward.3}
  #allocation0 [shape = 'u32[]', space=smem, size = 0x4, offset = 0x4, fixed_abs, tag = 'smem constant byte address 0x4 - core index']
  #allocation1 [shape = 'u32[144,128]{1,0:T(1,128)}', space=vmem, size = 0x12000, scoped, tag = 'internal scratch']
  %s0 = inlined_call_operand.vmem [shape: bf16[512,27], index: 0, kind: input, shape index: {}]
  %s1 = inlined_call_operand.vmem [shape: bf16[27,128], index: 1, kind: input, shape index: {}]
  %s2 = inlined_call_operand.hbm [shape: f32[1,128], index: 2, kind: input, shape index: {}]
  %s3 = inlined_call_operand.vmem [shape: bf16[512,128], index: 3, kind: output, shape index: {}]
  %s4 = sld [smem:[#allocation0]]
  $region49: #{discriminator_forward.3} parent=0
    _
  %s6 = ssub.s32 1, %s4
  %s7 = scalar_select 0, %s6, %s4
  $region1: #{discriminator_forward.3} parent=0
    #allocation2 [shape = 'u8[512]{0}', space=vmem, size = 0x400, scoped, tag = 'input window, operand 2, single buffered']
    #allocation3 [shape = 's32[2]{0}', space=sflag, size = 0x8, scoped, tag = 'scoped memory for discriminator_forward.3']
    %8 = vsyncpa [#allocation3], 0
    loop: start=0, step=1, limit=4
    $region2: #{discriminator_forward.3} parent=1 // loop_pre_header
      _
    $region3: #{discriminator_forward.3} parent=1 // loop_header
      %s10 = sphi 0, %s14
      %p11 = scmp.ge.s32.totalorder %s10, 4
      %s20 = sphi 0, %s22
      %s23 = sphi 0, %s20
      %s24 = sphi 0, %s23
      %s40 = sphi 0, %s24
      %s44 = sphi 0, %s44
      %s46 = sphi 0, %s44
      %s47 = sphi 0, %s46
      %s61 = sphi 0, %s47
      %s65 = sphi 0, %s65
      %s67 = sphi 0, %s65
      %s68 = sphi 0, %s67
      %s82 = sphi 0, %s68
      %s88 = sphi 0, %s90
      %s91 = sphi 0, %s88
      %s92 = sphi 0, %s91
      %s108 = sphi 0, %s92
    $region4: #{discriminator_forward.3} parent=1 // loop_header_branch
      %13 = sbr.rel (%p11) target = $region8
    $region5: #{discriminator_forward.3} parent=1 // loop_body
      %s15 = ssub.s32 %s10, 1
      %s16 = ssub.s32 %s10, 2
      %s17 = sadd.s32 %s10, 1
      %s18 = ssub.s32 %s10, %s17
      %p19 = scmp.eq.s32.totalorder %s18, 0
      %s21 = sadd.s32 %s20, 1
      %s22 = scalar_select %p19, %s20, %s21
      %p25 = pneg %p19
      %p26 = scmp.eq.s32.totalorder %s10, 1
      %p27 = por %p25, %p26
      %p28 = scmp.ne.s32.totalorder %s20, %s23
      %p29 = scmp.eq.s32.totalorder %s10, 0
      %p30 = por %p28, %p29
      %p31 = scmp.ne.s32.totalorder %s20, %s23
      %p32 = scmp.eq.s32.totalorder %s15, 1
      %p33 = por %p31, %p32
      %p34 = scmp.ne.s32.totalorder %s23, %s24
      %p35 = scmp.eq.s32.totalorder %s15, 0
      %p36 = por %p34, %p35
      %p37 = scmp.ne.s32.totalorder %s23, %s24
      %p38 = scmp.eq.s32.totalorder %s16, 1
      %p39 = por %p37, %p38
      %p41 = scmp.ne.s32.totalorder %s24, %s40
      %p42 = scmp.eq.s32.totalorder %s16, 0
      %p43 = por %p41, %p42
      %s45 = sadd.s32 %s44, 1
      %p48 = scmp.eq.s32.totalorder %s10, 1
      %p49 = scmp.ne.s32.totalorder %s44, %s46
      %p50 = scmp.eq.s32.totalorder %s10, 0
      %p51 = por %p49, %p50
      %p52 = scmp.ne.s32.totalorder %s44, %s46
      %p53 = scmp.eq.s32.totalorder %s15, 1
      %p54 = por %p52, %p53
      %p55 = scmp.ne.s32.totalorder %s46, %s47
      %p56 = scmp.eq.s32.totalorder %s15, 0
      %p57 = por %p55, %p56
      %p58 = scmp.ne.s32.totalorder %s46, %s47
      %p59 = scmp.eq.s32.totalorder %s16, 1
      %p60 = por %p58, %p59
      %p62 = scmp.ne.s32.totalorder %s47, %s61
      %p63 = scmp.eq.s32.totalorder %s16, 0
      %p64 = por %p62, %p63
      %s66 = sadd.s32 %s65, 1
      %p69 = scmp.eq.s32.totalorder %s10, 1
      %p70 = scmp.ne.s32.totalorder %s65, %s67
      %p71 = scmp.eq.s32.totalorder %s10, 0
      %p72 = por %p70, %p71
      %p73 = scmp.ne.s32.totalorder %s65, %s67
      %p74 = scmp.eq.s32.totalorder %s15, 1
      %p75 = por %p73, %p74
      %p76 = scmp.ne.s32.totalorder %s67, %s68
      %p77 = scmp.eq.s32.totalorder %s15, 0
      %p78 = por %p76, %p77
      %p79 = scmp.ne.s32.totalorder %s67, %s68
      %p80 = scmp.eq.s32.totalorder %s16, 1
      %p81 = por %p79, %p80
      %p83 = scmp.ne.s32.totalorder %s68, %s82
      %p84 = scmp.eq.s32.totalorder %s16, 0
      %p85 = por %p83, %p84
      %s86 = ssub.s32 %s10, %s17
      %p87 = scmp.eq.s32.totalorder %s86, 0
      %s89 = sadd.s32 %s88, 1
      %s90 = scalar_select %p87, %s88, %s89
      %p93 = pneg %p87
      %p94 = scmp.eq.s32.totalorder %s10, 1
      %p95 = por %p93, %p94
      %p96 = scmp.ne.s32.totalorder %s88, %s91
      %p97 = scmp.eq.s32.totalorder %s10, 0
      %p98 = por %p96, %p97
      %p99 = scmp.ne.s32.totalorder %s88, %s91
      %p100 = scmp.eq.s32.totalorder %s15, 1
      %p101 = por %p99, %p100
      %p102 = scmp.ne.s32.totalorder %s91, %s92
      %p103 = scmp.eq.s32.totalorder %s15, 0
      %p104 = por %p102, %p103
      %p105 = scmp.ne.s32.totalorder %s91, %s92
      %p106 = scmp.eq.s32.totalorder %s16, 1
      %p107 = por %p105, %p106
      %p109 = scmp.ne.s32.totalorder %s92, %s108
      %p110 = scmp.eq.s32.totalorder %s16, 0
      %p111 = por %p109, %p110
      %p112 = scmp.le.s32.totalorder 1, %s10
      %p113 = scmp.lt.s32.totalorder %s10, 3
      %p114 = pnand %p112, %p113
      %p115 = pneg %p114
      // Predicated region
      $region9: #{discriminator_forward.3} parent=5 // pred_check
        _
      $region10: #{discriminator_forward.3} parent=5 // pred_check_branch
        %117 = sbr.rel (%p114) target = $region12
      $region11: #{discriminator_forward.3} parent=5 // pred_region
        %s118 = ssub.s32 %s10, 1
        // Predicated region
        $region13: #{discriminator_forward.3} parent=11 // pred_check
          %p119 = pneg %p57
        $region14: #{discriminator_forward.3} parent=11 // pred_check_branch
          %121 = sbr.rel (%p119) target = $region16
        $region15: #{discriminator_forward.3} parent=11 // pred_region
          _
        $region16: #{discriminator_forward.3} parent=11 // pred_fallthru
          _
        // Predicated region
        $region17: #{discriminator_forward.3} parent=11 // pred_check
          %p122 = pneg %p78
        $region18: #{discriminator_forward.3} parent=11 // pred_check_branch
          %124 = sbr.rel (%p122) target = $region20
        $region19: #{discriminator_forward.3} parent=11 // pred_region
          %s126 = ssub.s32 16, 16
          %127 = vsyncadd [#allocation3], %s126
          %s129 = sshll.u32 [#allocation2], 4
          %s130 = int_to_ptr.vmem [resolvable:$true] %s129
          %132 = dma.hbm_to_vmem [thread:$0]  %s2, 16, %s130, [#allocation3]
        $region20: #{discriminator_forward.3} parent=11 // pred_fallthru
          _
      $region12: #{discriminator_forward.3} parent=5 // pred_fallthru
        _
      %p133 = scmp.lt.s32.totalorder %s10, 2
      // Predicated region
      $region21: #{discriminator_forward.3} parent=5 // pred_check
        %p134 = pneg %p133
      $region22: #{discriminator_forward.3} parent=5 // pred_check_branch
        %136 = sbr.rel (%p134) target = $region24
      $region23: #{discriminator_forward.3} parent=5 // pred_region
        // Predicated region
        $region25: #{discriminator_forward.3} parent=23 // pred_check
          %p137 = pneg %p30
        $region26: #{discriminator_forward.3} parent=23 // pred_check_branch
          %139 = sbr.rel (%p137) target = $region28
        $region27: #{discriminator_forward.3} parent=23 // pred_region
          %s140 = smul.u32 32, %s10
          %p141 = scmp.lt.s32.totalorder %s140, 63
          %s142 = scalar_select %p141, %s140, 63
          %s143 = smul.addr %s142, 4
          %s144 = scalar_lea.vmem %s0, %s143
          %s145 = smul.u32 32, %s10
        $region28: #{discriminator_forward.3} parent=23 // pred_fallthru
          _
      $region24: #{discriminator_forward.3} parent=5 // pred_fallthru
        _
      %p146 = scmp.le.s32.totalorder 1, %s10
      %p147 = scmp.lt.s32.totalorder %s10, 3
      %p148 = pnand %p146, %p147
      %p149 = pneg %p148
      // Predicated region
      $region29: #{discriminator_forward.3} parent=5 // pred_check
        _
      $region30: #{discriminator_forward.3} parent=5 // pred_check_branch
        %151 = sbr.rel (%p148) target = $region32
      $region31: #{discriminator_forward.3} parent=5 // pred_region
        %s152 = ssub.s32 %s10, 1
        // Predicated region
        $region33: #{discriminator_forward.3} parent=31 // pred_check
          %p153 = pneg %p78
        $region34: #{discriminator_forward.3} parent=31 // pred_check_branch
          %155 = sbr.rel (%p153) target = $region36
        $region35: #{discriminator_forward.3} parent=31 // pred_region
          %156 = dma.done [#allocation3], 16
        $region36: #{discriminator_forward.3} parent=31 // pred_fallthru
          _
        %s157 = smul.u32 32, %s15
        %p158 = scmp.lt.s32.totalorder %s157, 63
        %s159 = scalar_select %p158, %s157, 63
        %s160 = smul.addr %s159, 4
        %s161 = scalar_lea.vmem %s0, %s160
        %p162 = pneg %p36
        %p163 = pneg %p33
        %p164 = pneg %p57
        %p165 = pneg %p54
        %p166 = pneg %p78
        %p167 = pneg %p75
        %p168 = pneg %p104
        %p169 = pneg %p101
        %s170 = smul.u32 32, %s15
        %p171 = scmp.lt.s32.totalorder %s170, 63
        %s172 = scalar_select %p171, %s170, 63
        %s173 = smul.addr %s172, 4
        %s174 = scalar_lea.vmem %s3, %s173
        %s175 = smul.u32 32, %s15
        %p176 = scmp.lt.s32.totalorder %s175, 63
        %s177 = scalar_select %p176, %s175, 63
        %s178 = smul.addr %s177, 4
        %s179 = scalar_lea.vmem %s0, %s178
        %s180 = smul.u32 32, %s15
        %s181 = smul.u32 32, %s15
        %p182 = scmp.lt.s32.totalorder %s181, 63
        %s183 = scalar_select %p182, %s181, 63
        %s184 = smul.addr %s183, 4
        %s185 = scalar_lea.vmem %s3, %s184
        %s186 = smul.u32 32, %s15
        %v188 = vld [vmem:[%s179] sm:$0xf]
        %v189 = vld [vmem:[%s179 + $0x4] sm:$0xf]
        %v190 = vld [vmem:[%s179 + $0x8] sm:$0xf]
        %v191 = vld [vmem:[%s179 + $0xc] sm:$0xf]
        %v192 = vld [vmem:[%s179 + $0x10] sm:$0xf]
        %v193 = vld [vmem:[%s179 + $0x14] sm:$0xf]
        %v194 = vld [vmem:[%s179 + $0x18] sm:$0xf]
        %v195 = vld [vmem:[%s179 + $0x1c] sm:$0xf]
        %v196 = vld [vmem:[%s179 + $0x20] sm:$0xf]
        %v197 = vld [vmem:[%s179 + $0x24] sm:$0xf]
        %v198 = vld [vmem:[%s179 + $0x28] sm:$0xf]
        %v199 = vld [vmem:[%s179 + $0x2c] sm:$0xf]
        %v200 = vld [vmem:[%s179 + $0x30] sm:$0xf]
        %v201 = vld [vmem:[%s179 + $0x34] sm:$0xf]
        %v202 = vld [vmem:[%s179 + $0x38] sm:$0xf]
        %v203 = vld [vmem:[%s179 + $0x3c] sm:$0xf]
        %v204 = vld [vmem:[%s179 + $0x40] sm:$0xf]
        %v205 = vld [vmem:[%s179 + $0x44] sm:$0xf]
        %v206 = vld [vmem:[%s179 + $0x48] sm:$0xf]
        %v207 = vld [vmem:[%s179 + $0x4c] sm:$0xf]
        %v208 = vld [vmem:[%s179 + $0x50] sm:$0xf]
        %v209 = vld [vmem:[%s179 + $0x54] sm:$0xf]
        %v210 = vld [vmem:[%s179 + $0x58] sm:$0xf]
        %v211 = vld [vmem:[%s179 + $0x5c] sm:$0xf]
        %v212 = vld [vmem:[%s179 + $0x60] sm:$0xf]
        %v213 = vld [vmem:[%s179 + $0x64] sm:$0xf]
        %v214 = vld [vmem:[%s179 + $0x68] sm:$0xf]
        %v215 = vld [vmem:[%s179 + $0x6c] sm:$0xf]
        %v216 = vld [vmem:[%s179 + $0x70] sm:$0xf]
        %v217 = vld [vmem:[%s179 + $0x74] sm:$0xf]
        %v218 = vld [vmem:[%s179 + $0x78] sm:$0xf]
        %v219 = vld [vmem:[%s179 + $0x7c] sm:$0xf]
        %v220 = vld [vmem:[%s1] sm:$0xf]
        %v221 = vld [vmem:[%s1 + $0x4] sm:$0xf]
        %v222 = vld [vmem:[%s1 + $0x8] sm:$0xf]
        %v223 = vld [vmem:[%s1 + $0xc] sm:$0x3]
        %v224 = vld [vmem:[#allocation2] sm:$0x1]
        %v226 = vlaneseq
        %v227 = vshrl.u32 %v226, 7
        %v228 = vsub.s32 0, %v227
        %v229 = vrot.slane %v224, %v228
        %v263 = vunpack.c.l.b16 %v188
        %v264 = vunpack.c.l.b16 %v189
        %v265 = vunpack.c.l.b16 %v190
        %v266 = vunpack.c.l.b16 %v191
        %v267 = vunpack.c.l.b16 %v192
        %v268 = vunpack.c.l.b16 %v193
        %v269 = vunpack.c.l.b16 %v194
        %v270 = vunpack.c.l.b16 %v195
        %v271 = vunpack.c.l.b16 %v196
        %v272 = vunpack.c.l.b16 %v197
        %v273 = vunpack.c.l.b16 %v198
        %v274 = vunpack.c.l.b16 %v199
        %v275 = vunpack.c.l.b16 %v200
        %v276 = vunpack.c.l.b16 %v201
        %v277 = vunpack.c.l.b16 %v202
        %v278 = vunpack.c.l.b16 %v203
        %v279 = vunpack.c.l.b16 %v204
        %v280 = vunpack.c.l.b16 %v205
        %v281 = vunpack.c.l.b16 %v206
        %v282 = vunpack.c.l.b16 %v207
        %v283 = vunpack.c.l.b16 %v208
        %v284 = vunpack.c.l.b16 %v209
        %v285 = vunpack.c.l.b16 %v210
        %v286 = vunpack.c.l.b16 %v211
        %v287 = vunpack.c.l.b16 %v212
        %v288 = vunpack.c.l.b16 %v213
        %v289 = vunpack.c.l.b16 %v214
        %v290 = vunpack.c.l.b16 %v215
        %v291 = vunpack.c.l.b16 %v216
        %v292 = vunpack.c.l.b16 %v217
        %v293 = vunpack.c.l.b16 %v218
        %v294 = vunpack.c.l.b16 %v219
        %v295 = vpack.c.b16 %v264, %v263
        %v296 = vpack.c.b16 %v266, %v265
        %v297 = vpack.c.b16 %v268, %v267
        %v298 = vpack.c.b16 %v270, %v269
        %v299 = vpack.c.b16 %v272, %v271
        %v300 = vpack.c.b16 %v274, %v273
        %v301 = vpack.c.b16 %v276, %v275
        %v302 = vpack.c.b16 %v278, %v277
        %v303 = vpack.c.b16 %v280, %v279
        %v304 = vpack.c.b16 %v282, %v281
        %v305 = vpack.c.b16 %v284, %v283
        %v306 = vpack.c.b16 %v286, %v285
        %v307 = vpack.c.b16 %v288, %v287
        %v308 = vpack.c.b16 %v290, %v289
        %v309 = vpack.c.b16 %v292, %v291
        %v310 = vpack.c.b16 %v294, %v293
        %v315 = vunpack.c.l.b16 %v220
        %v316 = vunpack.c.l.b16 %v221
        %v317 = vunpack.c.l.b16 %v222
        %v318 = vunpack.c.l.b16 %v223
        %v319 = vpack.c.b16 %v316, %v315
        %v320 = vpack.c.b16 %v318, %v317
        %vm322 = vcmask 220160
        %v324 = vsel %vm322, %v295, 0
        %v327 = vsel %vm322, %v296, 0
        %v330 = vsel %vm322, %v297, 0
        %v333 = vsel %vm322, %v298, 0
        %v336 = vsel %vm322, %v299, 0
        %v339 = vsel %vm322, %v300, 0
        %v342 = vsel %vm322, %v301, 0
        %v345 = vsel %vm322, %v302, 0
        %v348 = vsel %vm322, %v303, 0
        %v351 = vsel %vm322, %v304, 0
        %v354 = vsel %vm322, %v305, 0
        %v357 = vsel %vm322, %v306, 0
        %v360 = vsel %vm322, %v307, 0
        %v363 = vsel %vm322, %v308, 0
        %v366 = vsel %vm322, %v309, 0
        %v369 = vsel %vm322, %v310, 0
        %vm371 = vcmask 1044480
        %vm372 = vcmask 1045504
        %v373 = vsel %vm371, 4294967295, 65535
        %v374 = vsel %vm372, %v373, 0
        %v376 = vand.u32 %v320, %v374
        %378 = vmatprep.subr.bf16.mxu0 0
        %379 = vmatpush1.bf16.msra.mxu0 %v319
        %380 = vmatprep.subr.bf16.mxu0 0
        %381 = vmatpush1.bf16.msra.mxu0 %v376
        %382 = vmatprep.subr.bf16.mxu0 0
        %383 = vmatpush1.bf16.msra.mxu0 0
        %384 = vmatprep.subr.bf16.mxu0 0
        %385 = vmatpush1.bf16.msra.mxu0 0
        %386 = vmatprep.subr.bf16.mxu0 0
        %387 = vmatpush1.bf16.msra.mxu0 0
        %388 = vmatprep.subr.bf16.mxu0 0
        %389 = vmatpush1.bf16.msra.mxu0 0
        %390 = vmatprep.subr.bf16.mxu0 0
        %391 = vmatpush1.bf16.msra.mxu0 0
        %392 = vmatprep.subr.bf16.mxu0 0
        %393 = vmatpush1.bf16.msra.mxu0 0
        %394 = vmatprep.subr.bf16.mxu0 0
        %395 = vmatpush1.bf16.msra.mxu0 0
        %396 = vmatprep.subr.bf16.mxu0 0
        %397 = vmatpush1.bf16.msra.mxu0 0
        %398 = vmatprep.subr.bf16.mxu0 0
        %399 = vmatpush1.bf16.msra.mxu0 0
        %400 = vmatprep.subr.bf16.mxu0 0
        %401 = vmatpush1.bf16.msra.mxu0 0
        %402 = vmatprep.subr.bf16.mxu0 0
        %403 = vmatpush1.bf16.msra.mxu0 0
        %404 = vmatprep.subr.bf16.mxu0 0
        %405 = vmatpush1.bf16.msra.mxu0 0
        %406 = vmatprep.subr.bf16.mxu0 0
        %407 = vmatpush1.bf16.msra.mxu0 0
        %408 = vmatprep.subr.bf16.mxu0 0
        %409 = vmatpush1.bf16.msra.mxu0 0
        %410 = vmatprep.mubr.bf16.mxu0 0
        %411 = vmatmul.mubr.bf16.gmra.mrb[0].mxu0 %v324
        %v412 = vpop.f32.mrb[0].mxu0
        %v413 = vadd.f32 %v229, %v412
        %v414 = vpop.f32.mrb[0].mxu0
        %v415 = vpop.f32.mrb[0].mxu0
        %v416 = vadd.f32 %v229, %v415
        %v417 = vpop.f32.mrb[0].mxu0
        %418 = vmatprep.mubr.bf16.mxu0 0
        %419 = vmatmul.mubr.bf16.gmra.mrb[0].mxu0 %v327
        %v420 = vpop.f32.mrb[0].mxu0
        %v421 = vadd.f32 %v229, %v420
        %v422 = vpop.f32.mrb[0].mxu0
        %v423 = vpop.f32.mrb[0].mxu0
        %v424 = vadd.f32 %v229, %v423
        %v425 = vpop.f32.mrb[0].mxu0
        %426 = vmatprep.mubr.bf16.mxu0 0
        %427 = vmatmul.mubr.bf16.gmra.mrb[0].mxu0 %v330
        %v428 = vpop.f32.mrb[0].mxu0
        %v429 = vadd.f32 %v229, %v428
        %v430 = vpop.f32.mrb[0].mxu0
        %v431 = vpop.f32.mrb[0].mxu0
        %v432 = vadd.f32 %v229, %v431
        %v433 = vpop.f32.mrb[0].mxu0
        %434 = vmatprep.mubr.bf16.mxu0 0
        %435 = vmatmul.mubr.bf16.gmra.mrb[0].mxu0 %v333
        %v436 = vpop.f32.mrb[0].mxu0
        %v437 = vadd.f32 %v229, %v436
        %v438 = vpop.f32.mrb[0].mxu0
        %v439 = vpop.f32.mrb[0].mxu0
        %v440 = vadd.f32 %v229, %v439
        %v441 = vpop.f32.mrb[0].mxu0
        %442 = vmatprep.mubr.bf16.mxu0 0
        %443 = vmatmul.mubr.bf16.gmra.mrb[0].mxu0 %v336
        %v444 = vpop.f32.mrb[0].mxu0
        %v445 = vadd.f32 %v229, %v444
        %v446 = vpop.f32.mrb[0].mxu0
        %v447 = vpop.f32.mrb[0].mxu0
        %v448 = vadd.f32 %v229, %v447
        %v449 = vpop.f32.mrb[0].mxu0
        %450 = vmatprep.mubr.bf16.mxu0 0
        %451 = vmatmul.mubr.bf16.gmra.mrb[0].mxu0 %v339
        %v452 = vpop.f32.mrb[0].mxu0
        %v453 = vadd.f32 %v229, %v452
        %v454 = vpop.f32.mrb[0].mxu0
        %v455 = vpop.f32.mrb[0].mxu0
        %v456 = vadd.f32 %v229, %v455
        %v457 = vpop.f32.mrb[0].mxu0
        %458 = vmatprep.mubr.bf16.mxu0 0
        %459 = vmatmul.mubr.bf16.gmra.mrb[0].mxu0 %v342
        %v460 = vpop.f32.mrb[0].mxu0
        %v461 = vadd.f32 %v229, %v460
        %v462 = vpop.f32.mrb[0].mxu0
        %v463 = vpop.f32.mrb[0].mxu0
        %v464 = vadd.f32 %v229, %v463
        %v465 = vpop.f32.mrb[0].mxu0
        %466 = vmatprep.mubr.bf16.mxu0 0
        %467 = vmatmul.mubr.bf16.gmra.mrb[0].mxu0 %v345
        %v468 = vpop.f32.mrb[0].mxu0
        %v469 = vadd.f32 %v229, %v468
        %v470 = vpop.f32.mrb[0].mxu0
        %v471 = vpop.f32.mrb[0].mxu0
        %v472 = vadd.f32 %v229, %v471
        %v473 = vpop.f32.mrb[0].mxu0
        %474 = vmatprep.mubr.bf16.mxu0 0
        %475 = vmatmul.mubr.bf16.gmra.mrb[0].mxu0 %v348
        %v476 = vpop.f32.mrb[0].mxu0
        %v477 = vadd.f32 %v229, %v476
        %v478 = vpop.f32.mrb[0].mxu0
        %v479 = vpop.f32.mrb[0].mxu0
        %v480 = vadd.f32 %v229, %v479
        %v481 = vpop.f32.mrb[0].mxu0
        %482 = vmatprep.mubr.bf16.mxu0 0
        %483 = vmatmul.mubr.bf16.gmra.mrb[0].mxu0 %v351
        %v484 = vpop.f32.mrb[0].mxu0
        %v485 = vadd.f32 %v229, %v484
        %v486 = vpop.f32.mrb[0].mxu0
        %v487 = vpop.f32.mrb[0].mxu0
        %v488 = vadd.f32 %v229, %v487
        %v489 = vpop.f32.mrb[0].mxu0
        %490 = vmatprep.mubr.bf16.mxu0 0
        %491 = vmatmul.mubr.bf16.gmra.mrb[0].mxu0 %v354
        %v492 = vpop.f32.mrb[0].mxu0
        %v493 = vadd.f32 %v229, %v492
        %v494 = vpop.f32.mrb[0].mxu0
        %v495 = vpop.f32.mrb[0].mxu0
        %v496 = vadd.f32 %v229, %v495
        %v497 = vpop.f32.mrb[0].mxu0
        %498 = vmatprep.mubr.bf16.mxu0 0
        %499 = vmatmul.mubr.bf16.gmra.mrb[0].mxu0 %v357
        %v500 = vpop.f32.mrb[0].mxu0
        %v501 = vadd.f32 %v229, %v500
        %v502 = vpop.f32.mrb[0].mxu0
        %v503 = vpop.f32.mrb[0].mxu0
        %v504 = vadd.f32 %v229, %v503
        %v505 = vpop.f32.mrb[0].mxu0
        %506 = vmatprep.mubr.bf16.mxu0 0
        %507 = vmatmul.mubr.bf16.gmra.mrb[0].mxu0 %v360
        %v508 = vpop.f32.mrb[0].mxu0
        %v509 = vadd.f32 %v229, %v508
        %v510 = vpop.f32.mrb[0].mxu0
        %v511 = vpop.f32.mrb[0].mxu0
        %v512 = vadd.f32 %v229, %v511
        %v513 = vpop.f32.mrb[0].mxu0
        %514 = vmatprep.mubr.bf16.mxu0 0
        %515 = vmatmul.mubr.bf16.gmra.mrb[0].mxu0 %v363
        %v516 = vpop.f32.mrb[0].mxu0
        %v517 = vadd.f32 %v229, %v516
        %v518 = vpop.f32.mrb[0].mxu0
        %v519 = vpop.f32.mrb[0].mxu0
        %v520 = vadd.f32 %v229, %v519
        %v521 = vpop.f32.mrb[0].mxu0
        %522 = vmatprep.mubr.bf16.mxu0 0
        %523 = vmatmul.mubr.bf16.gmra.mrb[0].mxu0 %v366
        %v524 = vpop.f32.mrb[0].mxu0
        %v525 = vadd.f32 %v229, %v524
        %v526 = vpop.f32.mrb[0].mxu0
        %v527 = vpop.f32.mrb[0].mxu0
        %v528 = vadd.f32 %v229, %v527
        %v529 = vpop.f32.mrb[0].mxu0
        %530 = vmatprep.mubr.bf16.mxu0 0
        %531 = vmatmul.mubr.bf16.gmra.mrb[0].mxu0 %v369
        %v532 = vpop.f32.mrb[0].mxu0
        %v533 = vadd.f32 %v229, %v532
        %v534 = vpop.f32.mrb[0].mxu0
        %v535 = vpop.f32.mrb[0].mxu0
        %v536 = vadd.f32 %v229, %v535
        %v537 = vpop.f32.mrb[0].mxu0
        %538 = vdwg.mxu0
        %vm539 = vcmp.ge.f32.partialorder %v413, 0.0
        %vm540 = vcmp.ge.f32.partialorder %v416, 0.0
        %vm541 = vcmp.ge.f32.partialorder %v421, 0.0
        %vm542 = vcmp.ge.f32.partialorder %v424, 0.0
        %vm543 = vcmp.ge.f32.partialorder %v429, 0.0
        %vm544 = vcmp.ge.f32.partialorder %v432, 0.0
        %vm545 = vcmp.ge.f32.partialorder %v437, 0.0
        %vm546 = vcmp.ge.f32.partialorder %v440, 0.0
        %vm547 = vcmp.ge.f32.partialorder %v445, 0.0
        %vm548 = vcmp.ge.f32.partialorder %v448, 0.0
        %vm549 = vcmp.ge.f32.partialorder %v453, 0.0
        %vm550 = vcmp.ge.f32.partialorder %v456, 0.0
        %vm551 = vcmp.ge.f32.partialorder %v461, 0.0
        %vm552 = vcmp.ge.f32.partialorder %v464, 0.0
        %vm553 = vcmp.ge.f32.partialorder %v469, 0.0
        %vm554 = vcmp.ge.f32.partialorder %v472, 0.0
        %vm555 = vcmp.ge.f32.partialorder %v477, 0.0
        %vm556 = vcmp.ge.f32.partialorder %v480, 0.0
        %vm557 = vcmp.ge.f32.partialorder %v485, 0.0
        %vm558 = vcmp.ge.f32.partialorder %v488, 0.0
        %vm559 = vcmp.ge.f32.partialorder %v493, 0.0
        %vm560 = vcmp.ge.f32.partialorder %v496, 0.0
        %vm561 = vcmp.ge.f32.partialorder %v501, 0.0
        %vm562 = vcmp.ge.f32.partialorder %v504, 0.0
        %vm563 = vcmp.ge.f32.partialorder %v509, 0.0
        %vm564 = vcmp.ge.f32.partialorder %v512, 0.0
        %vm565 = vcmp.ge.f32.partialorder %v517, 0.0
        %vm566 = vcmp.ge.f32.partialorder %v520, 0.0
        %vm567 = vcmp.ge.f32.partialorder %v525, 0.0
        %vm568 = vcmp.ge.f32.partialorder %v528, 0.0
        %vm569 = vcmp.ge.f32.partialorder %v533, 0.0
        %vm570 = vcmp.ge.f32.partialorder %v536, 0.0
        %v571 = vmul.f32 %v413, 0.01
        %v572 = vmul.f32 %v416, 0.01
        %v573 = vmul.f32 %v421, 0.01
        %v574 = vmul.f32 %v424, 0.01
        %v575 = vmul.f32 %v429, 0.01
        %v576 = vmul.f32 %v432, 0.01
        %v577 = vmul.f32 %v437, 0.01
        %v578 = vmul.f32 %v440, 0.01
        %v579 = vmul.f32 %v445, 0.01
        %v580 = vmul.f32 %v448, 0.01
        %v581 = vmul.f32 %v453, 0.01
        %v582 = vmul.f32 %v456, 0.01
        %v583 = vmul.f32 %v461, 0.01
        %v584 = vmul.f32 %v464, 0.01
        %v585 = vmul.f32 %v469, 0.01
        %v586 = vmul.f32 %v472, 0.01
        %v587 = vmul.f32 %v477, 0.01
        %v588 = vmul.f32 %v480, 0.01
        %v589 = vmul.f32 %v485, 0.01
        %v590 = vmul.f32 %v488, 0.01
        %v591 = vmul.f32 %v493, 0.01
        %v592 = vmul.f32 %v496, 0.01
        %v593 = vmul.f32 %v501, 0.01
        %v594 = vmul.f32 %v504, 0.01
        %v595 = vmul.f32 %v509, 0.01
        %v596 = vmul.f32 %v512, 0.01
        %v597 = vmul.f32 %v517, 0.01
        %v598 = vmul.f32 %v520, 0.01
        %v599 = vmul.f32 %v525, 0.01
        %v600 = vmul.f32 %v528, 0.01
        %v601 = vmul.f32 %v533, 0.01
        %v602 = vmul.f32 %v536, 0.01
        %v603 = vsel %vm539, %v413, %v571
        %v604 = vsel %vm540, %v416, %v572
        %v605 = vsel %vm541, %v421, %v573
        %v606 = vsel %vm542, %v424, %v574
        %v607 = vsel %vm543, %v429, %v575
        %v608 = vsel %vm544, %v432, %v576
        %v609 = vsel %vm545, %v437, %v577
        %v610 = vsel %vm546, %v440, %v578
        %v611 = vsel %vm547, %v445, %v579
        %v612 = vsel %vm548, %v448, %v580
        %v613 = vsel %vm549, %v453, %v581
        %v614 = vsel %vm550, %v456, %v582
        %v615 = vsel %vm551, %v461, %v583
        %v616 = vsel %vm552, %v464, %v584
        %v617 = vsel %vm553, %v469, %v585
        %v618 = vsel %vm554, %v472, %v586
        %v619 = vsel %vm555, %v477, %v587
        %v620 = vsel %vm556, %v480, %v588
        %v621 = vsel %vm557, %v485, %v589
        %v622 = vsel %vm558, %v488, %v590
        %v623 = vsel %vm559, %v493, %v591
        %v624 = vsel %vm560, %v496, %v592
        %v625 = vsel %vm561, %v501, %v593
        %v626 = vsel %vm562, %v504, %v594
        %v627 = vsel %vm563, %v509, %v595
        %v628 = vsel %vm564, %v512, %v596
        %v629 = vsel %vm565, %v517, %v597
        %v630 = vsel %vm566, %v520, %v598
        %v631 = vsel %vm567, %v525, %v599
        %v632 = vsel %vm568, %v528, %v600
        %v633 = vsel %vm569, %v533, %v601
        %v634 = vsel %vm570, %v536, %v602
        %v635 = vpack.c.bf16 %v604, %v603
        %v636 = vpack.c.bf16 %v606, %v605
        %v637 = vpack.c.bf16 %v608, %v607
        %v638 = vpack.c.bf16 %v610, %v609
        %v639 = vpack.c.bf16 %v612, %v611
        %v640 = vpack.c.bf16 %v614, %v613
        %v641 = vpack.c.bf16 %v616, %v615
        %v642 = vpack.c.bf16 %v618, %v617
        %v643 = vpack.c.bf16 %v620, %v619
        %v644 = vpack.c.bf16 %v622, %v621
        %v645 = vpack.c.bf16 %v624, %v623
        %v646 = vpack.c.bf16 %v626, %v625
        %v647 = vpack.c.bf16 %v628, %v627
        %v648 = vpack.c.bf16 %v630, %v629
        %v649 = vpack.c.bf16 %v632, %v631
        %v650 = vpack.c.bf16 %v634, %v633
        %v667 = vunpack.c.l.b16 %v635
        %v668 = vunpack.c.h.b16 %v635
        %v669 = vunpack.c.l.b16 %v636
        %v670 = vunpack.c.h.b16 %v636
        %v671 = vunpack.c.l.b16 %v637
        %v672 = vunpack.c.h.b16 %v637
        %v673 = vunpack.c.l.b16 %v638
        %v674 = vunpack.c.h.b16 %v638
        %v675 = vunpack.c.l.b16 %v639
        %v676 = vunpack.c.h.b16 %v639
        %v677 = vunpack.c.l.b16 %v640
        %v678 = vunpack.c.h.b16 %v640
        %v679 = vunpack.c.l.b16 %v641
        %v680 = vunpack.c.h.b16 %v641
        %v681 = vunpack.c.l.b16 %v642
        %v682 = vunpack.c.h.b16 %v642
        %v683 = vunpack.c.l.b16 %v643
        %v684 = vunpack.c.h.b16 %v643
        %v685 = vunpack.c.l.b16 %v644
        %v686 = vunpack.c.h.b16 %v644
        %v687 = vunpack.c.l.b16 %v645
        %v688 = vunpack.c.h.b16 %v645
        %v689 = vunpack.c.l.b16 %v646
        %v690 = vunpack.c.h.b16 %v646
        %v691 = vunpack.c.l.b16 %v647
        %v692 = vunpack.c.h.b16 %v647
        %v693 = vunpack.c.l.b16 %v648
        %v694 = vunpack.c.h.b16 %v648
        %v695 = vunpack.c.l.b16 %v649
        %v696 = vunpack.c.h.b16 %v649
        %v697 = vunpack.c.l.b16 %v650
        %v698 = vunpack.c.h.b16 %v650
        %v699 = vpack.c.b16 %v667, %v667
        %v700 = vpack.c.b16 %v668, %v668
        %v701 = vpack.c.b16 %v669, %v669
        %v702 = vpack.c.b16 %v670, %v670
        %v703 = vpack.c.b16 %v671, %v671
        %v704 = vpack.c.b16 %v672, %v672
        %v705 = vpack.c.b16 %v673, %v673
        %v706 = vpack.c.b16 %v674, %v674
        %v707 = vpack.c.b16 %v675, %v675
        %v708 = vpack.c.b16 %v676, %v676
        %v709 = vpack.c.b16 %v677, %v677
        %v710 = vpack.c.b16 %v678, %v678
        %v711 = vpack.c.b16 %v679, %v679
        %v712 = vpack.c.b16 %v680, %v680
        %v713 = vpack.c.b16 %v681, %v681
        %v714 = vpack.c.b16 %v682, %v682
        %v715 = vpack.c.b16 %v683, %v683
        %v716 = vpack.c.b16 %v684, %v684
        %v717 = vpack.c.b16 %v685, %v685
        %v718 = vpack.c.b16 %v686, %v686
        %v719 = vpack.c.b16 %v687, %v687
        %v720 = vpack.c.b16 %v688, %v688
        %v721 = vpack.c.b16 %v689, %v689
        %v722 = vpack.c.b16 %v690, %v690
        %v723 = vpack.c.b16 %v691, %v691
        %v724 = vpack.c.b16 %v692, %v692
        %v725 = vpack.c.b16 %v693, %v693
        %v726 = vpack.c.b16 %v694, %v694
        %v727 = vpack.c.b16 %v695, %v695
        %v728 = vpack.c.b16 %v696, %v696
        %v729 = vpack.c.b16 %v697, %v697
        %v730 = vpack.c.b16 %v698, %v698
        %763 = vst [vmem:[%s185] sm:$0xf] %v699
        %764 = vst [vmem:[%s185 + $0x4] sm:$0xf] %v700
        %765 = vst [vmem:[%s185 + $0x8] sm:$0xf] %v701
        %766 = vst [vmem:[%s185 + $0xc] sm:$0xf] %v702
        %767 = vst [vmem:[%s185 + $0x10] sm:$0xf] %v703
        %768 = vst [vmem:[%s185 + $0x14] sm:$0xf] %v704
        %769 = vst [vmem:[%s185 + $0x18] sm:$0xf] %v705
        %770 = vst [vmem:[%s185 + $0x1c] sm:$0xf] %v706
        %771 = vst [vmem:[%s185 + $0x20] sm:$0xf] %v707
        %772 = vst [vmem:[%s185 + $0x24] sm:$0xf] %v708
        %773 = vst [vmem:[%s185 + $0x28] sm:$0xf] %v709
        %774 = vst [vmem:[%s185 + $0x2c] sm:$0xf] %v710
        %775 = vst [vmem:[%s185 + $0x30] sm:$0xf] %v711
        %776 = vst [vmem:[%s185 + $0x34] sm:$0xf] %v712
        %777 = vst [vmem:[%s185 + $0x38] sm:$0xf] %v713
        %778 = vst [vmem:[%s185 + $0x3c] sm:$0xf] %v714
        %779 = vst [vmem:[%s185 + $0x40] sm:$0xf] %v715
        %780 = vst [vmem:[%s185 + $0x44] sm:$0xf] %v716
        %781 = vst [vmem:[%s185 + $0x48] sm:$0xf] %v717
        %782 = vst [vmem:[%s185 + $0x4c] sm:$0xf] %v718
        %783 = vst [vmem:[%s185 + $0x50] sm:$0xf] %v719
        %784 = vst [vmem:[%s185 + $0x54] sm:$0xf] %v720
        %785 = vst [vmem:[%s185 + $0x58] sm:$0xf] %v721
        %786 = vst [vmem:[%s185 + $0x5c] sm:$0xf] %v722
        %787 = vst [vmem:[%s185 + $0x60] sm:$0xf] %v723
        %788 = vst [vmem:[%s185 + $0x64] sm:$0xf] %v724
        %789 = vst [vmem:[%s185 + $0x68] sm:$0xf] %v725
        %790 = vst [vmem:[%s185 + $0x6c] sm:$0xf] %v726
        %791 = vst [vmem:[%s185 + $0x70] sm:$0xf] %v727
        %792 = vst [vmem:[%s185 + $0x74] sm:$0xf] %v728
        %793 = vst [vmem:[%s185 + $0x78] sm:$0xf] %v729
        %794 = vst [vmem:[%s185 + $0x7c] sm:$0xf] %v730
        %s795 = smul.u32 32, %s15
        %p796 = scmp.lt.s32.totalorder %s795, 63
        %s797 = scalar_select %p796, %s795, 63
        %s798 = smul.addr %s797, 4
        %s799 = scalar_lea.vmem %s3, %s798
        // Predicated region
        $region37: #{discriminator_forward.3} parent=31 // pred_check
          %p800 = pneg %p101
        $region38: #{discriminator_forward.3} parent=31 // pred_check_branch
          %802 = sbr.rel (%p800) target = $region40
        $region39: #{discriminator_forward.3} parent=31 // pred_region
          %s803 = smul.u32 32, %s15
        $region40: #{discriminator_forward.3} parent=31 // pred_fallthru
          _
      $region32: #{discriminator_forward.3} parent=5 // pred_fallthru
        _
      %p804 = scmp.le.s32.totalorder 2, %s10
      // Predicated region
      $region41: #{discriminator_forward.3} parent=5 // pred_check
        %p805 = pneg %p804
      $region42: #{discriminator_forward.3} parent=5 // pred_check_branch
        %807 = sbr.rel (%p805) target = $region44
      $region43: #{discriminator_forward.3} parent=5 // pred_region
        %s808 = ssub.s32 %s10, 2
        // Predicated region
        $region45: #{discriminator_forward.3} parent=43 // pred_check
          %p809 = pneg %p107
        $region46: #{discriminator_forward.3} parent=43 // pred_check_branch
          %811 = sbr.rel (%p809) target = $region48
        $region47: #{discriminator_forward.3} parent=43 // pred_region
          %s812 = smul.u32 32, %s16
          %p813 = scmp.lt.s32.totalorder %s812, 63
          %s814 = scalar_select %p813, %s812, 63
          %s815 = smul.addr %s814, 4
          %s816 = scalar_lea.vmem %s3, %s815
        $region48: #{discriminator_forward.3} parent=43 // pred_fallthru
          _
      $region44: #{discriminator_forward.3} parent=5 // pred_fallthru
        _
    $region6: #{discriminator_forward.3} parent=1 // loop_footer
      %s14 = sadd.s32 1, %s10
    $region7: #{discriminator_forward.3} parent=1 // loop_footer_branch
      %9 = sbr.rel target = $region3
    $region8: #{discriminator_forward.3} parent=1 // loop_exit
      _
    %817 = vsyncpa [#allocation3], 1
    %s818 = scalar_lea.sflag [#allocation3], 1
    %819 = vsyncpa %s818, 1

// kernel: discriminator_forward.4
$region0: #{discriminator_forward.4}
  #allocation0 [shape = 'u32[]', space=smem, size = 0x4, offset = 0x4, fixed_abs, tag = 'smem constant byte address 0x4 - core index']
  #allocation1 [shape = 'u32[144,128]{1,0:T(1,128)}', space=vmem, size = 0x12000, scoped, tag = 'internal scratch']
  %s0 = inlined_call_operand.vmem [shape: bf16[128,1152], index: 0, kind: input, shape index: {}]
  %s1 = inlined_call_operand.vmem [shape: bf16[1152,256], index: 1, kind: input, shape index: {}]
  %s2 = inlined_call_operand.vmem [shape: f32[1,256], index: 2, kind: input, shape index: {}]
  %s3 = inlined_call_operand.vmem [shape: bf16[128,256], index: 3, kind: output, shape index: {}]
  %s4 = sld [smem:[#allocation0]]
  $region45: #{discriminator_forward.4} parent=0
    _
  %s6 = ssub.s32 1, %s4
  %s7 = scalar_select 0, %s6, %s4
  loop: start=0, step=1, limit=4
  $region2: #{discriminator_forward.4} parent=0 // loop_pre_header
    _
  $region3: #{discriminator_forward.4} parent=0 // loop_header
    %s9 = sphi 0, %s13
    %p10 = scmp.ge.s32.totalorder %s9, 4
    %s19 = sphi 0, %s21
    %s22 = sphi 0, %s19
    %s23 = sphi 0, %s22
    %s39 = sphi 0, %s23
    %s43 = sphi 0, %s43
    %s45 = sphi 0, %s43
    %s46 = sphi 0, %s45
    %s60 = sphi 0, %s46
    %s64 = sphi 0, %s64
    %s66 = sphi 0, %s64
    %s67 = sphi 0, %s66
    %s81 = sphi 0, %s67
    %s87 = sphi 0, %s89
    %s90 = sphi 0, %s87
    %s91 = sphi 0, %s90
    %s107 = sphi 0, %s91
  $region4: #{discriminator_forward.4} parent=0 // loop_header_branch
    %12 = sbr.rel (%p10) target = $region8
  $region5: #{discriminator_forward.4} parent=0 // loop_body
    %s14 = ssub.s32 %s9, 1
    %s15 = ssub.s32 %s9, 2
    %s16 = sadd.s32 %s9, 1
    %s17 = ssub.s32 %s9, %s16
    %p18 = scmp.eq.s32.totalorder %s17, 0
    %s20 = sadd.s32 %s19, 1
    %s21 = scalar_select %p18, %s19, %s20
    %p24 = pneg %p18
    %p25 = scmp.eq.s32.totalorder %s9, 1
    %p26 = por %p24, %p25
    %p27 = scmp.ne.s32.totalorder %s19, %s22
    %p28 = scmp.eq.s32.totalorder %s9, 0
    %p29 = por %p27, %p28
    %p30 = scmp.ne.s32.totalorder %s19, %s22
    %p31 = scmp.eq.s32.totalorder %s14, 1
    %p32 = por %p30, %p31
    %p33 = scmp.ne.s32.totalorder %s22, %s23
    %p34 = scmp.eq.s32.totalorder %s14, 0
    %p35 = por %p33, %p34
    %p36 = scmp.ne.s32.totalorder %s22, %s23
    %p37 = scmp.eq.s32.totalorder %s15, 1
    %p38 = por %p36, %p37
    %p40 = scmp.ne.s32.totalorder %s23, %s39
    %p41 = scmp.eq.s32.totalorder %s15, 0
    %p42 = por %p40, %p41
    %s44 = sadd.s32 %s43, 1
    %p47 = scmp.eq.s32.totalorder %s9, 1
    %p48 = scmp.ne.s32.totalorder %s43, %s45
    %p49 = scmp.eq.s32.totalorder %s9, 0
    %p50 = por %p48, %p49
    %p51 = scmp.ne.s32.totalorder %s43, %s45
    %p52 = scmp.eq.s32.totalorder %s14, 1
    %p53 = por %p51, %p52
    %p54 = scmp.ne.s32.totalorder %s45, %s46
    %p55 = scmp.eq.s32.totalorder %s14, 0
    %p56 = por %p54, %p55
    %p57 = scmp.ne.s32.totalorder %s45, %s46
    %p58 = scmp.eq.s32.totalorder %s15, 1
    %p59 = por %p57, %p58
    %p61 = scmp.ne.s32.totalorder %s46, %s60
    %p62 = scmp.eq.s32.totalorder %s15, 0
    %p63 = por %p61, %p62
    %s65 = sadd.s32 %s64, 1
    %p68 = scmp.eq.s32.totalorder %s9, 1
    %p69 = scmp.ne.s32.totalorder %s64, %s66
    %p70 = scmp.eq.s32.totalorder %s9, 0
    %p71 = por %p69, %p70
    %p72 = scmp.ne.s32.totalorder %s64, %s66
    %p73 = scmp.eq.s32.totalorder %s14, 1
    %p74 = por %p72, %p73
    %p75 = scmp.ne.s32.totalorder %s66, %s67
    %p76 = scmp.eq.s32.totalorder %s14, 0
    %p77 = por %p75, %p76
    %p78 = scmp.ne.s32.totalorder %s66, %s67
    %p79 = scmp.eq.s32.totalorder %s15, 1
    %p80 = por %p78, %p79
    %p82 = scmp.ne.s32.totalorder %s67, %s81
    %p83 = scmp.eq.s32.totalorder %s15, 0
    %p84 = por %p82, %p83
    %s85 = ssub.s32 %s9, %s16
    %p86 = scmp.eq.s32.totalorder %s85, 0
    %s88 = sadd.s32 %s87, 1
    %s89 = scalar_select %p86, %s87, %s88
    %p92 = pneg %p86
    %p93 = scmp.eq.s32.totalorder %s9, 1
    %p94 = por %p92, %p93
    %p95 = scmp.ne.s32.totalorder %s87, %s90
    %p96 = scmp.eq.s32.totalorder %s9, 0
    %p97 = por %p95, %p96
    %p98 = scmp.ne.s32.totalorder %s87, %s90
    %p99 = scmp.eq.s32.totalorder %s14, 1
    %p100 = por %p98, %p99
    %p101 = scmp.ne.s32.totalorder %s90, %s91
    %p102 = scmp.eq.s32.totalorder %s14, 0
    %p103 = por %p101, %p102
    %p104 = scmp.ne.s32.totalorder %s90, %s91
    %p105 = scmp.eq.s32.totalorder %s15, 1
    %p106 = por %p104, %p105
    %p108 = scmp.ne.s32.totalorder %s91, %s107
    %p109 = scmp.eq.s32.totalorder %s15, 0
    %p110 = por %p108, %p109
    %p111 = scmp.le.s32.totalorder 1, %s9
    %p112 = scmp.lt.s32.totalorder %s9, 3
    %p113 = pnand %p111, %p112
    %p114 = pneg %p113
    // Predicated region
    $region9: #{discriminator_forward.4} parent=5 // pred_check
      _
    $region10: #{discriminator_forward.4} parent=5 // pred_check_branch
      %116 = sbr.rel (%p113) target = $region12
    $region11: #{discriminator_forward.4} parent=5 // pred_region
      %s117 = ssub.s32 %s9, 1
      // Predicated region
      $region13: #{discriminator_forward.4} parent=11 // pred_check
        %p118 = pneg %p56
      $region14: #{discriminator_forward.4} parent=11 // pred_check_branch
        %120 = sbr.rel (%p118) target = $region16
      $region15: #{discriminator_forward.4} parent=11 // pred_region
        _
      $region16: #{discriminator_forward.4} parent=11 // pred_fallthru
        _
      // Predicated region
      $region17: #{discriminator_forward.4} parent=11 // pred_check
        %p121 = pneg %p77
      $region18: #{discriminator_forward.4} parent=11 // pred_check_branch
        %123 = sbr.rel (%p121) target = $region20
      $region19: #{discriminator_forward.4} parent=11 // pred_region
        _
      $region20: #{discriminator_forward.4} parent=11 // pred_fallthru
        _
    $region12: #{discriminator_forward.4} parent=5 // pred_fallthru
      _
    %p124 = scmp.lt.s32.totalorder %s9, 2
    // Predicated region
    $region21: #{discriminator_forward.4} parent=5 // pred_check
      %p125 = pneg %p124
    $region22: #{discriminator_forward.4} parent=5 // pred_check_branch
      %127 = sbr.rel (%p125) target = $region24
    $region23: #{discriminator_forward.4} parent=5 // pred_region
      // Predicated region
      $region25: #{discriminator_forward.4} parent=23 // pred_check
        %p128 = pneg %p29
      $region26: #{discriminator_forward.4} parent=23 // pred_check_branch
        %130 = sbr.rel (%p128) target = $region28
      $region27: #{discriminator_forward.4} parent=23 // pred_region
        %s131 = smul.u32 8, %s9
        %p132 = scmp.lt.s32.totalorder %s131, 15
        %s133 = scalar_select %p132, %s131, 15
        %s134 = smul.addr %s133, 9
        %s135 = smul.addr %s134, 4
        %s136 = scalar_lea.vmem %s0, %s135
        %s137 = smul.u32 8, %s9
      $region28: #{discriminator_forward.4} parent=23 // pred_fallthru
        _
    $region24: #{discriminator_forward.4} parent=5 // pred_fallthru
      _
    %p138 = scmp.le.s32.totalorder 1, %s9
    %p139 = scmp.lt.s32.totalorder %s9, 3
    %p140 = pnand %p138, %p139
    %p141 = pneg %p140
    // Predicated region
    $region29: #{discriminator_forward.4} parent=5 // pred_check
      _
    $region30: #{discriminator_forward.4} parent=5 // pred_check_branch
      %143 = sbr.rel (%p140) target = $region32
    $region31: #{discriminator_forward.4} parent=5 // pred_region
      %s144 = ssub.s32 %s9, 1
      %s145 = smul.u32 8, %s14
      %p146 = scmp.lt.s32.totalorder %s145, 15
      %s147 = scalar_select %p146, %s145, 15
      %s148 = smul.addr %s147, 9
      %s149 = smul.addr %s148, 4
      %s150 = scalar_lea.vmem %s0, %s149
      %p151 = pneg %p35
      %p152 = pneg %p32
      %p153 = pneg %p56
      %p154 = pneg %p53
      %p155 = pneg %p77
      %p156 = pneg %p74
      %p157 = pneg %p103
      %p158 = pneg %p100
      %s159 = smul.u32 8, %s14
      %p160 = scmp.lt.s32.totalorder %s159, 15
      %s161 = scalar_select %p160, %s159, 15
      %s162 = smul.addr %s161, 2
      %s163 = smul.addr %s162, 4
      %s164 = scalar_lea.vmem %s3, %s163
      %s165 = smul.u32 8, %s14
      %p166 = scmp.lt.s32.totalorder %s165, 15
      %s167 = scalar_select %p166, %s165, 15
      %s168 = smul.addr %s167, 9
      %s169 = smul.addr %s168, 4
      %s170 = scalar_lea.vmem %s0, %s169
      %s171 = smul.u32 8, %s14
      %s172 = smul.u32 8, %s14
      %p173 = scmp.lt.s32.totalorder %s172, 15
      %s174 = scalar_select %p173, %s172, 15
      %s175 = smul.addr %s174, 2
      %s176 = smul.addr %s175, 4
      %s177 = scalar_lea.vmem %s3, %s176
      %s178 = smul.u32 8, %s14
      %v180 = vld [vmem:[%s170] sm:$0xff]
      %v181 = vld [vmem:[%s170 + $0x8] sm:$0xff]
      %v182 = vld [vmem:[%s170 + $0x10] sm:$0xff]
      %v183 = vld [vmem:[%s170 + $0x18] sm:$0xff]
      %v184 = vld [vmem:[%s170 + $0x20] sm:$0xf]
      %v185 = vld [vmem:[%s170 + $0x24] sm:$0xff]
      %v186 = vld [vmem:[%s170 + $0x2c] sm:$0xff]
      %v187 = vld [vmem:[%s170 + $0x34] sm:$0xff]
      %v188 = vld [vmem:[%s170 + $0x3c] sm:$0xff]
      %v189 = vld [vmem:[%s170 + $0x44] sm:$0xf]
      %v190 = vld [vmem:[%s170 + $0x48] sm:$0xff]
      %v191 = vld [vmem:[%s170 + $0x50] sm:$0xff]
      %v192 = vld [vmem:[%s170 + $0x58] sm:$0xff]
      %v193 = vld [vmem:[%s170 + $0x60] sm:$0xff]
      %v194 = vld [vmem:[%s170 + $0x68] sm:$0xf]
      %v195 = vld [vmem:[%s170 + $0x6c] sm:$0xff]
      %v196 = vld [vmem:[%s170 + $0x74] sm:$0xff]
      %v197 = vld [vmem:[%s170 + $0x7c] sm:$0xff]
      %v198 = vld [vmem:[%s170 + $0x84] sm:$0xff]
      %v199 = vld [vmem:[%s170 + $0x8c] sm:$0xf]
      %v200 = vld [vmem:[%s170 + $0x90] sm:$0xff]
      %v201 = vld [vmem:[%s170 + $0x98] sm:$0xff]
      %v202 = vld [vmem:[%s170 + $0xa0] sm:$0xff]
      %v203 = vld [vmem:[%s170 + $0xa8] sm:$0xff]
      %v204 = vld [vmem:[%s170 + $0xb0] sm:$0xf]
      %v205 = vld [vmem:[%s170 + $0xb4] sm:$0xff]
      %v206 = vld [vmem:[%s170 + $0xbc] sm:$0xff]
      %v207 = vld [vmem:[%s170 + $0xc4] sm:$0xff]
      %v208 = vld [vmem:[%s170 + $0xcc] sm:$0xff]
      %v209 = vld [vmem:[%s170 + $0xd4] sm:$0xf]
      %v210 = vld [vmem:[%s170 + $0xd8] sm:$0xff]
      %v211 = vld [vmem:[%s170 + $0xe0] sm:$0xff]
      %v212 = vld [vmem:[%s170 + $0xe8] sm:$0xff]
      %v213 = vld [vmem:[%s170 + $0xf0] sm:$0xff]
      %v214 = vld [vmem:[%s170 + $0xf8] sm:$0xf]
      %v215 = vld [vmem:[%s170 + $0xfc] sm:$0xff]
      %v216 = vld [vmem:[%s170 + $0x104] sm:$0xff]
      %v217 = vld [vmem:[%s170 + $0x10c] sm:$0xff]
      %v218 = vld [vmem:[%s170 + $0x114] sm:$0xff]
      %v219 = vld [vmem:[%s170 + $0x11c] sm:$0xf]
      %v220 = vld [vmem:[%s1] sm:$0xff]
      %v221 = vld [vmem:[%s1 + $0x8] sm:$0xff]
      %v222 = vld [vmem:[%s1 + $0x10] sm:$0xff]
      %v223 = vld [vmem:[%s1 + $0x18] sm:$0xff]
      %v224 = vld [vmem:[%s1 + $0x20] sm:$0xff]
      %v225 = vld [vmem:[%s1 + $0x28] sm:$0xff]
      %v226 = vld [vmem:[%s1 + $0x30] sm:$0xff]
      %v227 = vld [vmem:[%s1 + $0x38] sm:$0xff]
      %v228 = vld [vmem:[%s1 + $0x40] sm:$0xff]
      %v229 = vld [vmem:[%s1 + $0x48] sm:$0xff]
      %v230 = vld [vmem:[%s1 + $0x50] sm:$0xff]
      %v231 = vld [vmem:[%s1 + $0x58] sm:$0xff]
      %v232 = vld [vmem:[%s1 + $0x60] sm:$0xff]
      %v233 = vld [vmem:[%s1 + $0x68] sm:$0xff]
      %v234 = vld [vmem:[%s1 + $0x70] sm:$0xff]
      %v235 = vld [vmem:[%s1 + $0x78] sm:$0xff]
      %v236 = vld [vmem:[%s1 + $0x80] sm:$0xff]
      %v237 = vld [vmem:[%s1 + $0x88] sm:$0xff]
      %v238 = vld [vmem:[%s1 + $0x90] sm:$0xff]
      %v239 = vld [vmem:[%s1 + $0x98] sm:$0xff]
      %v240 = vld [vmem:[%s1 + $0xa0] sm:$0xff]
      %v241 = vld [vmem:[%s1 + $0xa8] sm:$0xff]
      %v242 = vld [vmem:[%s1 + $0xb0] sm:$0xff]
      %v243 = vld [vmem:[%s1 + $0xb8] sm:$0xff]
      %v244 = vld [vmem:[%s1 + $0xc0] sm:$0xff]
      %v245 = vld [vmem:[%s1 + $0xc8] sm:$0xff]
      %v246 = vld [vmem:[%s1 + $0xd0] sm:$0xff]
      %v247 = vld [vmem:[%s1 + $0xd8] sm:$0xff]
      %v248 = vld [vmem:[%s1 + $0xe0] sm:$0xff]
      %v249 = vld [vmem:[%s1 + $0xe8] sm:$0xff]
      %v250 = vld [vmem:[%s1 + $0xf0] sm:$0xff]
      %v251 = vld [vmem:[%s1 + $0xf8] sm:$0xff]
      %v252 = vld [vmem:[%s1 + $0x100] sm:$0xff]
      %v253 = vld [vmem:[%s1 + $0x108] sm:$0xff]
      %v254 = vld [vmem:[%s1 + $0x110] sm:$0xff]
      %v255 = vld [vmem:[%s1 + $0x118] sm:$0xff]
      %v256 = vld [vmem:[%s1 + $0x120] sm:$0xff]
      %v257 = vld [vmem:[%s1 + $0x128] sm:$0xff]
      %v258 = vld [vmem:[%s1 + $0x130] sm:$0xff]
      %v259 = vld [vmem:[%s1 + $0x138] sm:$0xff]
      %v260 = vld [vmem:[%s1 + $0x140] sm:$0xff]
      %v261 = vld [vmem:[%s1 + $0x148] sm:$0xff]
      %v262 = vld [vmem:[%s1 + $0x150] sm:$0xff]
      %v263 = vld [vmem:[%s1 + $0x158] sm:$0xff]
      %v264 = vld [vmem:[%s1 + $0x160] sm:$0xff]
      %v265 = vld [vmem:[%s1 + $0x168] sm:$0xff]
      %v266 = vld [vmem:[%s1 + $0x170] sm:$0xff]
      %v267 = vld [vmem:[%s1 + $0x178] sm:$0xff]
      %v268 = vld [vmem:[%s1 + $0x180] sm:$0xff]
      %v269 = vld [vmem:[%s1 + $0x188] sm:$0xff]
      %v270 = vld [vmem:[%s1 + $0x190] sm:$0xff]
      %v271 = vld [vmem:[%s1 + $0x198] sm:$0xff]
      %v272 = vld [vmem:[%s1 + $0x1a0] sm:$0xff]
      %v273 = vld [vmem:[%s1 + $0x1a8] sm:$0xff]
      %v274 = vld [vmem:[%s1 + $0x1b0] sm:$0xff]
      %v275 = vld [vmem:[%s1 + $0x1b8] sm:$0xff]
      %v276 = vld [vmem:[%s1 + $0x1c0] sm:$0xff]
      %v277 = vld [vmem:[%s1 + $0x1c8] sm:$0xff]
      %v278 = vld [vmem:[%s1 + $0x1d0] sm:$0xff]
      %v279 = vld [vmem:[%s1 + $0x1d8] sm:$0xff]
      %v280 = vld [vmem:[%s1 + $0x1e0] sm:$0xff]
      %v281 = vld [vmem:[%s1 + $0x1e8] sm:$0xff]
      %v282 = vld [vmem:[%s1 + $0x1f0] sm:$0xff]
      %v283 = vld [vmem:[%s1 + $0x1f8] sm:$0xff]
      %v284 = vld [vmem:[%s1 + $0x200] sm:$0xff]
      %v285 = vld [vmem:[%s1 + $0x208] sm:$0xff]
      %v286 = vld [vmem:[%s1 + $0x210] sm:$0xff]
      %v287 = vld [vmem:[%s1 + $0x218] sm:$0xff]
      %v288 = vld [vmem:[%s1 + $0x220] sm:$0xff]
      %v289 = vld [vmem:[%s1 + $0x228] sm:$0xff]
      %v290 = vld [vmem:[%s1 + $0x230] sm:$0xff]
      %v291 = vld [vmem:[%s1 + $0x238] sm:$0xff]
      %v292 = vld [vmem:[%s1 + $0x240] sm:$0xff]
      %v293 = vld [vmem:[%s1 + $0x248] sm:$0xff]
      %v294 = vld [vmem:[%s1 + $0x250] sm:$0xff]
      %v295 = vld [vmem:[%s1 + $0x258] sm:$0xff]
      %v296 = vld [vmem:[%s1 + $0x260] sm:$0xff]
      %v297 = vld [vmem:[%s1 + $0x268] sm:$0xff]
      %v298 = vld [vmem:[%s1 + $0x270] sm:$0xff]
      %v299 = vld [vmem:[%s1 + $0x278] sm:$0xff]
      %v300 = vld [vmem:[%s1 + $0x280] sm:$0xff]
      %v301 = vld [vmem:[%s1 + $0x288] sm:$0xff]
      %v302 = vld [vmem:[%s1 + $0x290] sm:$0xff]
      %v303 = vld [vmem:[%s1 + $0x298] sm:$0xff]
      %v304 = vld [vmem:[%s1 + $0x2a0] sm:$0xff]
      %v305 = vld [vmem:[%s1 + $0x2a8] sm:$0xff]
      %v306 = vld [vmem:[%s1 + $0x2b0] sm:$0xff]
      %v307 = vld [vmem:[%s1 + $0x2b8] sm:$0xff]
      %v308 = vld [vmem:[%s1 + $0x2c0] sm:$0xff]
      %v309 = vld [vmem:[%s1 + $0x2c8] sm:$0xff]
      %v310 = vld [vmem:[%s1 + $0x2d0] sm:$0xff]
      %v311 = vld [vmem:[%s1 + $0x2d8] sm:$0xff]
      %v312 = vld [vmem:[%s1 + $0x2e0] sm:$0xff]
      %v313 = vld [vmem:[%s1 + $0x2e8] sm:$0xff]
      %v314 = vld [vmem:[%s1 + $0x2f0] sm:$0xff]
      %v315 = vld [vmem:[%s1 + $0x2f8] sm:$0xff]
      %v316 = vld [vmem:[%s1 + $0x300] sm:$0xff]
      %v317 = vld [vmem:[%s1 + $0x308] sm:$0xff]
      %v318 = vld [vmem:[%s1 + $0x310] sm:$0xff]
      %v319 = vld [vmem:[%s1 + $0x318] sm:$0xff]
      %v320 = vld [vmem:[%s1 + $0x320] sm:$0xff]
      %v321 = vld [vmem:[%s1 + $0x328] sm:$0xff]
      %v322 = vld [vmem:[%s1 + $0x330] sm:$0xff]
      %v323 = vld [vmem:[%s1 + $0x338] sm:$0xff]
      %v324 = vld [vmem:[%s1 + $0x340] sm:$0xff]
      %v325 = vld [vmem:[%s1 + $0x348] sm:$0xff]
      %v326 = vld [vmem:[%s1 + $0x350] sm:$0xff]
      %v327 = vld [vmem:[%s1 + $0x358] sm:$0xff]
      %v328 = vld [vmem:[%s1 + $0x360] sm:$0xff]
      %v329 = vld [vmem:[%s1 + $0x368] sm:$0xff]
      %v330 = vld [vmem:[%s1 + $0x370] sm:$0xff]
      %v331 = vld [vmem:[%s1 + $0x378] sm:$0xff]
      %v332 = vld [vmem:[%s1 + $0x380] sm:$0xff]
      %v333 = vld [vmem:[%s1 + $0x388] sm:$0xff]
      %v334 = vld [vmem:[%s1 + $0x390] sm:$0xff]
      %v335 = vld [vmem:[%s1 + $0x398] sm:$0xff]
      %v336 = vld [vmem:[%s1 + $0x3a0] sm:$0xff]
      %v337 = vld [vmem:[%s1 + $0x3a8] sm:$0xff]
      %v338 = vld [vmem:[%s1 + $0x3b0] sm:$0xff]
      %v339 = vld [vmem:[%s1 + $0x3b8] sm:$0xff]
      %v340 = vld [vmem:[%s1 + $0x3c0] sm:$0xff]
      %v341 = vld [vmem:[%s1 + $0x3c8] sm:$0xff]
      %v342 = vld [vmem:[%s1 + $0x3d0] sm:$0xff]
      %v343 = vld [vmem:[%s1 + $0x3d8] sm:$0xff]
      %v344 = vld [vmem:[%s1 + $0x3e0] sm:$0xff]
      %v345 = vld [vmem:[%s1 + $0x3e8] sm:$0xff]
      %v346 = vld [vmem:[%s1 + $0x3f0] sm:$0xff]
      %v347 = vld [vmem:[%s1 + $0x3f8] sm:$0xff]
      %v348 = vld [vmem:[%s1 + $0x400] sm:$0xff]
      %v349 = vld [vmem:[%s1 + $0x408] sm:$0xff]
      %v350 = vld [vmem:[%s1 + $0x410] sm:$0xff]
      %v351 = vld [vmem:[%s1 + $0x418] sm:$0xff]
      %v352 = vld [vmem:[%s1 + $0x420] sm:$0xff]
      %v353 = vld [vmem:[%s1 + $0x428] sm:$0xff]
      %v354 = vld [vmem:[%s1 + $0x430] sm:$0xff]
      %v355 = vld [vmem:[%s1 + $0x438] sm:$0xff]
      %v356 = vld [vmem:[%s1 + $0x440] sm:$0xff]
      %v357 = vld [vmem:[%s1 + $0x448] sm:$0xff]
      %v358 = vld [vmem:[%s1 + $0x450] sm:$0xff]
      %v359 = vld [vmem:[%s1 + $0x458] sm:$0xff]
      %v360 = vld [vmem:[%s1 + $0x460] sm:$0xff]
      %v361 = vld [vmem:[%s1 + $0x468] sm:$0xff]
      %v362 = vld [vmem:[%s1 + $0x470] sm:$0xff]
      %v363 = vld [vmem:[%s1 + $0x478] sm:$0xff]
      %v364 = vld [vmem:[%s2] sm:$0x3]
      %v366 = vlaneseq
      %v367 = vshrl.u32 %v366, 7
      %v368 = vsub.s32 0, %v367
      %v369 = vrot.slane %v364, %v368
      %v370 = vlaneseq
      %v371 = vshrl.u32 %v370, 7
      %v372 = vsub.s32 1, %v371
      %v373 = vrot.slane %v364, %v372
      %v416 = vunpack.c.l.b16 %v180
      %v417 = vunpack.c.h.b16 %v180
      %v418 = vunpack.c.l.b16 %v181
      %v419 = vunpack.c.h.b16 %v181
      %v420 = vunpack.c.l.b16 %v182
      %v421 = vunpack.c.h.b16 %v182
      %v422 = vunpack.c.l.b16 %v183
      %v423 = vunpack.c.h.b16 %v183
      %v424 = vunpack.c.l.b16 %v184
      %v425 = vunpack.c.l.b16 %v185
      %v426 = vunpack.c.h.b16 %v185
      %v427 = vunpack.c.l.b16 %v186
      %v428 = vunpack.c.h.b16 %v186
      %v429 = vunpack.c.l.b16 %v187
      %v430 = vunpack.c.h.b16 %v187
      %v431 = vunpack.c.l.b16 %v188
      %v432 = vunpack.c.h.b16 %v188
      %v433 = vunpack.c.l.b16 %v189
      %v434 = vunpack.c.l.b16 %v190
      %v435 = vunpack.c.h.b16 %v190
      %v436 = vunpack.c.l.b16 %v191
      %v437 = vunpack.c.h.b16 %v191
      %v438 = vunpack.c.l.b16 %v192
      %v439 = vunpack.c.h.b16 %v192
      %v440 = vunpack.c.l.b16 %v193
      %v441 = vunpack.c.h.b16 %v193
      %v442 = vunpack.c.l.b16 %v194
      %v443 = vunpack.c.l.b16 %v195
      %v444 = vunpack.c.h.b16 %v195
      %v445 = vunpack.c.l.b16 %v196
      %v446 = vunpack.c.h.b16 %v196
      %v447 = vunpack.c.l.b16 %v197
      %v448 = vunpack.c.h.b16 %v197
      %v449 = vunpack.c.l.b16 %v198
      %v450 = vunpack.c.h.b16 %v198
      %v451 = vunpack.c.l.b16 %v199
      %v452 = vunpack.c.l.b16 %v200
      %v453 = vunpack.c.h.b16 %v200
      %v454 = vunpack.c.l.b16 %v201
      %v455 = vunpack.c.h.b16 %v201
      %v456 = vunpack.c.l.b16 %v202
      %v457 = vunpack.c.h.b16 %v202
      %v458 = vunpack.c.l.b16 %v203
      %v459 = vunpack.c.h.b16 %v203
      %v460 = vunpack.c.l.b16 %v204
      %v461 = vunpack.c.l.b16 %v205
      %v462 = vunpack.c.h.b16 %v205
      %v463 = vunpack.c.l.b16 %v206
      %v464 = vunpack.c.h.b16 %v206
      %v465 = vunpack.c.l.b16 %v207
      %v466 = vunpack.c.h.b16 %v207
      %v467 = vunpack.c.l.b16 %v208
      %v468 = vunpack.c.h.b16 %v208
      %v469 = vunpack.c.l.b16 %v209
      %v470 = vunpack.c.l.b16 %v210
      %v471 = vunpack.c.h.b16 %v210
      %v472 = vunpack.c.l.b16 %v211
      %v473 = vunpack.c.h.b16 %v211
      %v474 = vunpack.c.l.b16 %v212
      %v475 = vunpack.c.h.b16 %v212
      %v476 = vunpack.c.l.b16 %v213
      %v477 = vunpack.c.h.b16 %v213
      %v478 = vunpack.c.l.b16 %v214
      %v479 = vunpack.c.l.b16 %v215
      %v480 = vunpack.c.h.b16 %v215
      %v481 = vunpack.c.l.b16 %v216
      %v482 = vunpack.c.h.b16 %v216
      %v483 = vunpack.c.l.b16 %v217
      %v484 = vunpack.c.h.b16 %v217
      %v485 = vunpack.c.l.b16 %v218
      %v486 = vunpack.c.h.b16 %v218
      %v487 = vunpack.c.l.b16 %v219
      %v488 = vpack.c.b16 %v425, %v416
      %v489 = vpack.c.b16 %v426, %v417
      %v490 = vpack.c.b16 %v427, %v418
      %v491 = vpack.c.b16 %v428, %v419
      %v492 = vpack.c.b16 %v429, %v420
      %v493 = vpack.c.b16 %v430, %v421
      %v494 = vpack.c.b16 %v431, %v422
      %v495 = vpack.c.b16 %v432, %v423
      %v496 = vpack.c.b16 %v433, %v424
      %v497 = vpack.c.b16 %v443, %v434
      %v498 = vpack.c.b16 %v444, %v435
      %v499 = vpack.c.b16 %v445, %v436
      %v500 = vpack.c.b16 %v446, %v437
      %v501 = vpack.c.b16 %v447, %v438
      %v502 = vpack.c.b16 %v448, %v439
      %v503 = vpack.c.b16 %v449, %v440
      %v504 = vpack.c.b16 %v450, %v441
      %v505 = vpack.c.b16 %v451, %v442
      %v506 = vpack.c.b16 %v461, %v452
      %v507 = vpack.c.b16 %v462, %v453
      %v508 = vpack.c.b16 %v463, %v454
      %v509 = vpack.c.b16 %v464, %v455
      %v510 = vpack.c.b16 %v465, %v456
      %v511 = vpack.c.b16 %v466, %v457
      %v512 = vpack.c.b16 %v467, %v458
      %v513 = vpack.c.b16 %v468, %v459
      %v514 = vpack.c.b16 %v469, %v460
      %v515 = vpack.c.b16 %v479, %v470
      %v516 = vpack.c.b16 %v480, %v471
      %v517 = vpack.c.b16 %v481, %v472
      %v518 = vpack.c.b16 %v482, %v473
      %v519 = vpack.c.b16 %v483, %v474
      %v520 = vpack.c.b16 %v484, %v475
      %v521 = vpack.c.b16 %v485, %v476
      %v522 = vpack.c.b16 %v486, %v477
      %v523 = vpack.c.b16 %v487, %v478
      %v704 = vunpack.c.l.b16 %v220
      %v705 = vunpack.c.h.b16 %v220
      %v706 = vunpack.c.l.b16 %v221
      %v707 = vunpack.c.h.b16 %v221
      %v708 = vunpack.c.l.b16 %v222
      %v709 = vunpack.c.h.b16 %v222
      %v710 = vunpack.c.l.b16 %v223
      %v711 = vunpack.c.h.b16 %v223
      %v712 = vunpack.c.l.b16 %v224
      %v713 = vunpack.c.h.b16 %v224
      %v714 = vunpack.c.l.b16 %v225
      %v715 = vunpack.c.h.b16 %v225
      %v716 = vunpack.c.l.b16 %v226
      %v717 = vunpack.c.h.b16 %v226
      %v718 = vunpack.c.l.b16 %v227
      %v719 = vunpack.c.h.b16 %v227
      %v720 = vunpack.c.l.b16 %v228
      %v721 = vunpack.c.h.b16 %v228
      %v722 = vunpack.c.l.b16 %v229
      %v723 = vunpack.c.h.b16 %v229
      %v724 = vunpack.c.l.b16 %v230
      %v725 = vunpack.c.h.b16 %v230
      %v726 = vunpack.c.l.b16 %v231
      %v727 = vunpack.c.h.b16 %v231
      %v728 = vunpack.c.l.b16 %v232
      %v729 = vunpack.c.h.b16 %v232
      %v730 = vunpack.c.l.b16 %v233
      %v731 = vunpack.c.h.b16 %v233
      %v732 = vunpack.c.l.b16 %v234
      %v733 = vunpack.c.h.b16 %v234
      %v734 = vunpack.c.l.b16 %v235
      %v735 = vunpack.c.h.b16 %v235
      %v736 = vunpack.c.l.b16 %v236
      %v737 = vunpack.c.h.b16 %v236
      %v738 = vunpack.c.l.b16 %v237
      %v739 = vunpack.c.h.b16 %v237
      %v740 = vunpack.c.l.b16 %v238
      %v741 = vunpack.c.h.b16 %v238
      %v742 = vunpack.c.l.b16 %v239
      %v743 = vunpack.c.h.b16 %v239
      %v744 = vunpack.c.l.b16 %v240
      %v745 = vunpack.c.h.b16 %v240
      %v746 = vunpack.c.l.b16 %v241
      %v747 = vunpack.c.h.b16 %v241
      %v748 = vunpack.c.l.b16 %v242
      %v749 = vunpack.c.h.b16 %v242
      %v750 = vunpack.c.l.b16 %v243
      %v751 = vunpack.c.h.b16 %v243
      %v752 = vunpack.c.l.b16 %v244
      %v753 = vunpack.c.h.b16 %v244
      %v754 = vunpack.c.l.b16 %v245
      %v755 = vunpack.c.h.b16 %v245
      %v756 = vunpack.c.l.b16 %v246
      %v757 = vunpack.c.h.b16 %v246
      %v758 = vunpack.c.l.b16 %v247
      %v759 = vunpack.c.h.b16 %v247
      %v760 = vunpack.c.l.b16 %v248
      %v761 = vunpack.c.h.b16 %v248
      %v762 = vunpack.c.l.b16 %v249
      %v763 = vunpack.c.h.b16 %v249
      %v764 = vunpack.c.l.b16 %v250
      %v765 = vunpack.c.h.b16 %v250
      %v766 = vunpack.c.l.b16 %v251
      %v767 = vunpack.c.h.b16 %v251
      %v768 = vunpack.c.l.b16 %v252
      %v769 = vunpack.c.h.b16 %v252
      %v770 = vunpack.c.l.b16 %v253
      %v771 = vunpack.c.h.b16 %v253
      %v772 = vunpack.c.l.b16 %v254
      %v773 = vunpack.c.h.b16 %v254
      %v774 = vunpack.c.l.b16 %v255
      %v775 = vunpack.c.h.b16 %v255
      %v776 = vunpack.c.l.b16 %v256
      %v777 = vunpack.c.h.b16 %v256
      %v778 = vunpack.c.l.b16 %v257
      %v779 = vunpack.c.h.b16 %v257
      %v780 = vunpack.c.l.b16 %v258
      %v781 = vunpack.c.h.b16 %v258
      %v782 = vunpack.c.l.b16 %v259
      %v783 = vunpack.c.h.b16 %v259
      %v784 = vunpack.c.l.b16 %v260
      %v785 = vunpack.c.h.b16 %v260
      %v786 = vunpack.c.l.b16 %v261
      %v787 = vunpack.c.h.b16 %v261
      %v788 = vunpack.c.l.b16 %v262
      %v789 = vunpack.c.h.b16 %v262
      %v790 = vunpack.c.l.b16 %v263
      %v791 = vunpack.c.h.b16 %v263
      %v792 = vunpack.c.l.b16 %v264
      %v793 = vunpack.c.h.b16 %v264
      %v794 = vunpack.c.l.b16 %v265
      %v795 = vunpack.c.h.b16 %v265
      %v796 = vunpack.c.l.b16 %v266
      %v797 = vunpack.c.h.b16 %v266
      %v798 = vunpack.c.l.b16 %v267
      %v799 = vunpack.c.h.b16 %v267
      %v800 = vunpack.c.l.b16 %v268
      %v801 = vunpack.c.h.b16 %v268
      %v802 = vunpack.c.l.b16 %v269
      %v803 = vunpack.c.h.b16 %v269
      %v804 = vunpack.c.l.b16 %v270
      %v805 = vunpack.c.h.b16 %v270
      %v806 = vunpack.c.l.b16 %v271
      %v807 = vunpack.c.h.b16 %v271
      %v808 = vunpack.c.l.b16 %v272
      %v809 = vunpack.c.h.b16 %v272
      %v810 = vunpack.c.l.b16 %v273
      %v811 = vunpack.c.h.b16 %v273
      %v812 = vunpack.c.l.b16 %v274
      %v813 = vunpack.c.h.b16 %v274
      %v814 = vunpack.c.l.b16 %v275
      %v815 = vunpack.c.h.b16 %v275
      %v816 = vunpack.c.l.b16 %v276
      %v817 = vunpack.c.h.b16 %v276
      %v818 = vunpack.c.l.b16 %v277
      %v819 = vunpack.c.h.b16 %v277
      %v820 = vunpack.c.l.b16 %v278
      %v821 = vunpack.c.h.b16 %v278
      %v822 = vunpack.c.l.b16 %v279
      %v823 = vunpack.c.h.b16 %v279
      %v824 = vunpack.c.l.b16 %v280
      %v825 = vunpack.c.h.b16 %v280
      %v826 = vunpack.c.l.b16 %v281
      %v827 = vunpack.c.h.b16 %v281
      %v828 = vunpack.c.l.b16 %v282
      %v829 = vunpack.c.h.b16 %v282
      %v830 = vunpack.c.l.b16 %v283
      %v831 = vunpack.c.h.b16 %v283
      %v832 = vunpack.c.l.b16 %v284
      %v833 = vunpack.c.h.b16 %v284
      %v834 = vunpack.c.l.b16 %v285
      %v835 = vunpack.c.h.b16 %v285
      %v836 = vunpack.c.l.b16 %v286
      %v837 = vunpack.c.h.b16 %v286
      %v838 = vunpack.c.l.b16 %v287
      %v839 = vunpack.c.h.b16 %v287
      %v840 = vunpack.c.l.b16 %v288
      %v841 = vunpack.c.h.b16 %v288
      %v842 = vunpack.c.l.b16 %v289
      %v843 = vunpack.c.h.b16 %v289
      %v844 = vunpack.c.l.b16 %v290
      %v845 = vunpack.c.h.b16 %v290
      %v846 = vunpack.c.l.b16 %v291
      %v847 = vunpack.c.h.b16 %v291
      %v848 = vunpack.c.l.b16 %v292
      %v849 = vunpack.c.h.b16 %v292
      %v850 = vunpack.c.l.b16 %v293
      %v851 = vunpack.c.h.b16 %v293
      %v852 = vunpack.c.l.b16 %v294
      %v853 = vunpack.c.h.b16 %v294
      %v854 = vunpack.c.l.b16 %v295
      %v855 = vunpack.c.h.b16 %v295
      %v856 = vunpack.c.l.b16 %v296
      %v857 = vunpack.c.h.b16 %v296
      %v858 = vunpack.c.l.b16 %v297
      %v859 = vunpack.c.h.b16 %v297
      %v860 = vunpack.c.l.b16 %v298
      %v861 = vunpack.c.h.b16 %v298
      %v862 = vunpack.c.l.b16 %v299
      %v863 = vunpack.c.h.b16 %v299
      %v864 = vunpack.c.l.b16 %v300
      %v865 = vunpack.c.h.b16 %v300
      %v866 = vunpack.c.l.b16 %v301
      %v867 = vunpack.c.h.b16 %v301
      %v868 = vunpack.c.l.b16 %v302
      %v869 = vunpack.c.h.b16 %v302
      %v870 = vunpack.c.l.b16 %v303
      %v871 = vunpack.c.h.b16 %v303
      %v872 = vunpack.c.l.b16 %v304
      %v873 = vunpack.c.h.b16 %v304
      %v874 = vunpack.c.l.b16 %v305
      %v875 = vunpack.c.h.b16 %v305
      %v876 = vunpack.c.l.b16 %v306
      %v877 = vunpack.c.h.b16 %v306
      %v878 = vunpack.c.l.b16 %v307
      %v879 = vunpack.c.h.b16 %v307
      %v880 = vunpack.c.l.b16 %v308
      %v881 = vunpack.c.h.b16 %v308
      %v882 = vunpack.c.l.b16 %v309
      %v883 = vunpack.c.h.b16 %v309
      %v884 = vunpack.c.l.b16 %v310
      %v885 = vunpack.c.h.b16 %v310
      %v886 = vunpack.c.l.b16 %v311
      %v887 = vunpack.c.h.b16 %v311
      %v888 = vunpack.c.l.b16 %v312
      %v889 = vunpack.c.h.b16 %v312
      %v890 = vunpack.c.l.b16 %v313
      %v891 = vunpack.c.h.b16 %v313
      %v892 = vunpack.c.l.b16 %v314
      %v893 = vunpack.c.h.b16 %v314
      %v894 = vunpack.c.l.b16 %v315
      %v895 = vunpack.c.h.b16 %v315
      %v896 = vunpack.c.l.b16 %v316
      %v897 = vunpack.c.h.b16 %v316
      %v898 = vunpack.c.l.b16 %v317
      %v899 = vunpack.c.h.b16 %v317
      %v900 = vunpack.c.l.b16 %v318
      %v901 = vunpack.c.h.b16 %v318
      %v902 = vunpack.c.l.b16 %v319
      %v903 = vunpack.c.h.b16 %v319
      %v904 = vunpack.c.l.b16 %v320
      %v905 = vunpack.c.h.b16 %v320
      %v906 = vunpack.c.l.b16 %v321
      %v907 = vunpack.c.h.b16 %v321
      %v908 = vunpack.c.l.b16 %v322
      %v909 = vunpack.c.h.b16 %v322
      %v910 = vunpack.c.l.b16 %v323
      %v911 = vunpack.c.h.b16 %v323
      %v912 = vunpack.c.l.b16 %v324
      %v913 = vunpack.c.h.b16 %v324
      %v914 = vunpack.c.l.b16 %v325
      %v915 = vunpack.c.h.b16 %v325
      %v916 = vunpack.c.l.b16 %v326
      %v917 = vunpack.c.h.b16 %v326
      %v918 = vunpack.c.l.b16 %v327
      %v919 = vunpack.c.h.b16 %v327
      %v920 = vunpack.c.l.b16 %v328
      %v921 = vunpack.c.h.b16 %v328
      %v922 = vunpack.c.l.b16 %v329
      %v923 = vunpack.c.h.b16 %v329
      %v924 = vunpack.c.l.b16 %v330
      %v925 = vunpack.c.h.b16 %v330
      %v926 = vunpack.c.l.b16 %v331
      %v927 = vunpack.c.h.b16 %v331
      %v928 = vunpack.c.l.b16 %v332
      %v929 = vunpack.c.h.b16 %v332
      %v930 = vunpack.c.l.b16 %v333
      %v931 = vunpack.c.h.b16 %v333
      %v932 = vunpack.c.l.b16 %v334
      %v933 = vunpack.c.h.b16 %v334
      %v934 = vunpack.c.l.b16 %v335
      %v935 = vunpack.c.h.b16 %v335
      %v936 = vunpack.c.l.b16 %v336
      %v937 = vunpack.c.h.b16 %v336
      %v938 = vunpack.c.l.b16 %v337
      %v939 = vunpack.c.h.b16 %v337
      %v940 = vunpack.c.l.b16 %v338
      %v941 = vunpack.c.h.b16 %v338
      %v942 = vunpack.c.l.b16 %v339
      %v943 = vunpack.c.h.b16 %v339
      %v944 = vunpack.c.l.b16 %v340
      %v945 = vunpack.c.h.b16 %v340
      %v946 = vunpack.c.l.b16 %v341
      %v947 = vunpack.c.h.b16 %v341
      %v948 = vunpack.c.l.b16 %v342
      %v949 = vunpack.c.h.b16 %v342
      %v950 = vunpack.c.l.b16 %v343
      %v951 = vunpack.c.h.b16 %v343
      %v952 = vunpack.c.l.b16 %v344
      %v953 = vunpack.c.h.b16 %v344
      %v954 = vunpack.c.l.b16 %v345
      %v955 = vunpack.c.h.b16 %v345
      %v956 = vunpack.c.l.b16 %v346
      %v957 = vunpack.c.h.b16 %v346
      %v958 = vunpack.c.l.b16 %v347
      %v959 = vunpack.c.h.b16 %v347
      %v960 = vunpack.c.l.b16 %v348
      %v961 = vunpack.c.h.b16 %v348
      %v962 = vunpack.c.l.b16 %v349
      %v963 = vunpack.c.h.b16 %v349
      %v964 = vunpack.c.l.b16 %v350
      %v965 = vunpack.c.h.b16 %v350
      %v966 = vunpack.c.l.b16 %v351
      %v967 = vunpack.c.h.b16 %v351
      %v968 = vunpack.c.l.b16 %v352
      %v969 = vunpack.c.h.b16 %v352
      %v970 = vunpack.c.l.b16 %v353
      %v971 = vunpack.c.h.b16 %v353
      %v972 = vunpack.c.l.b16 %v354
      %v973 = vunpack.c.h.b16 %v354
      %v974 = vunpack.c.l.b16 %v355
      %v975 = vunpack.c.h.b16 %v355
      %v976 = vunpack.c.l.b16 %v356
      %v977 = vunpack.c.h.b16 %v356
      %v978 = vunpack.c.l.b16 %v357
      %v979 = vunpack.c.h.b16 %v357
      %v980 = vunpack.c.l.b16 %v358
      %v981 = vunpack.c.h.b16 %v358
      %v982 = vunpack.c.l.b16 %v359
      %v983 = vunpack.c.h.b16 %v359
      %v984 = vunpack.c.l.b16 %v360
      %v985 = vunpack.c.h.b16 %v360
      %v986 = vunpack.c.l.b16 %v361
      %v987 = vunpack.c.h.b16 %v361
      %v988 = vunpack.c.l.b16 %v362
      %v989 = vunpack.c.h.b16 %v362
      %v990 = vunpack.c.l.b16 %v363
      %v991 = vunpack.c.h.b16 %v363
      %v992 = vpack.c.b16 %v706, %v704
      %v993 = vpack.c.b16 %v707, %v705
      %v994 = vpack.c.b16 %v710, %v708
      %v995 = vpack.c.b16 %v711, %v709
      %v996 = vpack.c.b16 %v714, %v712
      %v997 = vpack.c.b16 %v715, %v713
      %v998 = vpack.c.b16 %v718, %v716
      %v999 = vpack.c.b16 %v719, %v717
      %v1000 = vpack.c.b16 %v722, %v720
      %v1001 = vpack.c.b16 %v723, %v721
      %v1002 = vpack.c.b16 %v726, %v724
      %v1003 = vpack.c.b16 %v727, %v725
      %v1004 = vpack.c.b16 %v730, %v728
      %v1005 = vpack.c.b16 %v731, %v729
      %v1006 = vpack.c.b16 %v734, %v732
      %v1007 = vpack.c.b16 %v735, %v733
      %v1008 = vpack.c.b16 %v738, %v736
      %v1009 = vpack.c.b16 %v739, %v737
      %v1010 = vpack.c.b16 %v742, %v740
      %v1011 = vpack.c.b16 %v743, %v741
      %v1012 = vpack.c.b16 %v746, %v744
      %v1013 = vpack.c.b16 %v747, %v745
      %v1014 = vpack.c.b16 %v750, %v748
      %v1015 = vpack.c.b16 %v751, %v749
      %v1016 = vpack.c.b16 %v754, %v752
      %v1017 = vpack.c.b16 %v755, %v753
      %v1018 = vpack.c.b16 %v758, %v756
      %v1019 = vpack.c.b16 %v759, %v757
      %v1020 = vpack.c.b16 %v762, %v760
      %v1021 = vpack.c.b16 %v763, %v761
      %v1022 = vpack.c.b16 %v766, %v764
      %v1023 = vpack.c.b16 %v767, %v765
      %v1024 = vpack.c.b16 %v770, %v768
      %v1025 = vpack.c.b16 %v771, %v769
      %v1026 = vpack.c.b16 %v774, %v772
      %v1027 = vpack.c.b16 %v775, %v773
      %v1028 = vpack.c.b16 %v778, %v776
      %v1029 = vpack.c.b16 %v779, %v777
      %v1030 = vpack.c.b16 %v782, %v780
      %v1031 = vpack.c.b16 %v783, %v781
      %v1032 = vpack.c.b16 %v786, %v784
      %v1033 = vpack.c.b16 %v787, %v785
      %v1034 = vpack.c.b16 %v790, %v788
      %v1035 = vpack.c.b16 %v791, %v789
      %v1036 = vpack.c.b16 %v794, %v792
      %v1037 = vpack.c.b16 %v795, %v793
      %v1038 = vpack.c.b16 %v798, %v796
      %v1039 = vpack.c.b16 %v799, %v797
      %v1040 = vpack.c.b16 %v802, %v800
      %v1041 = vpack.c.b16 %v803, %v801
      %v1042 = vpack.c.b16 %v806, %v804
      %v1043 = vpack.c.b16 %v807, %v805
      %v1044 = vpack.c.b16 %v810, %v808
      %v1045 = vpack.c.b16 %v811, %v809
      %v1046 = vpack.c.b16 %v814, %v812
      %v1047 = vpack.c.b16 %v815, %v813
      %v1048 = vpack.c.b16 %v818, %v816
      %v1049 = vpack.c.b16 %v819, %v817
      %v1050 = vpack.c.b16 %v822, %v820
      %v1051 = vpack.c.b16 %v823, %v821
      %v1052 = vpack.c.b16 %v826, %v824
      %v1053 = vpack.c.b16 %v827, %v825
      %v1054 = vpack.c.b16 %v830, %v828
      %v1055 = vpack.c.b16 %v831, %v829
      %v1056 = vpack.c.b16 %v834, %v832
      %v1057 = vpack.c.b16 %v835, %v833
      %v1058 = vpack.c.b16 %v838, %v836
      %v1059 = vpack.c.b16 %v839, %v837
      %v1060 = vpack.c.b16 %v842, %v840
      %v1061 = vpack.c.b16 %v843, %v841
      %v1062 = vpack.c.b16 %v846, %v844
      %v1063 = vpack.c.b16 %v847, %v845
      %v1064 = vpack.c.b16 %v850, %v848
      %v1065 = vpack.c.b16 %v851, %v849
      %v1066 = vpack.c.b16 %v854, %v852
      %v1067 = vpack.c.b16 %v855, %v853
      %v1068 = vpack.c.b16 %v858, %v856
      %v1069 = vpack.c.b16 %v859, %v857
      %v1070 = vpack.c.b16 %v862, %v860
      %v1071 = vpack.c.b16 %v863, %v861
      %v1072 = vpack.c.b16 %v866, %v864
      %v1073 = vpack.c.b16 %v867, %v865
      %v1074 = vpack.c.b16 %v870, %v868
      %v1075 = vpack.c.b16 %v871, %v869
      %v1076 = vpack.c.b16 %v874, %v872
      %v1077 = vpack.c.b16 %v875, %v873
      %v1078 = vpack.c.b16 %v878, %v876
      %v1079 = vpack.c.b16 %v879, %v877
      %v1080 = vpack.c.b16 %v882, %v880
      %v1081 = vpack.c.b16 %v883, %v881
      %v1082 = vpack.c.b16 %v886, %v884
      %v1083 = vpack.c.b16 %v887, %v885
      %v1084 = vpack.c.b16 %v890, %v888
      %v1085 = vpack.c.b16 %v891, %v889
      %v1086 = vpack.c.b16 %v894, %v892
      %v1087 = vpack.c.b16 %v895, %v893
      %v1088 = vpack.c.b16 %v898, %v896
      %v1089 = vpack.c.b16 %v899, %v897
      %v1090 = vpack.c.b16 %v902, %v900
      %v1091 = vpack.c.b16 %v903, %v901
      %v1092 = vpack.c.b16 %v906, %v904
      %v1093 = vpack.c.b16 %v907, %v905
      %v1094 = vpack.c.b16 %v910, %v908
      %v1095 = vpack.c.b16 %v911, %v909
      %v1096 = vpack.c.b16 %v914, %v912
      %v1097 = vpack.c.b16 %v915, %v913
      %v1098 = vpack.c.b16 %v918, %v916
      %v1099 = vpack.c.b16 %v919, %v917
      %v1100 = vpack.c.b16 %v922, %v920
      %v1101 = vpack.c.b16 %v923, %v921
      %v1102 = vpack.c.b16 %v926, %v924
      %v1103 = vpack.c.b16 %v927, %v925
      %v1104 = vpack.c.b16 %v930, %v928
      %v1105 = vpack.c.b16 %v931, %v929
      %v1106 = vpack.c.b16 %v934, %v932
      %v1107 = vpack.c.b16 %v935, %v933
      %v1108 = vpack.c.b16 %v938, %v936
      %v1109 = vpack.c.b16 %v939, %v937
      %v1110 = vpack.c.b16 %v942, %v940
      %v1111 = vpack.c.b16 %v943, %v941
      %v1112 = vpack.c.b16 %v946, %v944
      %v1113 = vpack.c.b16 %v947, %v945
      %v1114 = vpack.c.b16 %v950, %v948
      %v1115 = vpack.c.b16 %v951, %v949
      %v1116 = vpack.c.b16 %v954, %v952
      %v1117 = vpack.c.b16 %v955, %v953
      %v1118 = vpack.c.b16 %v958, %v956
      %v1119 = vpack.c.b16 %v959, %v957
      %v1120 = vpack.c.b16 %v962, %v960
      %v1121 = vpack.c.b16 %v963, %v961
      %v1122 = vpack.c.b16 %v966, %v964
      %v1123 = vpack.c.b16 %v967, %v965
      %v1124 = vpack.c.b16 %v970, %v968
      %v1125 = vpack.c.b16 %v971, %v969
      %v1126 = vpack.c.b16 %v974, %v972
      %v1127 = vpack.c.b16 %v975, %v973
      %v1128 = vpack.c.b16 %v978, %v976
      %v1129 = vpack.c.b16 %v979, %v977
      %v1130 = vpack.c.b16 %v982, %v980
      %v1131 = vpack.c.b16 %v983, %v981
      %v1132 = vpack.c.b16 %v986, %v984
      %v1133 = vpack.c.b16 %v987, %v985
      %v1134 = vpack.c.b16 %v990, %v988
      %v1135 = vpack.c.b16 %v991, %v989
      %1280 = vmatprep.subr.bf16.mxu0 %v993
      %1281 = vmatpush1.bf16.msra.mxu0 %v992
      %1282 = vmatprep.subr.bf16.mxu0 %v995
      %1283 = vmatpush1.bf16.msra.mxu0 %v994
      %1284 = vmatprep.subr.bf16.mxu0 %v997
      %1285 = vmatpush1.bf16.msra.mxu0 %v996
      %1286 = vmatprep.subr.bf16.mxu0 %v999
      %1287 = vmatpush1.bf16.msra.mxu0 %v998
      %1288 = vmatprep.subr.bf16.mxu0 %v1001
      %1289 = vmatpush1.bf16.msra.mxu0 %v1000
      %1290 = vmatprep.subr.bf16.mxu0 %v1003
      %1291 = vmatpush1.bf16.msra.mxu0 %v1002
      %1292 = vmatprep.subr.bf16.mxu0 %v1005
      %1293 = vmatpush1.bf16.msra.mxu0 %v1004
      %1294 = vmatprep.subr.bf16.mxu0 %v1007
      %1295 = vmatpush1.bf16.msra.mxu0 %v1006
      %1296 = vmatprep.subr.bf16.mxu0 %v1009
      %1297 = vmatpush1.bf16.msra.mxu0 %v1008
      %1298 = vmatprep.subr.bf16.mxu0 %v1011
      %1299 = vmatpush1.bf16.msra.mxu0 %v1010
      %1300 = vmatprep.subr.bf16.mxu0 %v1013
      %1301 = vmatpush1.bf16.msra.mxu0 %v1012
      %1302 = vmatprep.subr.bf16.mxu0 %v1015
      %1303 = vmatpush1.bf16.msra.mxu0 %v1014
      %1304 = vmatprep.subr.bf16.mxu0 %v1017
      %1305 = vmatpush1.bf16.msra.mxu0 %v1016
      %1306 = vmatprep.subr.bf16.mxu0 %v1019
      %1307 = vmatpush1.bf16.msra.mxu0 %v1018
      %1308 = vmatprep.subr.bf16.mxu0 %v1021
      %1309 = vmatpush1.bf16.msra.mxu0 %v1020
      %1310 = vmatprep.subr.bf16.mxu0 %v1023
      %1311 = vmatpush1.bf16.msra.mxu0 %v1022
      %1312 = vmatprep.mubr.bf16.mxu0 %v489
      %1313 = vmatmul.mubr.bf16.gmra.mrb[0].mxu0 %v488
      %v1314 = vpop.f32.mrb[0].mxu0
      %v1315 = vadd.f32 %v369, %v1314
      %v1316 = vpop.f32.mrb[0].mxu0
      %v1317 = vadd.f32 %v373, %v1316
      %v1318 = vpop.f32.mrb[0].mxu0
      %v1319 = vadd.f32 %v369, %v1318
      %v1320 = vpop.f32.mrb[0].mxu0
      %v1321 = vadd.f32 %v373, %v1320
      %1322 = vmatprep.mubr.bf16.mxu0 %v498
      %1323 = vmatmul.mubr.bf16.gmra.mrb[0].mxu0 %v497
      %v1324 = vpop.f32.mrb[0].mxu0
      %v1325 = vadd.f32 %v369, %v1324
      %v1326 = vpop.f32.mrb[0].mxu0
      %v1327 = vadd.f32 %v373, %v1326
      %v1328 = vpop.f32.mrb[0].mxu0
      %v1329 = vadd.f32 %v369, %v1328
      %v1330 = vpop.f32.mrb[0].mxu0
      %v1331 = vadd.f32 %v373, %v1330
      %1332 = vmatprep.mubr.bf16.mxu0 %v507
      %1333 = vmatmul.mubr.bf16.gmra.mrb[0].mxu0 %v506
      %v1334 = vpop.f32.mrb[0].mxu0
      %v1335 = vadd.f32 %v369, %v1334
      %v1336 = vpop.f32.mrb[0].mxu0
      %v1337 = vadd.f32 %v373, %v1336
      %v1338 = vpop.f32.mrb[0].mxu0
      %v1339 = vadd.f32 %v369, %v1338
      %v1340 = vpop.f32.mrb[0].mxu0
      %v1341 = vadd.f32 %v373, %v1340
      %1342 = vmatprep.mubr.bf16.mxu0 %v516
      %1343 = vmatmul.mubr.bf16.gmra.mrb[0].mxu0 %v515
      %v1344 = vpop.f32.mrb[0].mxu0
      %v1345 = vadd.f32 %v369, %v1344
      %v1346 = vpop.f32.mrb[0].mxu0
      %v1347 = vadd.f32 %v373, %v1346
      %v1348 = vpop.f32.mrb[0].mxu0
      %v1349 = vadd.f32 %v369, %v1348
      %v1350 = vpop.f32.mrb[0].mxu0
      %v1351 = vadd.f32 %v373, %v1350
      %1352 = vdwg.mxu0
      %1353 = vmatprep.subr.bf16.mxu0 %v1025
      %1354 = vmatpush1.bf16.msra.mxu0 %v1024
      %1355 = vmatprep.subr.bf16.mxu0 %v1027
      %1356 = vmatpush1.bf16.msra.mxu0 %v1026
      %1357 = vmatprep.subr.bf16.mxu0 %v1029
      %1358 = vmatpush1.bf16.msra.mxu0 %v1028
      %1359 = vmatprep.subr.bf16.mxu0 %v1031
      %1360 = vmatpush1.bf16.msra.mxu0 %v1030
      %1361 = vmatprep.subr.bf16.mxu0 %v1033
      %1362 = vmatpush1.bf16.msra.mxu0 %v1032
      %1363 = vmatprep.subr.bf16.mxu0 %v1035
      %1364 = vmatpush1.bf16.msra.mxu0 %v1034
      %1365 = vmatprep.subr.bf16.mxu0 %v1037
      %1366 = vmatpush1.bf16.msra.mxu0 %v1036
      %1367 = vmatprep.subr.bf16.mxu0 %v1039
      %1368 = vmatpush1.bf16.msra.mxu0 %v1038
      %1369 = vmatprep.subr.bf16.mxu0 %v1041
      %1370 = vmatpush1.bf16.msra.mxu0 %v1040
      %1371 = vmatprep.subr.bf16.mxu0 %v1043
      %1372 = vmatpush1.bf16.msra.mxu0 %v1042
      %1373 = vmatprep.subr.bf16.mxu0 %v1045
      %1374 = vmatpush1.bf16.msra.mxu0 %v1044
      %1375 = vmatprep.subr.bf16.mxu0 %v1047
      %1376 = vmatpush1.bf16.msra.mxu0 %v1046
      %1377 = vmatprep.subr.bf16.mxu0 %v1049
      %1378 = vmatpush1.bf16.msra.mxu0 %v1048
      %1379 = vmatprep.subr.bf16.mxu0 %v1051
      %1380 = vmatpush1.bf16.msra.mxu0 %v1050
      %1381 = vmatprep.subr.bf16.mxu0 %v1053
      %1382 = vmatpush1.bf16.msra.mxu0 %v1052
      %1383 = vmatprep.subr.bf16.mxu0 %v1055
      %1384 = vmatpush1.bf16.msra.mxu0 %v1054
      %1385 = vmatprep.mubr.bf16.mxu0 %v491
      %1386 = vmatmul.mubr.bf16.gmra.mrb[0].mxu0 %v490
      %v1387 = vpop.f32.mrb[0].mxu0
      %v1388 = vadd.f32 %v1315, %v1387
      %v1389 = vpop.f32.mrb[0].mxu0
      %v1390 = vadd.f32 %v1317, %v1389
      %v1391 = vpop.f32.mrb[0].mxu0
      %v1392 = vadd.f32 %v1319, %v1391
      %v1393 = vpop.f32.mrb[0].mxu0
      %v1394 = vadd.f32 %v1321, %v1393
      %1395 = vmatprep.mubr.bf16.mxu0 %v500
      %1396 = vmatmul.mubr.bf16.gmra.mrb[0].mxu0 %v499
      %v1397 = vpop.f32.mrb[0].mxu0
      %v1398 = vadd.f32 %v1325, %v1397
      %v1399 = vpop.f32.mrb[0].mxu0
      %v1400 = vadd.f32 %v1327, %v1399
      %v1401 = vpop.f32.mrb[0].mxu0
      %v1402 = vadd.f32 %v1329, %v1401
      %v1403 = vpop.f32.mrb[0].mxu0
      %v1404 = vadd.f32 %v1331, %v1403
      %1405 = vmatprep.mubr.bf16.mxu0 %v509
      %1406 = vmatmul.mubr.bf16.gmra.mrb[0].mxu0 %v508
      %v1407 = vpop.f32.mrb[0].mxu0
      %v1408 = vadd.f32 %v1335, %v1407
      %v1409 = vpop.f32.mrb[0].mxu0
      %v1410 = vadd.f32 %v1337, %v1409
      %v1411 = vpop.f32.mrb[0].mxu0
      %v1412 = vadd.f32 %v1339, %v1411
      %v1413 = vpop.f32.mrb[0].mxu0
      %v1414 = vadd.f32 %v1341, %v1413
      %1415 = vmatprep.mubr.bf16.mxu0 %v518
      %1416 = vmatmul.mubr.bf16.gmra.mrb[0].mxu0 %v517
      %v1417 = vpop.f32.mrb[0].mxu0
      %v1418 = vadd.f32 %v1345, %v1417
      %v1419 = vpop.f32.mrb[0].mxu0
      %v1420 = vadd.f32 %v1347, %v1419
      %v1421 = vpop.f32.mrb[0].mxu0
      %v1422 = vadd.f32 %v1349, %v1421
      %v1423 = vpop.f32.mrb[0].mxu0
      %v1424 = vadd.f32 %v1351, %v1423
      %1425 = vdwg.mxu0
      %1426 = vmatprep.subr.bf16.mxu0 %v1057
      %1427 = vmatpush1.bf16.msra.mxu0 %v1056
      %1428 = vmatprep.subr.bf16.mxu0 %v1059
      %1429 = vmatpush1.bf16.msra.mxu0 %v1058
      %1430 = vmatprep.subr.bf16.mxu0 %v1061
      %1431 = vmatpush1.bf16.msra.mxu0 %v1060
      %1432 = vmatprep.subr.bf16.mxu0 %v1063
      %1433 = vmatpush1.bf16.msra.mxu0 %v1062
      %1434 = vmatprep.subr.bf16.mxu0 %v1065
      %1435 = vmatpush1.bf16.msra.mxu0 %v1064
      %1436 = vmatprep.subr.bf16.mxu0 %v1067
      %1437 = vmatpush1.bf16.msra.mxu0 %v1066
      %1438 = vmatprep.subr.bf16.mxu0 %v1069
      %1439 = vmatpush1.bf16.msra.mxu0 %v1068
      %1440 = vmatprep.subr.bf16.mxu0 %v1071
      %1441 = vmatpush1.bf16.msra.mxu0 %v1070
      %1442 = vmatprep.subr.bf16.mxu0 %v1073
      %1443 = vmatpush1.bf16.msra.mxu0 %v1072
      %1444 = vmatprep.subr.bf16.mxu0 %v1075
      %1445 = vmatpush1.bf16.msra.mxu0 %v1074
      %1446 = vmatprep.subr.bf16.mxu0 %v1077
      %1447 = vmatpush1.bf16.msra.mxu0 %v1076
      %1448 = vmatprep.subr.bf16.mxu0 %v1079
      %1449 = vmatpush1.bf16.msra.mxu0 %v1078
      %1450 = vmatprep.subr.bf16.mxu0 %v1081
      %1451 = vmatpush1.bf16.msra.mxu0 %v1080
      %1452 = vmatprep.subr.bf16.mxu0 %v1083
      %1453 = vmatpush1.bf16.msra.mxu0 %v1082
      %1454 = vmatprep.subr.bf16.mxu0 %v1085
      %1455 = vmatpush1.bf16.msra.mxu0 %v1084
      %1456 = vmatprep.subr.bf16.mxu0 %v1087
      %1457 = vmatpush1.bf16.msra.mxu0 %v1086
      %1458 = vmatprep.mubr.bf16.mxu0 %v493
      %1459 = vmatmul.mubr.bf16.gmra.mrb[0].mxu0 %v492
      %v1460 = vpop.f32.mrb[0].mxu0
      %v1461 = vadd.f32 %v1388, %v1460
      %v1462 = vpop.f32.mrb[0].mxu0
      %v1463 = vadd.f32 %v1390, %v1462
      %v1464 = vpop.f32.mrb[0].mxu0
      %v1465 = vadd.f32 %v1392, %v1464
      %v1466 = vpop.f32.mrb[0].mxu0
      %v1467 = vadd.f32 %v1394, %v1466
      %1468 = vmatprep.mubr.bf16.mxu0 %v502
      %1469 = vmatmul.mubr.bf16.gmra.mrb[0].mxu0 %v501
      %v1470 = vpop.f32.mrb[0].mxu0
      %v1471 = vadd.f32 %v1398, %v1470
      %v1472 = vpop.f32.mrb[0].mxu0
      %v1473 = vadd.f32 %v1400, %v1472
      %v1474 = vpop.f32.mrb[0].mxu0
      %v1475 = vadd.f32 %v1402, %v1474
      %v1476 = vpop.f32.mrb[0].mxu0
      %v1477 = vadd.f32 %v1404, %v1476
      %1478 = vmatprep.mubr.bf16.mxu0 %v511
      %1479 = vmatmul.mubr.bf16.gmra.mrb[0].mxu0 %v510
      %v1480 = vpop.f32.mrb[0].mxu0
      %v1481 = vadd.f32 %v1408, %v1480
      %v1482 = vpop.f32.mrb[0].mxu0
      %v1483 = vadd.f32 %v1410, %v1482
      %v1484 = vpop.f32.mrb[0].mxu0
      %v1485 = vadd.f32 %v1412, %v1484
      %v1486 = vpop.f32.mrb[0].mxu0
      %v1487 = vadd.f32 %v1414, %v1486
      %1488 = vmatprep.mubr.bf16.mxu0 %v520
      %1489 = vmatmul.mubr.bf16.gmra.mrb[0].mxu0 %v519
      %v1490 = vpop.f32.mrb[0].mxu0
      %v1491 = vadd.f32 %v1418, %v1490
      %v1492 = vpop.f32.mrb[0].mxu0
      %v1493 = vadd.f32 %v1420, %v1492
      %v1494 = vpop.f32.mrb[0].mxu0
      %v1495 = vadd.f32 %v1422, %v1494
      %v1496 = vpop.f32.mrb[0].mxu0
      %v1497 = vadd.f32 %v1424, %v1496
      %1498 = vdwg.mxu0
      %1499 = vmatprep.subr.bf16.mxu0 %v1089
      %1500 = vmatpush1.bf16.msra.mxu0 %v1088
      %1501 = vmatprep.subr.bf16.mxu0 %v1091
      %1502 = vmatpush1.bf16.msra.mxu0 %v1090
      %1503 = vmatprep.subr.bf16.mxu0 %v1093
      %1504 = vmatpush1.bf16.msra.mxu0 %v1092
      %1505 = vmatprep.subr.bf16.mxu0 %v1095
      %1506 = vmatpush1.bf16.msra.mxu0 %v1094
      %1507 = vmatprep.subr.bf16.mxu0 %v1097
      %1508 = vmatpush1.bf16.msra.mxu0 %v1096
      %1509 = vmatprep.subr.bf16.mxu0 %v1099
      %1510 = vmatpush1.bf16.msra.mxu0 %v1098
      %1511 = vmatprep.subr.bf16.mxu0 %v1101
      %1512 = vmatpush1.bf16.msra.mxu0 %v1100
      %1513 = vmatprep.subr.bf16.mxu0 %v1103
      %1514 = vmatpush1.bf16.msra.mxu0 %v1102
      %1515 = vmatprep.subr.bf16.mxu0 %v1105
      %1516 = vmatpush1.bf16.msra.mxu0 %v1104
      %1517 = vmatprep.subr.bf16.mxu0 %v1107
      %1518 = vmatpush1.bf16.msra.mxu0 %v1106
      %1519 = vmatprep.subr.bf16.mxu0 %v1109
      %1520 = vmatpush1.bf16.msra.mxu0 %v1108
      %1521 = vmatprep.subr.bf16.mxu0 %v1111
      %1522 = vmatpush1.bf16.msra.mxu0 %v1110
      %1523 = vmatprep.subr.bf16.mxu0 %v1113
      %1524 = vmatpush1.bf16.msra.mxu0 %v1112
      %1525 = vmatprep.subr.bf16.mxu0 %v1115
      %1526 = vmatpush1.bf16.msra.mxu0 %v1114
      %1527 = vmatprep.subr.bf16.mxu0 %v1117
      %1528 = vmatpush1.bf16.msra.mxu0 %v1116
      %1529 = vmatprep.subr.bf16.mxu0 %v1119
      %1530 = vmatpush1.bf16.msra.mxu0 %v1118
      %1531 = vmatprep.mubr.bf16.mxu0 %v495
      %1532 = vmatmul.mubr.bf16.gmra.mrb[0].mxu0 %v494
      %v1533 = vpop.f32.mrb[0].mxu0
      %v1534 = vadd.f32 %v1461, %v1533
      %v1535 = vpop.f32.mrb[0].mxu0
      %v1536 = vadd.f32 %v1463, %v1535
      %v1537 = vpop.f32.mrb[0].mxu0
      %v1538 = vadd.f32 %v1465, %v1537
      %v1539 = vpop.f32.mrb[0].mxu0
      %v1540 = vadd.f32 %v1467, %v1539
      %1541 = vmatprep.mubr.bf16.mxu0 %v504
      %1542 = vmatmul.mubr.bf16.gmra.mrb[0].mxu0 %v503
      %v1543 = vpop.f32.mrb[0].mxu0
      %v1544 = vadd.f32 %v1471, %v1543
      %v1545 = vpop.f32.mrb[0].mxu0
      %v1546 = vadd.f32 %v1473, %v1545
      %v1547 = vpop.f32.mrb[0].mxu0
      %v1548 = vadd.f32 %v1475, %v1547
      %v1549 = vpop.f32.mrb[0].mxu0
      %v1550 = vadd.f32 %v1477, %v1549
      %1551 = vmatprep.mubr.bf16.mxu0 %v513
      %1552 = vmatmul.mubr.bf16.gmra.mrb[0].mxu0 %v512
      %v1553 = vpop.f32.mrb[0].mxu0
      %v1554 = vadd.f32 %v1481, %v1553
      %v1555 = vpop.f32.mrb[0].mxu0
      %v1556 = vadd.f32 %v1483, %v1555
      %v1557 = vpop.f32.mrb[0].mxu0
      %v1558 = vadd.f32 %v1485, %v1557
      %v1559 = vpop.f32.mrb[0].mxu0
      %v1560 = vadd.f32 %v1487, %v1559
      %1561 = vmatprep.mubr.bf16.mxu0 %v522
      %1562 = vmatmul.mubr.bf16.gmra.mrb[0].mxu0 %v521
      %v1563 = vpop.f32.mrb[0].mxu0
      %v1564 = vadd.f32 %v1491, %v1563
      %v1565 = vpop.f32.mrb[0].mxu0
      %v1566 = vadd.f32 %v1493, %v1565
      %v1567 = vpop.f32.mrb[0].mxu0
      %v1568 = vadd.f32 %v1495, %v1567
      %v1569 = vpop.f32.mrb[0].mxu0
      %v1570 = vadd.f32 %v1497, %v1569
      %1571 = vdwg.mxu0
      %1572 = vmatprep.subr.bf16.mxu0 %v1121
      %1573 = vmatpush1.bf16.msra.mxu0 %v1120
      %1574 = vmatprep.subr.bf16.mxu0 %v1123
      %1575 = vmatpush1.bf16.msra.mxu0 %v1122
      %1576 = vmatprep.subr.bf16.mxu0 %v1125
      %1577 = vmatpush1.bf16.msra.mxu0 %v1124
      %1578 = vmatprep.subr.bf16.mxu0 %v1127
      %1579 = vmatpush1.bf16.msra.mxu0 %v1126
      %1580 = vmatprep.subr.bf16.mxu0 %v1129
      %1581 = vmatpush1.bf16.msra.mxu0 %v1128
      %1582 = vmatprep.subr.bf16.mxu0 %v1131
      %1583 = vmatpush1.bf16.msra.mxu0 %v1130
      %1584 = vmatprep.subr.bf16.mxu0 %v1133
      %1585 = vmatpush1.bf16.msra.mxu0 %v1132
      %1586 = vmatprep.subr.bf16.mxu0 %v1135
      %1587 = vmatpush1.bf16.msra.mxu0 %v1134
      %1588 = vmatprep.subr.bf16.mxu0 0
      %1589 = vmatpush1.bf16.msra.mxu0 0
      %1590 = vmatprep.subr.bf16.mxu0 0
      %1591 = vmatpush1.bf16.msra.mxu0 0
      %1592 = vmatprep.subr.bf16.mxu0 0
      %1593 = vmatpush1.bf16.msra.mxu0 0
      %1594 = vmatprep.subr.bf16.mxu0 0
      %1595 = vmatpush1.bf16.msra.mxu0 0
      %1596 = vmatprep.subr.bf16.mxu0 0
      %1597 = vmatpush1.bf16.msra.mxu0 0
      %1598 = vmatprep.subr.bf16.mxu0 0
      %1599 = vmatpush1.bf16.msra.mxu0 0
      %1600 = vmatprep.subr.bf16.mxu0 0
      %1601 = vmatpush1.bf16.msra.mxu0 0
      %1602 = vmatprep.subr.bf16.mxu0 0
      %1603 = vmatpush1.bf16.msra.mxu0 0
      %1604 = vmatprep.mubr.bf16.mxu0 0
      %1605 = vmatmul.mubr.bf16.gmra.mrb[0].mxu0 %v496
      %v1606 = vpop.f32.mrb[0].mxu0
      %v1607 = vadd.f32 %v1534, %v1606
      %v1608 = vpop.f32.mrb[0].mxu0
      %v1609 = vadd.f32 %v1536, %v1608
      %v1610 = vpop.f32.mrb[0].mxu0
      %v1611 = vadd.f32 %v1538, %v1610
      %v1612 = vpop.f32.mrb[0].mxu0
      %v1613 = vadd.f32 %v1540, %v1612
      %1614 = vmatprep.mubr.bf16.mxu0 0
      %1615 = vmatmul.mubr.bf16.gmra.mrb[0].mxu0 %v505
      %v1616 = vpop.f32.mrb[0].mxu0
      %v1617 = vadd.f32 %v1544, %v1616
      %v1618 = vpop.f32.mrb[0].mxu0
      %v1619 = vadd.f32 %v1546, %v1618
      %v1620 = vpop.f32.mrb[0].mxu0
      %v1621 = vadd.f32 %v1548, %v1620
      %v1622 = vpop.f32.mrb[0].mxu0
      %v1623 = vadd.f32 %v1550, %v1622
      %1624 = vmatprep.mubr.bf16.mxu0 0
      %1625 = vmatmul.mubr.bf16.gmra.mrb[0].mxu0 %v514
      %v1626 = vpop.f32.mrb[0].mxu0
      %v1627 = vadd.f32 %v1554, %v1626
      %v1628 = vpop.f32.mrb[0].mxu0
      %v1629 = vadd.f32 %v1556, %v1628
      %v1630 = vpop.f32.mrb[0].mxu0
      %v1631 = vadd.f32 %v1558, %v1630
      %v1632 = vpop.f32.mrb[0].mxu0
      %v1633 = vadd.f32 %v1560, %v1632
      %1634 = vmatprep.mubr.bf16.mxu0 0
      %1635 = vmatmul.mubr.bf16.gmra.mrb[0].mxu0 %v523
      %v1636 = vpop.f32.mrb[0].mxu0
      %v1637 = vadd.f32 %v1564, %v1636
      %v1638 = vpop.f32.mrb[0].mxu0
      %v1639 = vadd.f32 %v1566, %v1638
      %v1640 = vpop.f32.mrb[0].mxu0
      %v1641 = vadd.f32 %v1568, %v1640
      %v1642 = vpop.f32.mrb[0].mxu0
      %v1643 = vadd.f32 %v1570, %v1642
      %1644 = vdwg.mxu0
      %vm1645 = vcmp.ge.f32.partialorder %v1607, 0.0
      %vm1646 = vcmp.ge.f32.partialorder %v1609, 0.0
      %vm1647 = vcmp.ge.f32.partialorder %v1611, 0.0
      %vm1648 = vcmp.ge.f32.partialorder %v1613, 0.0
      %vm1649 = vcmp.ge.f32.partialorder %v1617, 0.0
      %vm1650 = vcmp.ge.f32.partialorder %v1619, 0.0
      %vm1651 = vcmp.ge.f32.partialorder %v1621, 0.0
      %vm1652 = vcmp.ge.f32.partialorder %v1623, 0.0
      %vm1653 = vcmp.ge.f32.partialorder %v1627, 0.0
      %vm1654 = vcmp.ge.f32.partialorder %v1629, 0.0
      %vm1655 = vcmp.ge.f32.partialorder %v1631, 0.0
      %vm1656 = vcmp.ge.f32.partialorder %v1633, 0.0
      %vm1657 = vcmp.ge.f32.partialorder %v1637, 0.0
      %vm1658 = vcmp.ge.f32.partialorder %v1639, 0.0
      %vm1659 = vcmp.ge.f32.partialorder %v1641, 0.0
      %vm1660 = vcmp.ge.f32.partialorder %v1643, 0.0
      %v1661 = vmul.f32 %v1607, 0.01
      %v1662 = vmul.f32 %v1609, 0.01
      %v1663 = vmul.f32 %v1611, 0.01
      %v1664 = vmul.f32 %v1613, 0.01
      %v1665 = vmul.f32 %v1617, 0.01
      %v1666 = vmul.f32 %v1619, 0.01
      %v1667 = vmul.f32 %v1621, 0.01
      %v1668 = vmul.f32 %v1623, 0.01
      %v1669 = vmul.f32 %v1627, 0.01
      %v1670 = vmul.f32 %v1629, 0.01
      %v1671 = vmul.f32 %v1631, 0.01
      %v1672 = vmul.f32 %v1633, 0.01
      %v1673 = vmul.f32 %v1637, 0.01
      %v1674 = vmul.f32 %v1639, 0.01
      %v1675 = vmul.f32 %v1641, 0.01
      %v1676 = vmul.f32 %v1643, 0.01
      %v1677 = vsel %vm1645, %v1607, %v1661
      %v1678 = vsel %vm1646, %v1609, %v1662
      %v1679 = vsel %vm1647, %v1611, %v1663
      %v1680 = vsel %vm1648, %v1613, %v1664
      %v1681 = vsel %vm1649, %v1617, %v1665
      %v1682 = vsel %vm1650, %v1619, %v1666
      %v1683 = vsel %vm1651, %v1621, %v1667
      %v1684 = vsel %vm1652, %v1623, %v1668
      %v1685 = vsel %vm1653, %v1627, %v1669
      %v1686 = vsel %vm1654, %v1629, %v1670
      %v1687 = vsel %vm1655, %v1631, %v1671
      %v1688 = vsel %vm1656, %v1633, %v1672
      %v1689 = vsel %vm1657, %v1637, %v1673
      %v1690 = vsel %vm1658, %v1639, %v1674
      %v1691 = vsel %vm1659, %v1641, %v1675
      %v1692 = vsel %vm1660, %v1643, %v1676
      %v1693 = vpack.c.bf16 %v1679, %v1677
      %v1694 = vpack.c.bf16 %v1680, %v1678
      %v1695 = vpack.c.bf16 %v1683, %v1681
      %v1696 = vpack.c.bf16 %v1684, %v1682
      %v1697 = vpack.c.bf16 %v1687, %v1685
      %v1698 = vpack.c.bf16 %v1688, %v1686
      %v1699 = vpack.c.bf16 %v1691, %v1689
      %v1700 = vpack.c.bf16 %v1692, %v1690
      %v1709 = vunpack.c.l.b16 %v1693
      %v1710 = vunpack.c.l.b16 %v1694
      %v1711 = vunpack.c.h.b16 %v1693
      %v1712 = vunpack.c.h.b16 %v1694
      %v1713 = vunpack.c.l.b16 %v1695
      %v1714 = vunpack.c.l.b16 %v1696
      %v1715 = vunpack.c.h.b16 %v1695
      %v1716 = vunpack.c.h.b16 %v1696
      %v1717 = vunpack.c.l.b16 %v1697
      %v1718 = vunpack.c.l.b16 %v1698
      %v1719 = vunpack.c.h.b16 %v1697
      %v1720 = vunpack.c.h.b16 %v1698
      %v1721 = vunpack.c.l.b16 %v1699
      %v1722 = vunpack.c.l.b16 %v1700
      %v1723 = vunpack.c.h.b16 %v1699
      %v1724 = vunpack.c.h.b16 %v1700
      %v1725 = vpack.c.b16 %v1710, %v1709
      %v1726 = vpack.c.b16 %v1712, %v1711
      %v1727 = vpack.c.b16 %v1714, %v1713
      %v1728 = vpack.c.b16 %v1716, %v1715
      %v1729 = vpack.c.b16 %v1718, %v1717
      %v1730 = vpack.c.b16 %v1720, %v1719
      %v1731 = vpack.c.b16 %v1722, %v1721
      %v1732 = vpack.c.b16 %v1724, %v1723
      %1741 = vst [vmem:[%s177] sm:$0xff] %v1725
      %1742 = vst [vmem:[%s177 + $0x8] sm:$0xff] %v1726
      %1743 = vst [vmem:[%s177 + $0x10] sm:$0xff] %v1727
      %1744 = vst [vmem:[%s177 + $0x18] sm:$0xff] %v1728
      %1745 = vst [vmem:[%s177 + $0x20] sm:$0xff] %v1729
      %1746 = vst [vmem:[%s177 + $0x28] sm:$0xff] %v1730
      %1747 = vst [vmem:[%s177 + $0x30] sm:$0xff] %v1731
      %1748 = vst [vmem:[%s177 + $0x38] sm:$0xff] %v1732
      %s1749 = smul.u32 8, %s14
      %p1750 = scmp.lt.s32.totalorder %s1749, 15
      %s1751 = scalar_select %p1750, %s1749, 15
      %s1752 = smul.addr %s1751, 2
      %s1753 = smul.addr %s1752, 4
      %s1754 = scalar_lea.vmem %s3, %s1753
      // Predicated region
      $region33: #{discriminator_forward.4} parent=31 // pred_check
        %p1755 = pneg %p100
      $region34: #{discriminator_forward.4} parent=31 // pred_check_branch
        %1757 = sbr.rel (%p1755) target = $region36
      $region35: #{discriminator_forward.4} parent=31 // pred_region
        %s1758 = smul.u32 8, %s14
      $region36: #{discriminator_forward.4} parent=31 // pred_fallthru
        _
    $region32: #{discriminator_forward.4} parent=5 // pred_fallthru
      _
    %p1759 = scmp.le.s32.totalorder 2, %s9
    // Predicated region
    $region37: #{discriminator_forward.4} parent=5 // pred_check
      %p1760 = pneg %p1759
    $region38: #{discriminator_forward.4} parent=5 // pred_check_branch
      %1762 = sbr.rel (%p1760) target = $region40
    $region39: #{discriminator_forward.4} parent=5 // pred_region
      %s1763 = ssub.s32 %s9, 2
      // Predicated region
      $region41: #{discriminator_forward.4} parent=39 // pred_check
        %p1764 = pneg %p106
      $region42: #{discriminator_forward.4} parent=39 // pred_check_branch
        %1766 = sbr.rel (%p1764) target = $region44
      $region43: #{discriminator_forward.4} parent=39 // pred_region
        %s1767 = smul.u32 8, %s15
        %p1768 = scmp.lt.s32.totalorder %s1767, 15
        %s1769 = scalar_select %p1768, %s1767, 15
        %s1770 = smul.addr %s1769, 2
        %s1771 = smul.addr %s1770, 4
        %s1772 = scalar_lea.vmem %s3, %s1771
      $region44: #{discriminator_forward.4} parent=39 // pred_fallthru
        _
    $region40: #{discriminator_forward.4} parent=5 // pred_fallthru
      _
  $region6: #{discriminator_forward.4} parent=0 // loop_footer
    %s13 = sadd.s32 1, %s9
  $region7: #{discriminator_forward.4} parent=0 // loop_footer_branch
    %8 = sbr.rel target = $region3
  $region8: #{discriminator_forward.4} parent=0 // loop_exit
    _

// kernel: discriminator_forward.5
$region0: #{discriminator_forward.5}
  #allocation0 [shape = 'u32[]', space=smem, size = 0x4, offset = 0x4, fixed_abs, tag = 'smem constant byte address 0x4 - core index']
  #allocation1 [shape = 'u32[144,128]{1,0:T(1,128)}', space=vmem, size = 0x12000, scoped, tag = 'internal scratch']
  %s0 = inlined_call_operand.vmem [shape: bf16[32,2304], index: 0, kind: input, shape index: {}]
  %s1 = inlined_call_operand.vmem [shape: bf16[2304,512], index: 1, kind: input, shape index: {}]
  %s2 = inlined_call_operand.vmem [shape: f32[1,512], index: 2, kind: input, shape index: {}]
  %s3 = inlined_call_operand.vmem [shape: f32[16,512], index: 3, kind: input, shape index: {}]
  %s4 = inlined_call_operand.vmem [shape: f32[32,1], index: 4, kind: output, shape index: {}]
  %s5 = sld [smem:[#allocation0]]
  $region49: #{discriminator_forward.5} parent=0
    _
  %s7 = ssub.s32 1, %s5
  %s8 = scalar_select 0, %s7, %s5
  loop: start=0, step=1, limit=4
  $region2: #{discriminator_forward.5} parent=0 // loop_pre_header
    _
  $region3: #{discriminator_forward.5} parent=0 // loop_header
    %s10 = sphi 0, %s14
    %p11 = scmp.ge.s32.totalorder %s10, 4
    %s20 = sphi 0, %s22
    %s23 = sphi 0, %s20
    %s24 = sphi 0, %s23
    %s40 = sphi 0, %s24
    %s44 = sphi 0, %s44
    %s46 = sphi 0, %s44
    %s47 = sphi 0, %s46
    %s61 = sphi 0, %s47
    %s65 = sphi 0, %s65
    %s67 = sphi 0, %s65
    %s68 = sphi 0, %s67
    %s82 = sphi 0, %s68
    %s86 = sphi 0, %s86
    %s88 = sphi 0, %s86
    %s89 = sphi 0, %s88
    %s103 = sphi 0, %s89
    %s109 = sphi 0, %s111
    %s112 = sphi 0, %s109
    %s113 = sphi 0, %s112
    %s129 = sphi 0, %s113
  $region4: #{discriminator_forward.5} parent=0 // loop_header_branch
    %13 = sbr.rel (%p11) target = $region8
  $region5: #{discriminator_forward.5} parent=0 // loop_body
    %s15 = ssub.s32 %s10, 1
    %s16 = ssub.s32 %s10, 2
    %s17 = sadd.s32 %s10, 1
    %s18 = ssub.s32 %s10, %s17
    %p19 = scmp.eq.s32.totalorder %s18, 0
    %s21 = sadd.s32 %s20, 1
    %s22 = scalar_select %p19, %s20, %s21
    %p25 = pneg %p19
    %p26 = scmp.eq.s32.totalorder %s10, 1
    %p27 = por %p25, %p26
    %p28 = scmp.ne.s32.totalorder %s20, %s23
    %p29 = scmp.eq.s32.totalorder %s10, 0
    %p30 = por %p28, %p29
    %p31 = scmp.ne.s32.totalorder %s20, %s23
    %p32 = scmp.eq.s32.totalorder %s15, 1
    %p33 = por %p31, %p32
    %p34 = scmp.ne.s32.totalorder %s23, %s24
    %p35 = scmp.eq.s32.totalorder %s15, 0
    %p36 = por %p34, %p35
    %p37 = scmp.ne.s32.totalorder %s23, %s24
    %p38 = scmp.eq.s32.totalorder %s16, 1
    %p39 = por %p37, %p38
    %p41 = scmp.ne.s32.totalorder %s24, %s40
    %p42 = scmp.eq.s32.totalorder %s16, 0
    %p43 = por %p41, %p42
    %s45 = sadd.s32 %s44, 1
    %p48 = scmp.eq.s32.totalorder %s10, 1
    %p49 = scmp.ne.s32.totalorder %s44, %s46
    %p50 = scmp.eq.s32.totalorder %s10, 0
    %p51 = por %p49, %p50
    %p52 = scmp.ne.s32.totalorder %s44, %s46
    %p53 = scmp.eq.s32.totalorder %s15, 1
    %p54 = por %p52, %p53
    %p55 = scmp.ne.s32.totalorder %s46, %s47
    %p56 = scmp.eq.s32.totalorder %s15, 0
    %p57 = por %p55, %p56
    %p58 = scmp.ne.s32.totalorder %s46, %s47
    %p59 = scmp.eq.s32.totalorder %s16, 1
    %p60 = por %p58, %p59
    %p62 = scmp.ne.s32.totalorder %s47, %s61
    %p63 = scmp.eq.s32.totalorder %s16, 0
    %p64 = por %p62, %p63
    %s66 = sadd.s32 %s65, 1
    %p69 = scmp.eq.s32.totalorder %s10, 1
    %p70 = scmp.ne.s32.totalorder %s65, %s67
    %p71 = scmp.eq.s32.totalorder %s10, 0
    %p72 = por %p70, %p71
    %p73 = scmp.ne.s32.totalorder %s65, %s67
    %p74 = scmp.eq.s32.totalorder %s15, 1
    %p75 = por %p73, %p74
    %p76 = scmp.ne.s32.totalorder %s67, %s68
    %p77 = scmp.eq.s32.totalorder %s15, 0
    %p78 = por %p76, %p77
    %p79 = scmp.ne.s32.totalorder %s67, %s68
    %p80 = scmp.eq.s32.totalorder %s16, 1
    %p81 = por %p79, %p80
    %p83 = scmp.ne.s32.totalorder %s68, %s82
    %p84 = scmp.eq.s32.totalorder %s16, 0
    %p85 = por %p83, %p84
    %s87 = sadd.s32 %s86, 1
    %p90 = scmp.eq.s32.totalorder %s10, 1
    %p91 = scmp.ne.s32.totalorder %s86, %s88
    %p92 = scmp.eq.s32.totalorder %s10, 0
    %p93 = por %p91, %p92
    %p94 = scmp.ne.s32.totalorder %s86, %s88
    %p95 = scmp.eq.s32.totalorder %s15, 1
    %p96 = por %p94, %p95
    %p97 = scmp.ne.s32.totalorder %s88, %s89
    %p98 = scmp.eq.s32.totalorder %s15, 0
    %p99 = por %p97, %p98
    %p100 = scmp.ne.s32.totalorder %s88, %s89
    %p101 = scmp.eq.s32.totalorder %s16, 1
    %p102 = por %p100, %p101
    %p104 = scmp.ne.s32.totalorder %s89, %s103
    %p105 = scmp.eq.s32.totalorder %s16, 0
    %p106 = por %p104, %p105
    %s107 = ssub.s32 %s10, %s17
    %p108 = scmp.eq.s32.totalorder %s107, 0
    %s110 = sadd.s32 %s109, 1
    %s111 = scalar_select %p108, %s109, %s110
    %p114 = pneg %p108
    %p115 = scmp.eq.s32.totalorder %s10, 1
    %p116 = por %p114, %p115
    %p117 = scmp.ne.s32.totalorder %s109, %s112
    %p118 = scmp.eq.s32.totalorder %s10, 0
    %p119 = por %p117, %p118
    %p120 = scmp.ne.s32.totalorder %s109, %s112
    %p121 = scmp.eq.s32.totalorder %s15, 1
    %p122 = por %p120, %p121
    %p123 = scmp.ne.s32.totalorder %s112, %s113
    %p124 = scmp.eq.s32.totalorder %s15, 0
    %p125 = por %p123, %p124
    %p126 = scmp.ne.s32.totalorder %s112, %s113
    %p127 = scmp.eq.s32.totalorder %s16, 1
    %p128 = por %p126, %p127
    %p130 = scmp.ne.s32.totalorder %s113, %s129
    %p131 = scmp.eq.s32.totalorder %s16, 0
    %p132 = por %p130, %p131
    %p133 = scmp.le.s32.totalorder 1, %s10
    %p134 = scmp.lt.s32.totalorder %s10, 3
    %p135 = pnand %p133, %p134
    %p136 = pneg %p135
    // Predicated region
    $region9: #{discriminator_forward.5} parent=5 // pred_check
      _
    $region10: #{discriminator_forward.5} parent=5 // pred_check_branch
      %138 = sbr.rel (%p135) target = $region12
    $region11: #{discriminator_forward.5} parent=5 // pred_region
      %s139 = ssub.s32 %s10, 1
      // Predicated region
      $region13: #{discriminator_forward.5} parent=11 // pred_check
        %p140 = pneg %p57
      $region14: #{discriminator_forward.5} parent=11 // pred_check_branch
        %142 = sbr.rel (%p140) target = $region16
      $region15: #{discriminator_forward.5} parent=11 // pred_region
        _
      $region16: #{discriminator_forward.5} parent=11 // pred_fallthru
        _
      // Predicated region
      $region17: #{discriminator_forward.5} parent=11 // pred_check
        %p143 = pneg %p78
      $region18: #{discriminator_forward.5} parent=11 // pred_check_branch
        %145 = sbr.rel (%p143) target = $region20
      $region19: #{discriminator_forward.5} parent=11 // pred_region
        _
      $region20: #{discriminator_forward.5} parent=11 // pred_fallthru
        _
      // Predicated region
      $region21: #{discriminator_forward.5} parent=11 // pred_check
        %p146 = pneg %p99
      $region22: #{discriminator_forward.5} parent=11 // pred_check_branch
        %148 = sbr.rel (%p146) target = $region24
      $region23: #{discriminator_forward.5} parent=11 // pred_region
        _
      $region24: #{discriminator_forward.5} parent=11 // pred_fallthru
        _
    $region12: #{discriminator_forward.5} parent=5 // pred_fallthru
      _
    %p149 = scmp.lt.s32.totalorder %s10, 2
    // Predicated region
    $region25: #{discriminator_forward.5} parent=5 // pred_check
      %p150 = pneg %p149
    $region26: #{discriminator_forward.5} parent=5 // pred_check_branch
      %152 = sbr.rel (%p150) target = $region28
    $region27: #{discriminator_forward.5} parent=5 // pred_region
      // Predicated region
      $region29: #{discriminator_forward.5} parent=27 // pred_check
        %p153 = pneg %p30
      $region30: #{discriminator_forward.5} parent=27 // pred_check_branch
        %155 = sbr.rel (%p153) target = $region32
      $region31: #{discriminator_forward.5} parent=27 // pred_region
        %s156 = smul.u32 2, %s10
        %p157 = scmp.lt.s32.totalorder %s156, 3
        %s158 = scalar_select %p157, %s156, 3
        %s159 = smul.addr %s158, 18
        %s160 = smul.addr %s159, 4
        %s161 = scalar_lea.vmem %s0, %s160
        %s162 = smul.u32 2, %s10
      $region32: #{discriminator_forward.5} parent=27 // pred_fallthru
        _
    $region28: #{discriminator_forward.5} parent=5 // pred_fallthru
      _
    %p163 = scmp.le.s32.totalorder 1, %s10
    %p164 = scmp.lt.s32.totalorder %s10, 3
    %p165 = pnand %p163, %p164
    %p166 = pneg %p165
    // Predicated region
    $region33: #{discriminator_forward.5} parent=5 // pred_check
      _
    $region34: #{discriminator_forward.5} parent=5 // pred_check_branch
      %168 = sbr.rel (%p165) target = $region36
    $region35: #{discriminator_forward.5} parent=5 // pred_region
      %s169 = ssub.s32 %s10, 1
      %s170 = smul.u32 2, %s15
      %p171 = scmp.lt.s32.totalorder %s170, 3
      %s172 = scalar_select %p171, %s170, 3
      %s173 = smul.addr %s172, 18
      %s174 = smul.addr %s173, 4
      %s175 = scalar_lea.vmem %s0, %s174
      %p176 = pneg %p36
      %p177 = pneg %p33
      %p178 = pneg %p57
      %p179 = pneg %p54
      %p180 = pneg %p78
      %p181 = pneg %p75
      %p182 = pneg %p99
      %p183 = pneg %p96
      %p184 = pneg %p125
      %p185 = pneg %p122
      %s186 = smul.u32 2, %s15
      %p187 = scmp.lt.s32.totalorder %s186, 3
      %s188 = scalar_select %p187, %s186, 3
      %s189 = smul.addr %s188, 8
      %s190 = scalar_lea.vmem %s4, %s189
      %s191 = smul.u32 2, %s15
      %p192 = scmp.lt.s32.totalorder %s191, 3
      %s193 = scalar_select %p192, %s191, 3
      %s194 = smul.addr %s193, 18
      %s195 = smul.addr %s194, 4
      %s196 = scalar_lea.vmem %s0, %s195
      %s197 = smul.u32 2, %s15
      %s198 = smul.u32 2, %s15
      %p199 = scmp.lt.s32.totalorder %s198, 3
      %s200 = scalar_select %p199, %s198, 3
      %s201 = smul.addr %s200, 8
      %s202 = scalar_lea.vmem %s4, %s201
      %s203 = smul.u32 2, %s15
      %v204 = vld [vmem:[%s196] sm:$0xff]
      %v205 = vld [vmem:[%s196 + $0x8] sm:$0xff]
      %v206 = vld [vmem:[%s196 + $0x10] sm:$0xff]
      %v207 = vld [vmem:[%s196 + $0x18] sm:$0xff]
      %v208 = vld [vmem:[%s196 + $0x20] sm:$0xff]
      %v209 = vld [vmem:[%s196 + $0x28] sm:$0xff]
      %v210 = vld [vmem:[%s196 + $0x30] sm:$0xff]
      %v211 = vld [vmem:[%s196 + $0x38] sm:$0xff]
      %v212 = vld [vmem:[%s196 + $0x40] sm:$0xff]
      %v213 = vld [vmem:[%s196 + $0x48] sm:$0xff]
      %v214 = vld [vmem:[%s196 + $0x50] sm:$0xff]
      %v215 = vld [vmem:[%s196 + $0x58] sm:$0xff]
      %v216 = vld [vmem:[%s196 + $0x60] sm:$0xff]
      %v217 = vld [vmem:[%s196 + $0x68] sm:$0xff]
      %v218 = vld [vmem:[%s196 + $0x70] sm:$0xff]
      %v219 = vld [vmem:[%s196 + $0x78] sm:$0xff]
      %v220 = vld [vmem:[%s196 + $0x80] sm:$0xff]
      %v221 = vld [vmem:[%s196 + $0x88] sm:$0xff]
      %v222 = vld [vmem:[%s1] sm:$0xff]
      %v223 = vld [vmem:[%s1 + $0x8] sm:$0xff]
      %v224 = vld [vmem:[%s1 + $0x10] sm:$0xff]
      %v225 = vld [vmem:[%s1 + $0x18] sm:$0xff]
      %v226 = vld [vmem:[%s1 + $0x20] sm:$0xff]
      %v227 = vld [vmem:[%s1 + $0x28] sm:$0xff]
      %v228 = vld [vmem:[%s1 + $0x30] sm:$0xff]
      %v229 = vld [vmem:[%s1 + $0x38] sm:$0xff]
      %v230 = vld [vmem:[%s1 + $0x40] sm:$0xff]
      %v231 = vld [vmem:[%s1 + $0x48] sm:$0xff]
      %v232 = vld [vmem:[%s1 + $0x50] sm:$0xff]
      %v233 = vld [vmem:[%s1 + $0x58] sm:$0xff]
      %v234 = vld [vmem:[%s1 + $0x60] sm:$0xff]
      %v235 = vld [vmem:[%s1 + $0x68] sm:$0xff]
      %v236 = vld [vmem:[%s1 + $0x70] sm:$0xff]
      %v237 = vld [vmem:[%s1 + $0x78] sm:$0xff]
      %v238 = vld [vmem:[%s1 + $0x80] sm:$0xff]
      %v239 = vld [vmem:[%s1 + $0x88] sm:$0xff]
      %v240 = vld [vmem:[%s1 + $0x90] sm:$0xff]
      %v241 = vld [vmem:[%s1 + $0x98] sm:$0xff]
      %v242 = vld [vmem:[%s1 + $0xa0] sm:$0xff]
      %v243 = vld [vmem:[%s1 + $0xa8] sm:$0xff]
      %v244 = vld [vmem:[%s1 + $0xb0] sm:$0xff]
      %v245 = vld [vmem:[%s1 + $0xb8] sm:$0xff]
      %v246 = vld [vmem:[%s1 + $0xc0] sm:$0xff]
      %v247 = vld [vmem:[%s1 + $0xc8] sm:$0xff]
      %v248 = vld [vmem:[%s1 + $0xd0] sm:$0xff]
      %v249 = vld [vmem:[%s1 + $0xd8] sm:$0xff]
      %v250 = vld [vmem:[%s1 + $0xe0] sm:$0xff]
      %v251 = vld [vmem:[%s1 + $0xe8] sm:$0xff]
      %v252 = vld [vmem:[%s1 + $0xf0] sm:$0xff]
      %v253 = vld [vmem:[%s1 + $0xf8] sm:$0xff]
      %v254 = vld [vmem:[%s1 + $0x100] sm:$0xff]
      %v255 = vld [vmem:[%s1 + $0x108] sm:$0xff]
      %v256 = vld [vmem:[%s1 + $0x110] sm:$0xff]
      %v257 = vld [vmem:[%s1 + $0x118] sm:$0xff]
      %v258 = vld [vmem:[%s1 + $0x120] sm:$0xff]
      %v259 = vld [vmem:[%s1 + $0x128] sm:$0xff]
      %v260 = vld [vmem:[%s1 + $0x130] sm:$0xff]
      %v261 = vld [vmem:[%s1 + $0x138] sm:$0xff]
      %v262 = vld [vmem:[%s1 + $0x140] sm:$0xff]
      %v263 = vld [vmem:[%s1 + $0x148] sm:$0xff]
      %v264 = vld [vmem:[%s1 + $0x150] sm:$0xff]
      %v265 = vld [vmem:[%s1 + $0x158] sm:$0xff]
      %v266 = vld [vmem:[%s1 + $0x160] sm:$0xff]
      %v267 = vld [vmem:[%s1 + $0x168] sm:$0xff]
      %v268 = vld [vmem:[%s1 + $0x170] sm:$0xff]
      %v269 = vld [vmem:[%s1 + $0x178] sm:$0xff]
      %v270 = vld [vmem:[%s1 + $0x180] sm:$0xff]
      %v271 = vld [vmem:[%s1 + $0x188] sm:$0xff]
      %v272 = vld [vmem:[%s1 + $0x190] sm:$0xff]
      %v273 = vld [vmem:[%s1 + $0x198] sm:$0xff]
      %v274 = vld [vmem:[%s1 + $0x1a0] sm:$0xff]
      %v275 = vld [vmem:[%s1 + $0x1a8] sm:$0xff]
      %v276 = vld [vmem:[%s1 + $0x1b0] sm:$0xff]
      %v277 = vld [vmem:[%s1 + $0x1b8] sm:$0xff]
      %v278 = vld [vmem:[%s1 + $0x1c0] sm:$0xff]
      %v279 = vld [vmem:[%s1 + $0x1c8] sm:$0xff]
      %v280 = vld [vmem:[%s1 + $0x1d0] sm:$0xff]
      %v281 = vld [vmem:[%s1 + $0x1d8] sm:$0xff]
      %v282 = vld [vmem:[%s1 + $0x1e0] sm:$0xff]
      %v283 = vld [vmem:[%s1 + $0x1e8] sm:$0xff]
      %v284 = vld [vmem:[%s1 + $0x1f0] sm:$0xff]
      %v285 = vld [vmem:[%s1 + $0x1f8] sm:$0xff]
      %v286 = vld [vmem:[%s1 + $0x200] sm:$0xff]
      %v287 = vld [vmem:[%s1 + $0x208] sm:$0xff]
      %v288 = vld [vmem:[%s1 + $0x210] sm:$0xff]
      %v289 = vld [vmem:[%s1 + $0x218] sm:$0xff]
      %v290 = vld [vmem:[%s1 + $0x220] sm:$0xff]
      %v291 = vld [vmem:[%s1 + $0x228] sm:$0xff]
      %v292 = vld [vmem:[%s1 + $0x230] sm:$0xff]
      %v293 = vld [vmem:[%s1 + $0x238] sm:$0xff]
      %v294 = vld [vmem:[%s1 + $0x240] sm:$0xff]
      %v295 = vld [vmem:[%s1 + $0x248] sm:$0xff]
      %v296 = vld [vmem:[%s1 + $0x250] sm:$0xff]
      %v297 = vld [vmem:[%s1 + $0x258] sm:$0xff]
      %v298 = vld [vmem:[%s1 + $0x260] sm:$0xff]
      %v299 = vld [vmem:[%s1 + $0x268] sm:$0xff]
      %v300 = vld [vmem:[%s1 + $0x270] sm:$0xff]
      %v301 = vld [vmem:[%s1 + $0x278] sm:$0xff]
      %v302 = vld [vmem:[%s1 + $0x280] sm:$0xff]
      %v303 = vld [vmem:[%s1 + $0x288] sm:$0xff]
      %v304 = vld [vmem:[%s1 + $0x290] sm:$0xff]
      %v305 = vld [vmem:[%s1 + $0x298] sm:$0xff]
      %v306 = vld [vmem:[%s1 + $0x2a0] sm:$0xff]
      %v307 = vld [vmem:[%s1 + $0x2a8] sm:$0xff]
      %v308 = vld [vmem:[%s1 + $0x2b0] sm:$0xff]
      %v309 = vld [vmem:[%s1 + $0x2b8] sm:$0xff]
      %v310 = vld [vmem:[%s1 + $0x2c0] sm:$0xff]
      %v311 = vld [vmem:[%s1 + $0x2c8] sm:$0xff]
      %v312 = vld [vmem:[%s1 + $0x2d0] sm:$0xff]
      %v313 = vld [vmem:[%s1 + $0x2d8] sm:$0xff]
      %v314 = vld [vmem:[%s1 + $0x2e0] sm:$0xff]
      %v315 = vld [vmem:[%s1 + $0x2e8] sm:$0xff]
      %v316 = vld [vmem:[%s1 + $0x2f0] sm:$0xff]
      %v317 = vld [vmem:[%s1 + $0x2f8] sm:$0xff]
      %v318 = vld [vmem:[%s1 + $0x300] sm:$0xff]
      %v319 = vld [vmem:[%s1 + $0x308] sm:$0xff]
      %v320 = vld [vmem:[%s1 + $0x310] sm:$0xff]
      %v321 = vld [vmem:[%s1 + $0x318] sm:$0xff]
      %v322 = vld [vmem:[%s1 + $0x320] sm:$0xff]
      %v323 = vld [vmem:[%s1 + $0x328] sm:$0xff]
      %v324 = vld [vmem:[%s1 + $0x330] sm:$0xff]
      %v325 = vld [vmem:[%s1 + $0x338] sm:$0xff]
      %v326 = vld [vmem:[%s1 + $0x340] sm:$0xff]
      %v327 = vld [vmem:[%s1 + $0x348] sm:$0xff]
      %v328 = vld [vmem:[%s1 + $0x350] sm:$0xff]
      %v329 = vld [vmem:[%s1 + $0x358] sm:$0xff]
      %v330 = vld [vmem:[%s1 + $0x360] sm:$0xff]
      %v331 = vld [vmem:[%s1 + $0x368] sm:$0xff]
      %v332 = vld [vmem:[%s1 + $0x370] sm:$0xff]
      %v333 = vld [vmem:[%s1 + $0x378] sm:$0xff]
      %v334 = vld [vmem:[%s1 + $0x380] sm:$0xff]
      %v335 = vld [vmem:[%s1 + $0x388] sm:$0xff]
      %v336 = vld [vmem:[%s1 + $0x390] sm:$0xff]
      %v337 = vld [vmem:[%s1 + $0x398] sm:$0xff]
      %v338 = vld [vmem:[%s1 + $0x3a0] sm:$0xff]
      %v339 = vld [vmem:[%s1 + $0x3a8] sm:$0xff]
      %v340 = vld [vmem:[%s1 + $0x3b0] sm:$0xff]
      %v341 = vld [vmem:[%s1 + $0x3b8] sm:$0xff]
      %v342 = vld [vmem:[%s1 + $0x3c0] sm:$0xff]
      %v343 = vld [vmem:[%s1 + $0x3c8] sm:$0xff]
      %v344 = vld [vmem:[%s1 + $0x3d0] sm:$0xff]
      %v345 = vld [vmem:[%s1 + $0x3d8] sm:$0xff]
      %v346 = vld [vmem:[%s1 + $0x3e0] sm:$0xff]
      %v347 = vld [vmem:[%s1 + $0x3e8] sm:$0xff]
      %v348 = vld [vmem:[%s1 + $0x3f0] sm:$0xff]
      %v349 = vld [vmem:[%s1 + $0x3f8] sm:$0xff]
      %v350 = vld [vmem:[%s1 + $0x400] sm:$0xff]
      %v351 = vld [vmem:[%s1 + $0x408] sm:$0xff]
      %v352 = vld [vmem:[%s1 + $0x410] sm:$0xff]
      %v353 = vld [vmem:[%s1 + $0x418] sm:$0xff]
      %v354 = vld [vmem:[%s1 + $0x420] sm:$0xff]
      %v355 = vld [vmem:[%s1 + $0x428] sm:$0xff]
      %v356 = vld [vmem:[%s1 + $0x430] sm:$0xff]
      %v357 = vld [vmem:[%s1 + $0x438] sm:$0xff]
      %v358 = vld [vmem:[%s1 + $0x440] sm:$0xff]
      %v359 = vld [vmem:[%s1 + $0x448] sm:$0xff]
      %v360 = vld [vmem:[%s1 + $0x450] sm:$0xff]
      %v361 = vld [vmem:[%s1 + $0x458] sm:$0xff]
      %v362 = vld [vmem:[%s1 + $0x460] sm:$0xff]
      %v363 = vld [vmem:[%s1 + $0x468] sm:$0xff]
      %v364 = vld [vmem:[%s1 + $0x470] sm:$0xff]
      %v365 = vld [vmem:[%s1 + $0x478] sm:$0xff]
      %v366 = vld [vmem:[%s1 + $0x480] sm:$0xff]
      %v367 = vld [vmem:[%s1 + $0x488] sm:$0xff]
      %v368 = vld [vmem:[%s1 + $0x490] sm:$0xff]
      %v369 = vld [vmem:[%s1 + $0x498] sm:$0xff]
      %v370 = vld [vmem:[%s1 + $0x4a0] sm:$0xff]
      %v371 = vld [vmem:[%s1 + $0x4a8] sm:$0xff]
      %v372 = vld [vmem:[%s1 + $0x4b0] sm:$0xff]
      %v373 = vld [vmem:[%s1 + $0x4b8] sm:$0xff]
      %v374 = vld [vmem:[%s1 + $0x4c0] sm:$0xff]
      %v375 = vld [vmem:[%s1 + $0x4c8] sm:$0xff]
      %v376 = vld [vmem:[%s1 + $0x4d0] sm:$0xff]
      %v377 = vld [vmem:[%s1 + $0x4d8] sm:$0xff]
      %v378 = vld [vmem:[%s1 + $0x4e0] sm:$0xff]
      %v379 = vld [vmem:[%s1 + $0x4e8] sm:$0xff]
      %v380 = vld [vmem:[%s1 + $0x4f0] sm:$0xff]
      %v381 = vld [vmem:[%s1 + $0x4f8] sm:$0xff]
      %v382 = vld [vmem:[%s1 + $0x500] sm:$0xff]
      %v383 = vld [vmem:[%s1 + $0x508] sm:$0xff]
      %v384 = vld [vmem:[%s1 + $0x510] sm:$0xff]
      %v385 = vld [vmem:[%s1 + $0x518] sm:$0xff]
      %v386 = vld [vmem:[%s1 + $0x520] sm:$0xff]
      %v387 = vld [vmem:[%s1 + $0x528] sm:$0xff]
      %v388 = vld [vmem:[%s1 + $0x530] sm:$0xff]
      %v389 = vld [vmem:[%s1 + $0x538] sm:$0xff]
      %v390 = vld [vmem:[%s1 + $0x540] sm:$0xff]
      %v391 = vld [vmem:[%s1 + $0x548] sm:$0xff]
      %v392 = vld [vmem:[%s1 + $0x550] sm:$0xff]
      %v393 = vld [vmem:[%s1 + $0x558] sm:$0xff]
      %v394 = vld [vmem:[%s1 + $0x560] sm:$0xff]
      %v395 = vld [vmem:[%s1 + $0x568] sm:$0xff]
      %v396 = vld [vmem:[%s1 + $0x570] sm:$0xff]
      %v397 = vld [vmem:[%s1 + $0x578] sm:$0xff]
      %v398 = vld [vmem:[%s1 + $0x580] sm:$0xff]
      %v399 = vld [vmem:[%s1 + $0x588] sm:$0xff]
      %v400 = vld [vmem:[%s1 + $0x590] sm:$0xff]
      %v401 = vld [vmem:[%s1 + $0x598] sm:$0xff]
      %v402 = vld [vmem:[%s1 + $0x5a0] sm:$0xff]
      %v403 = vld [vmem:[%s1 + $0x5a8] sm:$0xff]
      %v404 = vld [vmem:[%s1 + $0x5b0] sm:$0xff]
      %v405 = vld [vmem:[%s1 + $0x5b8] sm:$0xff]
      %v406 = vld [vmem:[%s1 + $0x5c0] sm:$0xff]
      %v407 = vld [vmem:[%s1 + $0x5c8] sm:$0xff]
      %v408 = vld [vmem:[%s1 + $0x5d0] sm:$0xff]
      %v409 = vld [vmem:[%s1 + $0x5d8] sm:$0xff]
      %v410 = vld [vmem:[%s1 + $0x5e0] sm:$0xff]
      %v411 = vld [vmem:[%s1 + $0x5e8] sm:$0xff]
      %v412 = vld [vmem:[%s1 + $0x5f0] sm:$0xff]
      %v413 = vld [vmem:[%s1 + $0x5f8] sm:$0xff]
      %v414 = vld [vmem:[%s1 + $0x600] sm:$0xff]
      %v415 = vld [vmem:[%s1 + $0x608] sm:$0xff]
      %v416 = vld [vmem:[%s1 + $0x610] sm:$0xff]
      %v417 = vld [vmem:[%s1 + $0x618] sm:$0xff]
      %v418 = vld [vmem:[%s1 + $0x620] sm:$0xff]
      %v419 = vld [vmem:[%s1 + $0x628] sm:$0xff]
      %v420 = vld [vmem:[%s1 + $0x630] sm:$0xff]
      %v421 = vld [vmem:[%s1 + $0x638] sm:$0xff]
      %v422 = vld [vmem:[%s1 + $0x640] sm:$0xff]
      %v423 = vld [vmem:[%s1 + $0x648] sm:$0xff]
      %v424 = vld [vmem:[%s1 + $0x650] sm:$0xff]
      %v425 = vld [vmem:[%s1 + $0x658] sm:$0xff]
      %v426 = vld [vmem:[%s1 + $0x660] sm:$0xff]
      %v427 = vld [vmem:[%s1 + $0x668] sm:$0xff]
      %v428 = vld [vmem:[%s1 + $0x670] sm:$0xff]
      %v429 = vld [vmem:[%s1 + $0x678] sm:$0xff]
      %v430 = vld [vmem:[%s1 + $0x680] sm:$0xff]
      %v431 = vld [vmem:[%s1 + $0x688] sm:$0xff]
      %v432 = vld [vmem:[%s1 + $0x690] sm:$0xff]
      %v433 = vld [vmem:[%s1 + $0x698] sm:$0xff]
      %v434 = vld [vmem:[%s1 + $0x6a0] sm:$0xff]
      %v435 = vld [vmem:[%s1 + $0x6a8] sm:$0xff]
      %v436 = vld [vmem:[%s1 + $0x6b0] sm:$0xff]
      %v437 = vld [vmem:[%s1 + $0x6b8] sm:$0xff]
      %v438 = vld [vmem:[%s1 + $0x6c0] sm:$0xff]
      %v439 = vld [vmem:[%s1 + $0x6c8] sm:$0xff]
      %v440 = vld [vmem:[%s1 + $0x6d0] sm:$0xff]
      %v441 = vld [vmem:[%s1 + $0x6d8] sm:$0xff]
      %v442 = vld [vmem:[%s1 + $0x6e0] sm:$0xff]
      %v443 = vld [vmem:[%s1 + $0x6e8] sm:$0xff]
      %v444 = vld [vmem:[%s1 + $0x6f0] sm:$0xff]
      %v445 = vld [vmem:[%s1 + $0x6f8] sm:$0xff]
      %v446 = vld [vmem:[%s1 + $0x700] sm:$0xff]
      %v447 = vld [vmem:[%s1 + $0x708] sm:$0xff]
      %v448 = vld [vmem:[%s1 + $0x710] sm:$0xff]
      %v449 = vld [vmem:[%s1 + $0x718] sm:$0xff]
      %v450 = vld [vmem:[%s1 + $0x720] sm:$0xff]
      %v451 = vld [vmem:[%s1 + $0x728] sm:$0xff]
      %v452 = vld [vmem:[%s1 + $0x730] sm:$0xff]
      %v453 = vld [vmem:[%s1 + $0x738] sm:$0xff]
      %v454 = vld [vmem:[%s1 + $0x740] sm:$0xff]
      %v455 = vld [vmem:[%s1 + $0x748] sm:$0xff]
      %v456 = vld [vmem:[%s1 + $0x750] sm:$0xff]
      %v457 = vld [vmem:[%s1 + $0x758] sm:$0xff]
      %v458 = vld [vmem:[%s1 + $0x760] sm:$0xff]
      %v459 = vld [vmem:[%s1 + $0x768] sm:$0xff]
      %v460 = vld [vmem:[%s1 + $0x770] sm:$0xff]
      %v461 = vld [vmem:[%s1 + $0x778] sm:$0xff]
      %v462 = vld [vmem:[%s1 + $0x780] sm:$0xff]
      %v463 = vld [vmem:[%s1 + $0x788] sm:$0xff]
      %v464 = vld [vmem:[%s1 + $0x790] sm:$0xff]
      %v465 = vld [vmem:[%s1 + $0x798] sm:$0xff]
      %v466 = vld [vmem:[%s1 + $0x7a0] sm:$0xff]
      %v467 = vld [vmem:[%s1 + $0x7a8] sm:$0xff]
      %v468 = vld [vmem:[%s1 + $0x7b0] sm:$0xff]
      %v469 = vld [vmem:[%s1 + $0x7b8] sm:$0xff]
      %v470 = vld [vmem:[%s1 + $0x7c0] sm:$0xff]
      %v471 = vld [vmem:[%s1 + $0x7c8] sm:$0xff]
      %v472 = vld [vmem:[%s1 + $0x7d0] sm:$0xff]
      %v473 = vld [vmem:[%s1 + $0x7d8] sm:$0xff]
      %v474 = vld [vmem:[%s1 + $0x7e0] sm:$0xff]
      %v475 = vld [vmem:[%s1 + $0x7e8] sm:$0xff]
      %v476 = vld [vmem:[%s1 + $0x7f0] sm:$0xff]
      %v477 = vld [vmem:[%s1 + $0x7f8] sm:$0xff]
      %v478 = vld [vmem:[%s1 + $0x800] sm:$0xff]
      %v479 = vld [vmem:[%s1 + $0x808] sm:$0xff]
      %v480 = vld [vmem:[%s1 + $0x810] sm:$0xff]
      %v481 = vld [vmem:[%s1 + $0x818] sm:$0xff]
      %v482 = vld [vmem:[%s1 + $0x820] sm:$0xff]
      %v483 = vld [vmem:[%s1 + $0x828] sm:$0xff]
      %v484 = vld [vmem:[%s1 + $0x830] sm:$0xff]
      %v485 = vld [vmem:[%s1 + $0x838] sm:$0xff]
      %v486 = vld [vmem:[%s1 + $0x840] sm:$0xff]
      %v487 = vld [vmem:[%s1 + $0x848] sm:$0xff]
      %v488 = vld [vmem:[%s1 + $0x850] sm:$0xff]
      %v489 = vld [vmem:[%s1 + $0x858] sm:$0xff]
      %v490 = vld [vmem:[%s1 + $0x860] sm:$0xff]
      %v491 = vld [vmem:[%s1 + $0x868] sm:$0xff]
      %v492 = vld [vmem:[%s1 + $0x870] sm:$0xff]
      %v493 = vld [vmem:[%s1 + $0x878] sm:$0xff]
      %v494 = vld [vmem:[%s1 + $0x880] sm:$0xff]
      %v495 = vld [vmem:[%s1 + $0x888] sm:$0xff]
      %v496 = vld [vmem:[%s1 + $0x890] sm:$0xff]
      %v497 = vld [vmem:[%s1 + $0x898] sm:$0xff]
      %v498 = vld [vmem:[%s1 + $0x8a0] sm:$0xff]
      %v499 = vld [vmem:[%s1 + $0x8a8] sm:$0xff]
      %v500 = vld [vmem:[%s1 + $0x8b0] sm:$0xff]
      %v501 = vld [vmem:[%s1 + $0x8b8] sm:$0xff]
      %v502 = vld [vmem:[%s1 + $0x8c0] sm:$0xff]
      %v503 = vld [vmem:[%s1 + $0x8c8] sm:$0xff]
      %v504 = vld [vmem:[%s1 + $0x8d0] sm:$0xff]
      %v505 = vld [vmem:[%s1 + $0x8d8] sm:$0xff]
      %v506 = vld [vmem:[%s1 + $0x8e0] sm:$0xff]
      %v507 = vld [vmem:[%s1 + $0x8e8] sm:$0xff]
      %v508 = vld [vmem:[%s1 + $0x8f0] sm:$0xff]
      %v509 = vld [vmem:[%s1 + $0x8f8] sm:$0xff]
      %v510 = vld [vmem:[%s1 + $0x900] sm:$0xff]
      %v511 = vld [vmem:[%s1 + $0x908] sm:$0xff]
      %v512 = vld [vmem:[%s1 + $0x910] sm:$0xff]
      %v513 = vld [vmem:[%s1 + $0x918] sm:$0xff]
      %v514 = vld [vmem:[%s1 + $0x920] sm:$0xff]
      %v515 = vld [vmem:[%s1 + $0x928] sm:$0xff]
      %v516 = vld [vmem:[%s1 + $0x930] sm:$0xff]
      %v517 = vld [vmem:[%s1 + $0x938] sm:$0xff]
      %v518 = vld [vmem:[%s1 + $0x940] sm:$0xff]
      %v519 = vld [vmem:[%s1 + $0x948] sm:$0xff]
      %v520 = vld [vmem:[%s1 + $0x950] sm:$0xff]
      %v521 = vld [vmem:[%s1 + $0x958] sm:$0xff]
      %v522 = vld [vmem:[%s1 + $0x960] sm:$0xff]
      %v523 = vld [vmem:[%s1 + $0x968] sm:$0xff]
      %v524 = vld [vmem:[%s1 + $0x970] sm:$0xff]
      %v525 = vld [vmem:[%s1 + $0x978] sm:$0xff]
      %v526 = vld [vmem:[%s1 + $0x980] sm:$0xff]
      %v527 = vld [vmem:[%s1 + $0x988] sm:$0xff]
      %v528 = vld [vmem:[%s1 + $0x990] sm:$0xff]
      %v529 = vld [vmem:[%s1 + $0x998] sm:$0xff]
      %v530 = vld [vmem:[%s1 + $0x9a0] sm:$0xff]
      %v531 = vld [vmem:[%s1 + $0x9a8] sm:$0xff]
      %v532 = vld [vmem:[%s1 + $0x9b0] sm:$0xff]
      %v533 = vld [vmem:[%s1 + $0x9b8] sm:$0xff]
      %v534 = vld [vmem:[%s1 + $0x9c0] sm:$0xff]
      %v535 = vld [vmem:[%s1 + $0x9c8] sm:$0xff]
      %v536 = vld [vmem:[%s1 + $0x9d0] sm:$0xff]
      %v537 = vld [vmem:[%s1 + $0x9d8] sm:$0xff]
      %v538 = vld [vmem:[%s1 + $0x9e0] sm:$0xff]
      %v539 = vld [vmem:[%s1 + $0x9e8] sm:$0xff]
      %v540 = vld [vmem:[%s1 + $0x9f0] sm:$0xff]
      %v541 = vld [vmem:[%s1 + $0x9f8] sm:$0xff]
      %v542 = vld [vmem:[%s1 + $0xa00] sm:$0xff]
      %v543 = vld [vmem:[%s1 + $0xa08] sm:$0xff]
      %v544 = vld [vmem:[%s1 + $0xa10] sm:$0xff]
      %v545 = vld [vmem:[%s1 + $0xa18] sm:$0xff]
      %v546 = vld [vmem:[%s1 + $0xa20] sm:$0xff]
      %v547 = vld [vmem:[%s1 + $0xa28] sm:$0xff]
      %v548 = vld [vmem:[%s1 + $0xa30] sm:$0xff]
      %v549 = vld [vmem:[%s1 + $0xa38] sm:$0xff]
      %v550 = vld [vmem:[%s1 + $0xa40] sm:$0xff]
      %v551 = vld [vmem:[%s1 + $0xa48] sm:$0xff]
      %v552 = vld [vmem:[%s1 + $0xa50] sm:$0xff]
      %v553 = vld [vmem:[%s1 + $0xa58] sm:$0xff]
      %v554 = vld [vmem:[%s1 + $0xa60] sm:$0xff]
      %v555 = vld [vmem:[%s1 + $0xa68] sm:$0xff]
      %v556 = vld [vmem:[%s1 + $0xa70] sm:$0xff]
      %v557 = vld [vmem:[%s1 + $0xa78] sm:$0xff]
      %v558 = vld [vmem:[%s1 + $0xa80] sm:$0xff]
      %v559 = vld [vmem:[%s1 + $0xa88] sm:$0xff]
      %v560 = vld [vmem:[%s1 + $0xa90] sm:$0xff]
      %v561 = vld [vmem:[%s1 + $0xa98] sm:$0xff]
      %v562 = vld [vmem:[%s1 + $0xaa0] sm:$0xff]
      %v563 = vld [vmem:[%s1 + $0xaa8] sm:$0xff]
      %v564 = vld [vmem:[%s1 + $0xab0] sm:$0xff]
      %v565 = vld [vmem:[%s1 + $0xab8] sm:$0xff]
      %v566 = vld [vmem:[%s1 + $0xac0] sm:$0xff]
      %v567 = vld [vmem:[%s1 + $0xac8] sm:$0xff]
      %v568 = vld [vmem:[%s1 + $0xad0] sm:$0xff]
      %v569 = vld [vmem:[%s1 + $0xad8] sm:$0xff]
      %v570 = vld [vmem:[%s1 + $0xae0] sm:$0xff]
      %v571 = vld [vmem:[%s1 + $0xae8] sm:$0xff]
      %v572 = vld [vmem:[%s1 + $0xaf0] sm:$0xff]
      %v573 = vld [vmem:[%s1 + $0xaf8] sm:$0xff]
      %v574 = vld [vmem:[%s1 + $0xb00] sm:$0xff]
      %v575 = vld [vmem:[%s1 + $0xb08] sm:$0xff]
      %v576 = vld [vmem:[%s1 + $0xb10] sm:$0xff]
      %v577 = vld [vmem:[%s1 + $0xb18] sm:$0xff]
      %v578 = vld [vmem:[%s1 + $0xb20] sm:$0xff]
      %v579 = vld [vmem:[%s1 + $0xb28] sm:$0xff]
      %v580 = vld [vmem:[%s1 + $0xb30] sm:$0xff]
      %v581 = vld [vmem:[%s1 + $0xb38] sm:$0xff]
      %v582 = vld [vmem:[%s1 + $0xb40] sm:$0xff]
      %v583 = vld [vmem:[%s1 + $0xb48] sm:$0xff]
      %v584 = vld [vmem:[%s1 + $0xb50] sm:$0xff]
      %v585 = vld [vmem:[%s1 + $0xb58] sm:$0xff]
      %v586 = vld [vmem:[%s1 + $0xb60] sm:$0xff]
      %v587 = vld [vmem:[%s1 + $0xb68] sm:$0xff]
      %v588 = vld [vmem:[%s1 + $0xb70] sm:$0xff]
      %v589 = vld [vmem:[%s1 + $0xb78] sm:$0xff]
      %v590 = vld [vmem:[%s1 + $0xb80] sm:$0xff]
      %v591 = vld [vmem:[%s1 + $0xb88] sm:$0xff]
      %v592 = vld [vmem:[%s1 + $0xb90] sm:$0xff]
      %v593 = vld [vmem:[%s1 + $0xb98] sm:$0xff]
      %v594 = vld [vmem:[%s1 + $0xba0] sm:$0xff]
      %v595 = vld [vmem:[%s1 + $0xba8] sm:$0xff]
      %v596 = vld [vmem:[%s1 + $0xbb0] sm:$0xff]
      %v597 = vld [vmem:[%s1 + $0xbb8] sm:$0xff]
      %v598 = vld [vmem:[%s1 + $0xbc0] sm:$0xff]
      %v599 = vld [vmem:[%s1 + $0xbc8] sm:$0xff]
      %v600 = vld [vmem:[%s1 + $0xbd0] sm:$0xff]
      %v601 = vld [vmem:[%s1 + $0xbd8] sm:$0xff]
      %v602 = vld [vmem:[%s1 + $0xbe0] sm:$0xff]
      %v603 = vld [vmem:[%s1 + $0xbe8] sm:$0xff]
      %v604 = vld [vmem:[%s1 + $0xbf0] sm:$0xff]
      %v605 = vld [vmem:[%s1 + $0xbf8] sm:$0xff]
      %v606 = vld [vmem:[%s1 + $0xc00] sm:$0xff]
      %v607 = vld [vmem:[%s1 + $0xc08] sm:$0xff]
      %v608 = vld [vmem:[%s1 + $0xc10] sm:$0xff]
      %v609 = vld [vmem:[%s1 + $0xc18] sm:$0xff]
      %v610 = vld [vmem:[%s1 + $0xc20] sm:$0xff]
      %v611 = vld [vmem:[%s1 + $0xc28] sm:$0xff]
      %v612 = vld [vmem:[%s1 + $0xc30] sm:$0xff]
      %v613 = vld [vmem:[%s1 + $0xc38] sm:$0xff]
      %v614 = vld [vmem:[%s1 + $0xc40] sm:$0xff]
      %v615 = vld [vmem:[%s1 + $0xc48] sm:$0xff]
      %v616 = vld [vmem:[%s1 + $0xc50] sm:$0xff]
      %v617 = vld [vmem:[%s1 + $0xc58] sm:$0xff]
      %v618 = vld [vmem:[%s1 + $0xc60] sm:$0xff]
      %v619 = vld [vmem:[%s1 + $0xc68] sm:$0xff]
      %v620 = vld [vmem:[%s1 + $0xc70] sm:$0xff]
      %v621 = vld [vmem:[%s1 + $0xc78] sm:$0xff]
      %v622 = vld [vmem:[%s1 + $0xc80] sm:$0xff]
      %v623 = vld [vmem:[%s1 + $0xc88] sm:$0xff]
      %v624 = vld [vmem:[%s1 + $0xc90] sm:$0xff]
      %v625 = vld [vmem:[%s1 + $0xc98] sm:$0xff]
      %v626 = vld [vmem:[%s1 + $0xca0] sm:$0xff]
      %v627 = vld [vmem:[%s1 + $0xca8] sm:$0xff]
      %v628 = vld [vmem:[%s1 + $0xcb0] sm:$0xff]
      %v629 = vld [vmem:[%s1 + $0xcb8] sm:$0xff]
      %v630 = vld [vmem:[%s1 + $0xcc0] sm:$0xff]
      %v631 = vld [vmem:[%s1 + $0xcc8] sm:$0xff]
      %v632 = vld [vmem:[%s1 + $0xcd0] sm:$0xff]
      %v633 = vld [vmem:[%s1 + $0xcd8] sm:$0xff]
      %v634 = vld [vmem:[%s1 + $0xce0] sm:$0xff]
      %v635 = vld [vmem:[%s1 + $0xce8] sm:$0xff]
      %v636 = vld [vmem:[%s1 + $0xcf0] sm:$0xff]
      %v637 = vld [vmem:[%s1 + $0xcf8] sm:$0xff]
      %v638 = vld [vmem:[%s1 + $0xd00] sm:$0xff]
      %v639 = vld [vmem:[%s1 + $0xd08] sm:$0xff]
      %v640 = vld [vmem:[%s1 + $0xd10] sm:$0xff]
      %v641 = vld [vmem:[%s1 + $0xd18] sm:$0xff]
      %v642 = vld [vmem:[%s1 + $0xd20] sm:$0xff]
      %v643 = vld [vmem:[%s1 + $0xd28] sm:$0xff]
      %v644 = vld [vmem:[%s1 + $0xd30] sm:$0xff]
      %v645 = vld [vmem:[%s1 + $0xd38] sm:$0xff]
      %v646 = vld [vmem:[%s1 + $0xd40] sm:$0xff]
      %v647 = vld [vmem:[%s1 + $0xd48] sm:$0xff]
      %v648 = vld [vmem:[%s1 + $0xd50] sm:$0xff]
      %v649 = vld [vmem:[%s1 + $0xd58] sm:$0xff]
      %v650 = vld [vmem:[%s1 + $0xd60] sm:$0xff]
      %v651 = vld [vmem:[%s1 + $0xd68] sm:$0xff]
      %v652 = vld [vmem:[%s1 + $0xd70] sm:$0xff]
      %v653 = vld [vmem:[%s1 + $0xd78] sm:$0xff]
      %v654 = vld [vmem:[%s1 + $0xd80] sm:$0xff]
      %v655 = vld [vmem:[%s1 + $0xd88] sm:$0xff]
      %v656 = vld [vmem:[%s1 + $0xd90] sm:$0xff]
      %v657 = vld [vmem:[%s1 + $0xd98] sm:$0xff]
      %v658 = vld [vmem:[%s1 + $0xda0] sm:$0xff]
      %v659 = vld [vmem:[%s1 + $0xda8] sm:$0xff]
      %v660 = vld [vmem:[%s1 + $0xdb0] sm:$0xff]
      %v661 = vld [vmem:[%s1 + $0xdb8] sm:$0xff]
      %v662 = vld [vmem:[%s1 + $0xdc0] sm:$0xff]
      %v663 = vld [vmem:[%s1 + $0xdc8] sm:$0xff]
      %v664 = vld [vmem:[%s1 + $0xdd0] sm:$0xff]
      %v665 = vld [vmem:[%s1 + $0xdd8] sm:$0xff]
      %v666 = vld [vmem:[%s1 + $0xde0] sm:$0xff]
      %v667 = vld [vmem:[%s1 + $0xde8] sm:$0xff]
      %v668 = vld [vmem:[%s1 + $0xdf0] sm:$0xff]
      %v669 = vld [vmem:[%s1 + $0xdf8] sm:$0xff]
      %v670 = vld [vmem:[%s1 + $0xe00] sm:$0xff]
      %v671 = vld [vmem:[%s1 + $0xe08] sm:$0xff]
      %v672 = vld [vmem:[%s1 + $0xe10] sm:$0xff]
      %v673 = vld [vmem:[%s1 + $0xe18] sm:$0xff]
      %v674 = vld [vmem:[%s1 + $0xe20] sm:$0xff]
      %v675 = vld [vmem:[%s1 + $0xe28] sm:$0xff]
      %v676 = vld [vmem:[%s1 + $0xe30] sm:$0xff]
      %v677 = vld [vmem:[%s1 + $0xe38] sm:$0xff]
      %v678 = vld [vmem:[%s1 + $0xe40] sm:$0xff]
      %v679 = vld [vmem:[%s1 + $0xe48] sm:$0xff]
      %v680 = vld [vmem:[%s1 + $0xe50] sm:$0xff]
      %v681 = vld [vmem:[%s1 + $0xe58] sm:$0xff]
      %v682 = vld [vmem:[%s1 + $0xe60] sm:$0xff]
      %v683 = vld [vmem:[%s1 + $0xe68] sm:$0xff]
      %v684 = vld [vmem:[%s1 + $0xe70] sm:$0xff]
      %v685 = vld [vmem:[%s1 + $0xe78] sm:$0xff]
      %v686 = vld [vmem:[%s1 + $0xe80] sm:$0xff]
      %v687 = vld [vmem:[%s1 + $0xe88] sm:$0xff]
      %v688 = vld [vmem:[%s1 + $0xe90] sm:$0xff]
      %v689 = vld [vmem:[%s1 + $0xe98] sm:$0xff]
      %v690 = vld [vmem:[%s1 + $0xea0] sm:$0xff]
      %v691 = vld [vmem:[%s1 + $0xea8] sm:$0xff]
      %v692 = vld [vmem:[%s1 + $0xeb0] sm:$0xff]
      %v693 = vld [vmem:[%s1 + $0xeb8] sm:$0xff]
      %v694 = vld [vmem:[%s1 + $0xec0] sm:$0xff]
      %v695 = vld [vmem:[%s1 + $0xec8] sm:$0xff]
      %v696 = vld [vmem:[%s1 + $0xed0] sm:$0xff]
      %v697 = vld [vmem:[%s1 + $0xed8] sm:$0xff]
      %v698 = vld [vmem:[%s1 + $0xee0] sm:$0xff]
      %v699 = vld [vmem:[%s1 + $0xee8] sm:$0xff]
      %v700 = vld [vmem:[%s1 + $0xef0] sm:$0xff]
      %v701 = vld [vmem:[%s1 + $0xef8] sm:$0xff]
      %v702 = vld [vmem:[%s1 + $0xf00] sm:$0xff]
      %v703 = vld [vmem:[%s1 + $0xf08] sm:$0xff]
      %v704 = vld [vmem:[%s1 + $0xf10] sm:$0xff]
      %v705 = vld [vmem:[%s1 + $0xf18] sm:$0xff]
      %v706 = vld [vmem:[%s1 + $0xf20] sm:$0xff]
      %v707 = vld [vmem:[%s1 + $0xf28] sm:$0xff]
      %v708 = vld [vmem:[%s1 + $0xf30] sm:$0xff]
      %v709 = vld [vmem:[%s1 + $0xf38] sm:$0xff]
      %v710 = vld [vmem:[%s1 + $0xf40] sm:$0xff]
      %v711 = vld [vmem:[%s1 + $0xf48] sm:$0xff]
      %v712 = vld [vmem:[%s1 + $0xf50] sm:$0xff]
      %v713 = vld [vmem:[%s1 + $0xf58] sm:$0xff]
      %v714 = vld [vmem:[%s1 + $0xf60] sm:$0xff]
      %v715 = vld [vmem:[%s1 + $0xf68] sm:$0xff]
      %v716 = vld [vmem:[%s1 + $0xf70] sm:$0xff]
      %v717 = vld [vmem:[%s1 + $0xf78] sm:$0xff]
      %v718 = vld [vmem:[%s1 + $0xf80] sm:$0xff]
      %v719 = vld [vmem:[%s1 + $0xf88] sm:$0xff]
      %v720 = vld [vmem:[%s1 + $0xf90] sm:$0xff]
      %v721 = vld [vmem:[%s1 + $0xf98] sm:$0xff]
      %v722 = vld [vmem:[%s1 + $0xfa0] sm:$0xff]
      %v723 = vld [vmem:[%s1 + $0xfa8] sm:$0xff]
      %v724 = vld [vmem:[%s1 + $0xfb0] sm:$0xff]
      %v725 = vld [vmem:[%s1 + $0xfb8] sm:$0xff]
      %v726 = vld [vmem:[%s1 + $0xfc0] sm:$0xff]
      %v727 = vld [vmem:[%s1 + $0xfc8] sm:$0xff]
      %v728 = vld [vmem:[%s1 + $0xfd0] sm:$0xff]
      %v729 = vld [vmem:[%s1 + $0xfd8] sm:$0xff]
      %v730 = vld [vmem:[%s1 + $0xfe0] sm:$0xff]
      %v731 = vld [vmem:[%s1 + $0xfe8] sm:$0xff]
      %v732 = vld [vmem:[%s1 + $0xff0] sm:$0xff]
      %v733 = vld [vmem:[%s1 + $0xff8] sm:$0xff]
      %v734 = vld [vmem:[%s1 + $0x1000] sm:$0xff]
      %v735 = vld [vmem:[%s1 + $0x1008] sm:$0xff]
      %v736 = vld [vmem:[%s1 + $0x1010] sm:$0xff]
      %v737 = vld [vmem:[%s1 + $0x1018] sm:$0xff]
      %v738 = vld [vmem:[%s1 + $0x1020] sm:$0xff]
      %v739 = vld [vmem:[%s1 + $0x1028] sm:$0xff]
      %v740 = vld [vmem:[%s1 + $0x1030] sm:$0xff]
      %v741 = vld [vmem:[%s1 + $0x1038] sm:$0xff]
      %v742 = vld [vmem:[%s1 + $0x1040] sm:$0xff]
      %v743 = vld [vmem:[%s1 + $0x1048] sm:$0xff]
      %v744 = vld [vmem:[%s1 + $0x1050] sm:$0xff]
      %v745 = vld [vmem:[%s1 + $0x1058] sm:$0xff]
      %v746 = vld [vmem:[%s1 + $0x1060] sm:$0xff]
      %v747 = vld [vmem:[%s1 + $0x1068] sm:$0xff]
      %v748 = vld [vmem:[%s1 + $0x1070] sm:$0xff]
      %v749 = vld [vmem:[%s1 + $0x1078] sm:$0xff]
      %v750 = vld [vmem:[%s1 + $0x1080] sm:$0xff]
      %v751 = vld [vmem:[%s1 + $0x1088] sm:$0xff]
      %v752 = vld [vmem:[%s1 + $0x1090] sm:$0xff]
      %v753 = vld [vmem:[%s1 + $0x1098] sm:$0xff]
      %v754 = vld [vmem:[%s1 + $0x10a0] sm:$0xff]
      %v755 = vld [vmem:[%s1 + $0x10a8] sm:$0xff]
      %v756 = vld [vmem:[%s1 + $0x10b0] sm:$0xff]
      %v757 = vld [vmem:[%s1 + $0x10b8] sm:$0xff]
      %v758 = vld [vmem:[%s1 + $0x10c0] sm:$0xff]
      %v759 = vld [vmem:[%s1 + $0x10c8] sm:$0xff]
      %v760 = vld [vmem:[%s1 + $0x10d0] sm:$0xff]
      %v761 = vld [vmem:[%s1 + $0x10d8] sm:$0xff]
      %v762 = vld [vmem:[%s1 + $0x10e0] sm:$0xff]
      %v763 = vld [vmem:[%s1 + $0x10e8] sm:$0xff]
      %v764 = vld [vmem:[%s1 + $0x10f0] sm:$0xff]
      %v765 = vld [vmem:[%s1 + $0x10f8] sm:$0xff]
      %v766 = vld [vmem:[%s1 + $0x1100] sm:$0xff]
      %v767 = vld [vmem:[%s1 + $0x1108] sm:$0xff]
      %v768 = vld [vmem:[%s1 + $0x1110] sm:$0xff]
      %v769 = vld [vmem:[%s1 + $0x1118] sm:$0xff]
      %v770 = vld [vmem:[%s1 + $0x1120] sm:$0xff]
      %v771 = vld [vmem:[%s1 + $0x1128] sm:$0xff]
      %v772 = vld [vmem:[%s1 + $0x1130] sm:$0xff]
      %v773 = vld [vmem:[%s1 + $0x1138] sm:$0xff]
      %v774 = vld [vmem:[%s1 + $0x1140] sm:$0xff]
      %v775 = vld [vmem:[%s1 + $0x1148] sm:$0xff]
      %v776 = vld [vmem:[%s1 + $0x1150] sm:$0xff]
      %v777 = vld [vmem:[%s1 + $0x1158] sm:$0xff]
      %v778 = vld [vmem:[%s1 + $0x1160] sm:$0xff]
      %v779 = vld [vmem:[%s1 + $0x1168] sm:$0xff]
      %v780 = vld [vmem:[%s1 + $0x1170] sm:$0xff]
      %v781 = vld [vmem:[%s1 + $0x1178] sm:$0xff]
      %v782 = vld [vmem:[%s1 + $0x1180] sm:$0xff]
      %v783 = vld [vmem:[%s1 + $0x1188] sm:$0xff]
      %v784 = vld [vmem:[%s1 + $0x1190] sm:$0xff]
      %v785 = vld [vmem:[%s1 + $0x1198] sm:$0xff]
      %v786 = vld [vmem:[%s1 + $0x11a0] sm:$0xff]
      %v787 = vld [vmem:[%s1 + $0x11a8] sm:$0xff]
      %v788 = vld [vmem:[%s1 + $0x11b0] sm:$0xff]
      %v789 = vld [vmem:[%s1 + $0x11b8] sm:$0xff]
      %v790 = vld [vmem:[%s1 + $0x11c0] sm:$0xff]
      %v791 = vld [vmem:[%s1 + $0x11c8] sm:$0xff]
      %v792 = vld [vmem:[%s1 + $0x11d0] sm:$0xff]
      %v793 = vld [vmem:[%s1 + $0x11d8] sm:$0xff]
      %v794 = vld [vmem:[%s1 + $0x11e0] sm:$0xff]
      %v795 = vld [vmem:[%s1 + $0x11e8] sm:$0xff]
      %v796 = vld [vmem:[%s1 + $0x11f0] sm:$0xff]
      %v797 = vld [vmem:[%s1 + $0x11f8] sm:$0xff]
      %v798 = vld [vmem:[%s2] sm:$0xf]
      %v800 = vlaneseq
      %v801 = vshrl.u32 %v800, 7
      %v802 = vsub.s32 0, %v801
      %v803 = vrot.slane %v798, %v802
      %v804 = vlaneseq
      %v805 = vshrl.u32 %v804, 7
      %v806 = vsub.s32 1, %v805
      %v807 = vrot.slane %v798, %v806
      %v808 = vlaneseq
      %v809 = vshrl.u32 %v808, 7
      %v810 = vsub.s32 2, %v809
      %v811 = vrot.slane %v798, %v810
      %v812 = vlaneseq
      %v813 = vshrl.u32 %v812, 7
      %v814 = vsub.s32 3, %v813
      %v815 = vrot.slane %v798, %v814
      %v838 = vunpack.c.l.b16 %v204
      %v839 = vunpack.c.h.b16 %v204
      %v840 = vunpack.c.l.b16 %v205
      %v841 = vunpack.c.h.b16 %v205
      %v842 = vunpack.c.l.b16 %v206
      %v843 = vunpack.c.h.b16 %v206
      %v844 = vunpack.c.l.b16 %v207
      %v845 = vunpack.c.h.b16 %v207
      %v846 = vunpack.c.l.b16 %v208
      %v847 = vunpack.c.h.b16 %v208
      %v848 = vunpack.c.l.b16 %v209
      %v849 = vunpack.c.h.b16 %v209
      %v850 = vunpack.c.l.b16 %v210
      %v851 = vunpack.c.h.b16 %v210
      %v852 = vunpack.c.l.b16 %v211
      %v853 = vunpack.c.h.b16 %v211
      %v854 = vunpack.c.l.b16 %v212
      %v855 = vunpack.c.h.b16 %v212
      %v856 = vunpack.c.l.b16 %v213
      %v857 = vunpack.c.h.b16 %v213
      %v858 = vunpack.c.l.b16 %v214
      %v859 = vunpack.c.h.b16 %v214
      %v860 = vunpack.c.l.b16 %v215
      %v861 = vunpack.c.h.b16 %v215
      %v862 = vunpack.c.l.b16 %v216
      %v863 = vunpack.c.h.b16 %v216
      %v864 = vunpack.c.l.b16 %v217
      %v865 = vunpack.c.h.b16 %v217
      %v866 = vunpack.c.l.b16 %v218
      %v867 = vunpack.c.h.b16 %v218
      %v868 = vunpack.c.l.b16 %v219
      %v869 = vunpack.c.h.b16 %v219
      %v870 = vunpack.c.l.b16 %v220
      %v871 = vunpack.c.h.b16 %v220
      %v872 = vunpack.c.l.b16 %v221
      %v873 = vunpack.c.h.b16 %v221
      %v874 = vpack.c.b16 %v856, %v838
      %v875 = vpack.c.b16 %v857, %v839
      %v876 = vpack.c.b16 %v858, %v840
      %v877 = vpack.c.b16 %v859, %v841
      %v878 = vpack.c.b16 %v860, %v842
      %v879 = vpack.c.b16 %v861, %v843
      %v880 = vpack.c.b16 %v862, %v844
      %v881 = vpack.c.b16 %v863, %v845
      %v882 = vpack.c.b16 %v864, %v846
      %v883 = vpack.c.b16 %v865, %v847
      %v884 = vpack.c.b16 %v866, %v848
      %v885 = vpack.c.b16 %v867, %v849
      %v886 = vpack.c.b16 %v868, %v850
      %v887 = vpack.c.b16 %v869, %v851
      %v888 = vpack.c.b16 %v870, %v852
      %v889 = vpack.c.b16 %v871, %v853
      %v890 = vpack.c.b16 %v872, %v854
      %v891 = vpack.c.b16 %v873, %v855
      %v1486 = vunpack.c.l.b16 %v222
      %v1487 = vunpack.c.h.b16 %v222
      %v1488 = vunpack.c.l.b16 %v223
      %v1489 = vunpack.c.h.b16 %v223
      %v1490 = vunpack.c.l.b16 %v224
      %v1491 = vunpack.c.h.b16 %v224
      %v1492 = vunpack.c.l.b16 %v225
      %v1493 = vunpack.c.h.b16 %v225
      %v1494 = vunpack.c.l.b16 %v226
      %v1495 = vunpack.c.h.b16 %v226
      %v1496 = vunpack.c.l.b16 %v227
      %v1497 = vunpack.c.h.b16 %v227
      %v1498 = vunpack.c.l.b16 %v228
      %v1499 = vunpack.c.h.b16 %v228
      %v1500 = vunpack.c.l.b16 %v229
      %v1501 = vunpack.c.h.b16 %v229
      %v1502 = vunpack.c.l.b16 %v230
      %v1503 = vunpack.c.h.b16 %v230
      %v1504 = vunpack.c.l.b16 %v231
      %v1505 = vunpack.c.h.b16 %v231
      %v1506 = vunpack.c.l.b16 %v232
      %v1507 = vunpack.c.h.b16 %v232
      %v1508 = vunpack.c.l.b16 %v233
      %v1509 = vunpack.c.h.b16 %v233
      %v1510 = vunpack.c.l.b16 %v234
      %v1511 = vunpack.c.h.b16 %v234
      %v1512 = vunpack.c.l.b16 %v235
      %v1513 = vunpack.c.h.b16 %v235
      %v1514 = vunpack.c.l.b16 %v236
      %v1515 = vunpack.c.h.b16 %v236
      %v1516 = vunpack.c.l.b16 %v237
      %v1517 = vunpack.c.h.b16 %v237
      %v1518 = vunpack.c.l.b16 %v238
      %v1519 = vunpack.c.h.b16 %v238
      %v1520 = vunpack.c.l.b16 %v239
      %v1521 = vunpack.c.h.b16 %v239
      %v1522 = vunpack.c.l.b16 %v240
      %v1523 = vunpack.c.h.b16 %v240
      %v1524 = vunpack.c.l.b16 %v241
      %v1525 = vunpack.c.h.b16 %v241
      %v1526 = vunpack.c.l.b16 %v242
      %v1527 = vunpack.c.h.b16 %v242
      %v1528 = vunpack.c.l.b16 %v243
      %v1529 = vunpack.c.h.b16 %v243
      %v1530 = vunpack.c.l.b16 %v244
      %v1531 = vunpack.c.h.b16 %v244
      %v1532 = vunpack.c.l.b16 %v245
      %v1533 = vunpack.c.h.b16 %v245
      %v1534 = vunpack.c.l.b16 %v246
      %v1535 = vunpack.c.h.b16 %v246
      %v1536 = vunpack.c.l.b16 %v247
      %v1537 = vunpack.c.h.b16 %v247
      %v1538 = vunpack.c.l.b16 %v248
      %v1539 = vunpack.c.h.b16 %v248
      %v1540 = vunpack.c.l.b16 %v249
      %v1541 = vunpack.c.h.b16 %v249
      %v1542 = vunpack.c.l.b16 %v250
      %v1543 = vunpack.c.h.b16 %v250
      %v1544 = vunpack.c.l.b16 %v251
      %v1545 = vunpack.c.h.b16 %v251
      %v1546 = vunpack.c.l.b16 %v252
      %v1547 = vunpack.c.h.b16 %v252
      %v1548 = vunpack.c.l.b16 %v253
      %v1549 = vunpack.c.h.b16 %v253
      %v1550 = vunpack.c.l.b16 %v254
      %v1551 = vunpack.c.h.b16 %v254
      %v1552 = vunpack.c.l.b16 %v255
      %v1553 = vunpack.c.h.b16 %v255
      %v1554 = vunpack.c.l.b16 %v256
      %v1555 = vunpack.c.h.b16 %v256
      %v1556 = vunpack.c.l.b16 %v257
      %v1557 = vunpack.c.h.b16 %v257
      %v1558 = vunpack.c.l.b16 %v258
      %v1559 = vunpack.c.h.b16 %v258
      %v1560 = vunpack.c.l.b16 %v259
      %v1561 = vunpack.c.h.b16 %v259
      %v1562 = vunpack.c.l.b16 %v260
      %v1563 = vunpack.c.h.b16 %v260
      %v1564 = vunpack.c.l.b16 %v261
      %v1565 = vunpack.c.h.b16 %v261
      %v1566 = vunpack.c.l.b16 %v262
      %v1567 = vunpack.c.h.b16 %v262
      %v1568 = vunpack.c.l.b16 %v263
      %v1569 = vunpack.c.h.b16 %v263
      %v1570 = vunpack.c.l.b16 %v264
      %v1571 = vunpack.c.h.b16 %v264
      %v1572 = vunpack.c.l.b16 %v265
      %v1573 = vunpack.c.h.b16 %v265
      %v1574 = vunpack.c.l.b16 %v266
      %v1575 = vunpack.c.h.b16 %v266
      %v1576 = vunpack.c.l.b16 %v267
      %v1577 = vunpack.c.h.b16 %v267
      %v1578 = vunpack.c.l.b16 %v268
      %v1579 = vunpack.c.h.b16 %v268
      %v1580 = vunpack.c.l.b16 %v269
      %v1581 = vunpack.c.h.b16 %v269
      %v1582 = vunpack.c.l.b16 %v270
      %v1583 = vunpack.c.h.b16 %v270
      %v1584 = vunpack.c.l.b16 %v271
      %v1585 = vunpack.c.h.b16 %v271
      %v1586 = vunpack.c.l.b16 %v272
      %v1587 = vunpack.c.h.b16 %v272
      %v1588 = vunpack.c.l.b16 %v273
      %v1589 = vunpack.c.h.b16 %v273
      %v1590 = vunpack.c.l.b16 %v274
      %v1591 = vunpack.c.h.b16 %v274
      %v1592 = vunpack.c.l.b16 %v275
      %v1593 = vunpack.c.h.b16 %v275
      %v1594 = vunpack.c.l.b16 %v276
      %v1595 = vunpack.c.h.b16 %v276
      %v1596 = vunpack.c.l.b16 %v277
      %v1597 = vunpack.c.h.b16 %v277
      %v1598 = vunpack.c.l.b16 %v278
      %v1599 = vunpack.c.h.b16 %v278
      %v1600 = vunpack.c.l.b16 %v279
      %v1601 = vunpack.c.h.b16 %v279
      %v1602 = vunpack.c.l.b16 %v280
      %v1603 = vunpack.c.h.b16 %v280
      %v1604 = vunpack.c.l.b16 %v281
      %v1605 = vunpack.c.h.b16 %v281
      %v1606 = vunpack.c.l.b16 %v282
      %v1607 = vunpack.c.h.b16 %v282
      %v1608 = vunpack.c.l.b16 %v283
      %v1609 = vunpack.c.h.b16 %v283
      %v1610 = vunpack.c.l.b16 %v284
      %v1611 = vunpack.c.h.b16 %v284
      %v1612 = vunpack.c.l.b16 %v285
      %v1613 = vunpack.c.h.b16 %v285
      %v1614 = vunpack.c.l.b16 %v286
      %v1615 = vunpack.c.h.b16 %v286
      %v1616 = vunpack.c.l.b16 %v287
      %v1617 = vunpack.c.h.b16 %v287
      %v1618 = vunpack.c.l.b16 %v288
      %v1619 = vunpack.c.h.b16 %v288
      %v1620 = vunpack.c.l.b16 %v289
      %v1621 = vunpack.c.h.b16 %v289
      %v1622 = vunpack.c.l.b16 %v290
      %v1623 = vunpack.c.h.b16 %v290
      %v1624 = vunpack.c.l.b16 %v291
      %v1625 = vunpack.c.h.b16 %v291
      %v1626 = vunpack.c.l.b16 %v292
      %v1627 = vunpack.c.h.b16 %v292
      %v1628 = vunpack.c.l.b16 %v293
      %v1629 = vunpack.c.h.b16 %v293
      %v1630 = vunpack.c.l.b16 %v294
      %v1631 = vunpack.c.h.b16 %v294
      %v1632 = vunpack.c.l.b16 %v295
      %v1633 = vunpack.c.h.b16 %v295
      %v1634 = vunpack.c.l.b16 %v296
      %v1635 = vunpack.c.h.b16 %v296
      %v1636 = vunpack.c.l.b16 %v297
      %v1637 = vunpack.c.h.b16 %v297
      %v1638 = vunpack.c.l.b16 %v298
      %v1639 = vunpack.c.h.b16 %v298
      %v1640 = vunpack.c.l.b16 %v299
      %v1641 = vunpack.c.h.b16 %v299
      %v1642 = vunpack.c.l.b16 %v300
      %v1643 = vunpack.c.h.b16 %v300
      %v1644 = vunpack.c.l.b16 %v301
      %v1645 = vunpack.c.h.b16 %v301
      %v1646 = vunpack.c.l.b16 %v302
      %v1647 = vunpack.c.h.b16 %v302
      %v1648 = vunpack.c.l.b16 %v303
      %v1649 = vunpack.c.h.b16 %v303
      %v1650 = vunpack.c.l.b16 %v304
      %v1651 = vunpack.c.h.b16 %v304
      %v1652 = vunpack.c.l.b16 %v305
      %v1653 = vunpack.c.h.b16 %v305
      %v1654 = vunpack.c.l.b16 %v306
      %v1655 = vunpack.c.h.b16 %v306
      %v1656 = vunpack.c.l.b16 %v307
      %v1657 = vunpack.c.h.b16 %v307
      %v1658 = vunpack.c.l.b16 %v308
      %v1659 = vunpack.c.h.b16 %v308
      %v1660 = vunpack.c.l.b16 %v309
      %v1661 = vunpack.c.h.b16 %v309
      %v1662 = vunpack.c.l.b16 %v310
      %v1663 = vunpack.c.h.b16 %v310
      %v1664 = vunpack.c.l.b16 %v311
      %v1665 = vunpack.c.h.b16 %v311
      %v1666 = vunpack.c.l.b16 %v312
      %v1667 = vunpack.c.h.b16 %v312
      %v1668 = vunpack.c.l.b16 %v313
      %v1669 = vunpack.c.h.b16 %v313
      %v1670 = vunpack.c.l.b16 %v314
      %v1671 = vunpack.c.h.b16 %v314
      %v1672 = vunpack.c.l.b16 %v315
      %v1673 = vunpack.c.h.b16 %v315
      %v1674 = vunpack.c.l.b16 %v316
      %v1675 = vunpack.c.h.b16 %v316
      %v1676 = vunpack.c.l.b16 %v317
      %v1677 = vunpack.c.h.b16 %v317
      %v1678 = vunpack.c.l.b16 %v318
      %v1679 = vunpack.c.h.b16 %v318
      %v1680 = vunpack.c.l.b16 %v319
      %v1681 = vunpack.c.h.b16 %v319
      %v1682 = vunpack.c.l.b16 %v320
      %v1683 = vunpack.c.h.b16 %v320
      %v1684 = vunpack.c.l.b16 %v321
      %v1685 = vunpack.c.h.b16 %v321
      %v1686 = vunpack.c.l.b16 %v322
      %v1687 = vunpack.c.h.b16 %v322
      %v1688 = vunpack.c.l.b16 %v323
      %v1689 = vunpack.c.h.b16 %v323
      %v1690 = vunpack.c.l.b16 %v324
      %v1691 = vunpack.c.h.b16 %v324
      %v1692 = vunpack.c.l.b16 %v325
      %v1693 = vunpack.c.h.b16 %v325
      %v1694 = vunpack.c.l.b16 %v326
      %v1695 = vunpack.c.h.b16 %v326
      %v1696 = vunpack.c.l.b16 %v327
      %v1697 = vunpack.c.h.b16 %v327
      %v1698 = vunpack.c.l.b16 %v328
      %v1699 = vunpack.c.h.b16 %v328
      %v1700 = vunpack.c.l.b16 %v329
      %v1701 = vunpack.c.h.b16 %v329
      %v1702 = vunpack.c.l.b16 %v330
      %v1703 = vunpack.c.h.b16 %v330
      %v1704 = vunpack.c.l.b16 %v331
      %v1705 = vunpack.c.h.b16 %v331
      %v1706 = vunpack.c.l.b16 %v332
      %v1707 = vunpack.c.h.b16 %v332
      %v1708 = vunpack.c.l.b16 %v333
      %v1709 = vunpack.c.h.b16 %v333
      %v1710 = vunpack.c.l.b16 %v334
      %v1711 = vunpack.c.h.b16 %v334
      %v1712 = vunpack.c.l.b16 %v335
      %v1713 = vunpack.c.h.b16 %v335
      %v1714 = vunpack.c.l.b16 %v336
      %v1715 = vunpack.c.h.b16 %v336
      %v1716 = vunpack.c.l.b16 %v337
      %v1717 = vunpack.c.h.b16 %v337
      %v1718 = vunpack.c.l.b16 %v338
      %v1719 = vunpack.c.h.b16 %v338
      %v1720 = vunpack.c.l.b16 %v339
      %v1721 = vunpack.c.h.b16 %v339
      %v1722 = vunpack.c.l.b16 %v340
      %v1723 = vunpack.c.h.b16 %v340
      %v1724 = vunpack.c.l.b16 %v341
      %v1725 = vunpack.c.h.b16 %v341
      %v1726 = vunpack.c.l.b16 %v342
      %v1727 = vunpack.c.h.b16 %v342
      %v1728 = vunpack.c.l.b16 %v343
      %v1729 = vunpack.c.h.b16 %v343
      %v1730 = vunpack.c.l.b16 %v344
      %v1731 = vunpack.c.h.b16 %v344
      %v1732 = vunpack.c.l.b16 %v345
      %v1733 = vunpack.c.h.b16 %v345
      %v1734 = vunpack.c.l.b16 %v346
      %v1735 = vunpack.c.h.b16 %v346
      %v1736 = vunpack.c.l.b16 %v347
      %v1737 = vunpack.c.h.b16 %v347
      %v1738 = vunpack.c.l.b16 %v348
      %v1739 = vunpack.c.h.b16 %v348
      %v1740 = vunpack.c.l.b16 %v349
      %v1741 = vunpack.c.h.b16 %v349
      %v1742 = vunpack.c.l.b16 %v350
      %v1743 = vunpack.c.h.b16 %v350
      %v1744 = vunpack.c.l.b16 %v351
      %v1745 = vunpack.c.h.b16 %v351
      %v1746 = vunpack.c.l.b16 %v352
      %v1747 = vunpack.c.h.b16 %v352
      %v1748 = vunpack.c.l.b16 %v353
      %v1749 = vunpack.c.h.b16 %v353
      %v1750 = vunpack.c.l.b16 %v354
      %v1751 = vunpack.c.h.b16 %v354
      %v1752 = vunpack.c.l.b16 %v355
      %v1753 = vunpack.c.h.b16 %v355
      %v1754 = vunpack.c.l.b16 %v356
      %v1755 = vunpack.c.h.b16 %v356
      %v1756 = vunpack.c.l.b16 %v357
      %v1757 = vunpack.c.h.b16 %v357
      %v1758 = vunpack.c.l.b16 %v358
      %v1759 = vunpack.c.h.b16 %v358
      %v1760 = vunpack.c.l.b16 %v359
      %v1761 = vunpack.c.h.b16 %v359
      %v1762 = vunpack.c.l.b16 %v360
      %v1763 = vunpack.c.h.b16 %v360
      %v1764 = vunpack.c.l.b16 %v361
      %v1765 = vunpack.c.h.b16 %v361
      %v1766 = vunpack.c.l.b16 %v362
      %v1767 = vunpack.c.h.b16 %v362
      %v1768 = vunpack.c.l.b16 %v363
      %v1769 = vunpack.c.h.b16 %v363
      %v1770 = vunpack.c.l.b16 %v364
      %v1771 = vunpack.c.h.b16 %v364
      %v1772 = vunpack.c.l.b16 %v365
      %v1773 = vunpack.c.h.b16 %v365
      %v1774 = vunpack.c.l.b16 %v366
      %v1775 = vunpack.c.h.b16 %v366
      %v1776 = vunpack.c.l.b16 %v367
      %v1777 = vunpack.c.h.b16 %v367
      %v1778 = vunpack.c.l.b16 %v368
      %v1779 = vunpack.c.h.b16 %v368
      %v1780 = vunpack.c.l.b16 %v369
      %v1781 = vunpack.c.h.b16 %v369
      %v1782 = vunpack.c.l.b16 %v370
      %v1783 = vunpack.c.h.b16 %v370
      %v1784 = vunpack.c.l.b16 %v371
      %v1785 = vunpack.c.h.b16 %v371
      %v1786 = vunpack.c.l.b16 %v372
      %v1787 = vunpack.c.h.b16 %v372
      %v1788 = vunpack.c.l.b16 %v373
      %v1789 = vunpack.c.h.b16 %v373
      %v1790 = vunpack.c.l.b16 %v374
      %v1791 = vunpack.c.h.b16 %v374
      %v1792 = vunpack.c.l.b16 %v375
      %v1793 = vunpack.c.h.b16 %v375
      %v1794 = vunpack.c.l.b16 %v376
      %v1795 = vunpack.c.h.b16 %v376
      %v1796 = vunpack.c.l.b16 %v377
      %v1797 = vunpack.c.h.b16 %v377
      %v1798 = vunpack.c.l.b16 %v378
      %v1799 = vunpack.c.h.b16 %v378
      %v1800 = vunpack.c.l.b16 %v379
      %v1801 = vunpack.c.h.b16 %v379
      %v1802 = vunpack.c.l.b16 %v380
      %v1803 = vunpack.c.h.b16 %v380
      %v1804 = vunpack.c.l.b16 %v381
      %v1805 = vunpack.c.h.b16 %v381
      %v1806 = vunpack.c.l.b16 %v382
      %v1807 = vunpack.c.h.b16 %v382
      %v1808 = vunpack.c.l.b16 %v383
      %v1809 = vunpack.c.h.b16 %v383
      %v1810 = vunpack.c.l.b16 %v384
      %v1811 = vunpack.c.h.b16 %v384
      %v1812 = vunpack.c.l.b16 %v385
      %v1813 = vunpack.c.h.b16 %v385
      %v1814 = vunpack.c.l.b16 %v386
      %v1815 = vunpack.c.h.b16 %v386
      %v1816 = vunpack.c.l.b16 %v387
      %v1817 = vunpack.c.h.b16 %v387
      %v1818 = vunpack.c.l.b16 %v388
      %v1819 = vunpack.c.h.b16 %v388
      %v1820 = vunpack.c.l.b16 %v389
      %v1821 = vunpack.c.h.b16 %v389
      %v1822 = vunpack.c.l.b16 %v390
      %v1823 = vunpack.c.h.b16 %v390
      %v1824 = vunpack.c.l.b16 %v391
      %v1825 = vunpack.c.h.b16 %v391
      %v1826 = vunpack.c.l.b16 %v392
      %v1827 = vunpack.c.h.b16 %v392
      %v1828 = vunpack.c.l.b16 %v393
      %v1829 = vunpack.c.h.b16 %v393
      %v1830 = vunpack.c.l.b16 %v394
      %v1831 = vunpack.c.h.b16 %v394
      %v1832 = vunpack.c.l.b16 %v395
      %v1833 = vunpack.c.h.b16 %v395
      %v1834 = vunpack.c.l.b16 %v396
      %v1835 = vunpack.c.h.b16 %v396
      %v1836 = vunpack.c.l.b16 %v397
      %v1837 = vunpack.c.h.b16 %v397
      %v1838 = vunpack.c.l.b16 %v398
      %v1839 = vunpack.c.h.b16 %v398
      %v1840 = vunpack.c.l.b16 %v399
      %v1841 = vunpack.c.h.b16 %v399
      %v1842 = vunpack.c.l.b16 %v400
      %v1843 = vunpack.c.h.b16 %v400
      %v1844 = vunpack.c.l.b16 %v401
      %v1845 = vunpack.c.h.b16 %v401
      %v1846 = vunpack.c.l.b16 %v402
      %v1847 = vunpack.c.h.b16 %v402
      %v1848 = vunpack.c.l.b16 %v403
      %v1849 = vunpack.c.h.b16 %v403
      %v1850 = vunpack.c.l.b16 %v404
      %v1851 = vunpack.c.h.b16 %v404
      %v1852 = vunpack.c.l.b16 %v405
      %v1853 = vunpack.c.h.b16 %v405
      %v1854 = vunpack.c.l.b16 %v406
      %v1855 = vunpack.c.h.b16 %v406
      %v1856 = vunpack.c.l.b16 %v407
      %v1857 = vunpack.c.h.b16 %v407
      %v1858 = vunpack.c.l.b16 %v408
      %v1859 = vunpack.c.h.b16 %v408
      %v1860 = vunpack.c.l.b16 %v409
      %v1861 = vunpack.c.h.b16 %v409
      %v1862 = vunpack.c.l.b16 %v410
      %v1863 = vunpack.c.h.b16 %v410
      %v1864 = vunpack.c.l.b16 %v411
      %v1865 = vunpack.c.h.b16 %v411
      %v1866 = vunpack.c.l.b16 %v412
      %v1867 = vunpack.c.h.b16 %v412
      %v1868 = vunpack.c.l.b16 %v413
      %v1869 = vunpack.c.h.b16 %v413
      %v1870 = vunpack.c.l.b16 %v414
      %v1871 = vunpack.c.h.b16 %v414
      %v1872 = vunpack.c.l.b16 %v415
      %v1873 = vunpack.c.h.b16 %v415
      %v1874 = vunpack.c.l.b16 %v416
      %v1875 = vunpack.c.h.b16 %v416
      %v1876 = vunpack.c.l.b16 %v417
      %v1877 = vunpack.c.h.b16 %v417
      %v1878 = vunpack.c.l.b16 %v418
      %v1879 = vunpack.c.h.b16 %v418
      %v1880 = vunpack.c.l.b16 %v419
      %v1881 = vunpack.c.h.b16 %v419
      %v1882 = vunpack.c.l.b16 %v420
      %v1883 = vunpack.c.h.b16 %v420
      %v1884 = vunpack.c.l.b16 %v421
      %v1885 = vunpack.c.h.b16 %v421
      %v1886 = vunpack.c.l.b16 %v422
      %v1887 = vunpack.c.h.b16 %v422
      %v1888 = vunpack.c.l.b16 %v423
      %v1889 = vunpack.c.h.b16 %v423
      %v1890 = vunpack.c.l.b16 %v424
      %v1891 = vunpack.c.h.b16 %v424
      %v1892 = vunpack.c.l.b16 %v425
      %v1893 = vunpack.c.h.b16 %v425
      %v1894 = vunpack.c.l.b16 %v426
      %v1895 = vunpack.c.h.b16 %v426
      %v1896 = vunpack.c.l.b16 %v427
      %v1897 = vunpack.c.h.b16 %v427
      %v1898 = vunpack.c.l.b16 %v428
      %v1899 = vunpack.c.h.b16 %v428
      %v1900 = vunpack.c.l.b16 %v429
      %v1901 = vunpack.c.h.b16 %v429
      %v1902 = vunpack.c.l.b16 %v430
      %v1903 = vunpack.c.h.b16 %v430
      %v1904 = vunpack.c.l.b16 %v431
      %v1905 = vunpack.c.h.b16 %v431
      %v1906 = vunpack.c.l.b16 %v432
      %v1907 = vunpack.c.h.b16 %v432
      %v1908 = vunpack.c.l.b16 %v433
      %v1909 = vunpack.c.h.b16 %v433
      %v1910 = vunpack.c.l.b16 %v434
      %v1911 = vunpack.c.h.b16 %v434
      %v1912 = vunpack.c.l.b16 %v435
      %v1913 = vunpack.c.h.b16 %v435
      %v1914 = vunpack.c.l.b16 %v436
      %v1915 = vunpack.c.h.b16 %v436
      %v1916 = vunpack.c.l.b16 %v437
      %v1917 = vunpack.c.h.b16 %v437
      %v1918 = vunpack.c.l.b16 %v438
      %v1919 = vunpack.c.h.b16 %v438
      %v1920 = vunpack.c.l.b16 %v439
      %v1921 = vunpack.c.h.b16 %v439
      %v1922 = vunpack.c.l.b16 %v440
      %v1923 = vunpack.c.h.b16 %v440
      %v1924 = vunpack.c.l.b16 %v441
      %v1925 = vunpack.c.h.b16 %v441
      %v1926 = vunpack.c.l.b16 %v442
      %v1927 = vunpack.c.h.b16 %v442
      %v1928 = vunpack.c.l.b16 %v443
      %v1929 = vunpack.c.h.b16 %v443
      %v1930 = vunpack.c.l.b16 %v444
      %v1931 = vunpack.c.h.b16 %v444
      %v1932 = vunpack.c.l.b16 %v445
      %v1933 = vunpack.c.h.b16 %v445
      %v1934 = vunpack.c.l.b16 %v446
      %v1935 = vunpack.c.h.b16 %v446
      %v1936 = vunpack.c.l.b16 %v447
      %v1937 = vunpack.c.h.b16 %v447
      %v1938 = vunpack.c.l.b16 %v448
      %v1939 = vunpack.c.h.b16 %v448
      %v1940 = vunpack.c.l.b16 %v449
      %v1941 = vunpack.c.h.b16 %v449
      %v1942 = vunpack.c.l.b16 %v450
      %v1943 = vunpack.c.h.b16 %v450
      %v1944 = vunpack.c.l.b16 %v451
      %v1945 = vunpack.c.h.b16 %v451
      %v1946 = vunpack.c.l.b16 %v452
      %v1947 = vunpack.c.h.b16 %v452
      %v1948 = vunpack.c.l.b16 %v453
      %v1949 = vunpack.c.h.b16 %v453
      %v1950 = vunpack.c.l.b16 %v454
      %v1951 = vunpack.c.h.b16 %v454
      %v1952 = vunpack.c.l.b16 %v455
      %v1953 = vunpack.c.h.b16 %v455
      %v1954 = vunpack.c.l.b16 %v456
      %v1955 = vunpack.c.h.b16 %v456
      %v1956 = vunpack.c.l.b16 %v457
      %v1957 = vunpack.c.h.b16 %v457
      %v1958 = vunpack.c.l.b16 %v458
      %v1959 = vunpack.c.h.b16 %v458
      %v1960 = vunpack.c.l.b16 %v459
      %v1961 = vunpack.c.h.b16 %v459
      %v1962 = vunpack.c.l.b16 %v460
      %v1963 = vunpack.c.h.b16 %v460
      %v1964 = vunpack.c.l.b16 %v461
      %v1965 = vunpack.c.h.b16 %v461
      %v1966 = vunpack.c.l.b16 %v462
      %v1967 = vunpack.c.h.b16 %v462
      %v1968 = vunpack.c.l.b16 %v463
      %v1969 = vunpack.c.h.b16 %v463
      %v1970 = vunpack.c.l.b16 %v464
      %v1971 = vunpack.c.h.b16 %v464
      %v1972 = vunpack.c.l.b16 %v465
      %v1973 = vunpack.c.h.b16 %v465
      %v1974 = vunpack.c.l.b16 %v466
      %v1975 = vunpack.c.h.b16 %v466
      %v1976 = vunpack.c.l.b16 %v467
      %v1977 = vunpack.c.h.b16 %v467
      %v1978 = vunpack.c.l.b16 %v468
      %v1979 = vunpack.c.h.b16 %v468
      %v1980 = vunpack.c.l.b16 %v469
      %v1981 = vunpack.c.h.b16 %v469
      %v1982 = vunpack.c.l.b16 %v470
      %v1983 = vunpack.c.h.b16 %v470
      %v1984 = vunpack.c.l.b16 %v471
      %v1985 = vunpack.c.h.b16 %v471
      %v1986 = vunpack.c.l.b16 %v472
      %v1987 = vunpack.c.h.b16 %v472
      %v1988 = vunpack.c.l.b16 %v473
      %v1989 = vunpack.c.h.b16 %v473
      %v1990 = vunpack.c.l.b16 %v474
      %v1991 = vunpack.c.h.b16 %v474
      %v1992 = vunpack.c.l.b16 %v475
      %v1993 = vunpack.c.h.b16 %v475
      %v1994 = vunpack.c.l.b16 %v476
      %v1995 = vunpack.c.h.b16 %v476
      %v1996 = vunpack.c.l.b16 %v477
      %v1997 = vunpack.c.h.b16 %v477
      %v1998 = vunpack.c.l.b16 %v478
      %v1999 = vunpack.c.h.b16 %v478
      %v2000 = vunpack.c.l.b16 %v479
      %v2001 = vunpack.c.h.b16 %v479
      %v2002 = vunpack.c.l.b16 %v480
      %v2003 = vunpack.c.h.b16 %v480
      %v2004 = vunpack.c.l.b16 %v481
      %v2005 = vunpack.c.h.b16 %v481
      %v2006 = vunpack.c.l.b16 %v482
      %v2007 = vunpack.c.h.b16 %v482
      %v2008 = vunpack.c.l.b16 %v483
      %v2009 = vunpack.c.h.b16 %v483
      %v2010 = vunpack.c.l.b16 %v484
      %v2011 = vunpack.c.h.b16 %v484
      %v2012 = vunpack.c.l.b16 %v485
      %v2013 = vunpack.c.h.b16 %v485
      %v2014 = vunpack.c.l.b16 %v486
      %v2015 = vunpack.c.h.b16 %v486
      %v2016 = vunpack.c.l.b16 %v487
      %v2017 = vunpack.c.h.b16 %v487
      %v2018 = vunpack.c.l.b16 %v488
      %v2019 = vunpack.c.h.b16 %v488
      %v2020 = vunpack.c.l.b16 %v489
      %v2021 = vunpack.c.h.b16 %v489
      %v2022 = vunpack.c.l.b16 %v490
      %v2023 = vunpack.c.h.b16 %v490
      %v2024 = vunpack.c.l.b16 %v491
      %v2025 = vunpack.c.h.b16 %v491
      %v2026 = vunpack.c.l.b16 %v492
      %v2027 = vunpack.c.h.b16 %v492
      %v2028 = vunpack.c.l.b16 %v493
      %v2029 = vunpack.c.h.b16 %v493
      %v2030 = vunpack.c.l.b16 %v494
      %v2031 = vunpack.c.h.b16 %v494
      %v2032 = vunpack.c.l.b16 %v495
      %v2033 = vunpack.c.h.b16 %v495
      %v2034 = vunpack.c.l.b16 %v496
      %v2035 = vunpack.c.h.b16 %v496
      %v2036 = vunpack.c.l.b16 %v497
      %v2037 = vunpack.c.h.b16 %v497
      %v2038 = vunpack.c.l.b16 %v498
      %v2039 = vunpack.c.h.b16 %v498
      %v2040 = vunpack.c.l.b16 %v499
      %v2041 = vunpack.c.h.b16 %v499
      %v2042 = vunpack.c.l.b16 %v500
      %v2043 = vunpack.c.h.b16 %v500
      %v2044 = vunpack.c.l.b16 %v501
      %v2045 = vunpack.c.h.b16 %v501
      %v2046 = vunpack.c.l.b16 %v502
      %v2047 = vunpack.c.h.b16 %v502
      %v2048 = vunpack.c.l.b16 %v503
      %v2049 = vunpack.c.h.b16 %v503
      %v2050 = vunpack.c.l.b16 %v504
      %v2051 = vunpack.c.h.b16 %v504
      %v2052 = vunpack.c.l.b16 %v505
      %v2053 = vunpack.c.h.b16 %v505
      %v2054 = vunpack.c.l.b16 %v506
      %v2055 = vunpack.c.h.b16 %v506
      %v2056 = vunpack.c.l.b16 %v507
      %v2057 = vunpack.c.h.b16 %v507
      %v2058 = vunpack.c.l.b16 %v508
      %v2059 = vunpack.c.h.b16 %v508
      %v2060 = vunpack.c.l.b16 %v509
      %v2061 = vunpack.c.h.b16 %v509
      %v2062 = vunpack.c.l.b16 %v510
      %v2063 = vunpack.c.h.b16 %v510
      %v2064 = vunpack.c.l.b16 %v511
      %v2065 = vunpack.c.h.b16 %v511
      %v2066 = vunpack.c.l.b16 %v512
      %v2067 = vunpack.c.h.b16 %v512
      %v2068 = vunpack.c.l.b16 %v513
      %v2069 = vunpack.c.h.b16 %v513
      %v2070 = vunpack.c.l.b16 %v514
      %v2071 = vunpack.c.h.b16 %v514
      %v2072 = vunpack.c.l.b16 %v515
      %v2073 = vunpack.c.h.b16 %v515
      %v2074 = vunpack.c.l.b16 %v516
      %v2075 = vunpack.c.h.b16 %v516
      %v2076 = vunpack.c.l.b16 %v517
      %v2077 = vunpack.c.h.b16 %v517
      %v2078 = vunpack.c.l.b16 %v518
      %v2079 = vunpack.c.h.b16 %v518
      %v2080 = vunpack.c.l.b16 %v519
      %v2081 = vunpack.c.h.b16 %v519
      %v2082 = vunpack.c.l.b16 %v520
      %v2083 = vunpack.c.h.b16 %v520
      %v2084 = vunpack.c.l.b16 %v521
      %v2085 = vunpack.c.h.b16 %v521
      %v2086 = vunpack.c.l.b16 %v522
      %v2087 = vunpack.c.h.b16 %v522
      %v2088 = vunpack.c.l.b16 %v523
      %v2089 = vunpack.c.h.b16 %v523
      %v2090 = vunpack.c.l.b16 %v524
      %v2091 = vunpack.c.h.b16 %v524
      %v2092 = vunpack.c.l.b16 %v525
      %v2093 = vunpack.c.h.b16 %v525
      %v2094 = vunpack.c.l.b16 %v526
      %v2095 = vunpack.c.h.b16 %v526
      %v2096 = vunpack.c.l.b16 %v527
      %v2097 = vunpack.c.h.b16 %v527
      %v2098 = vunpack.c.l.b16 %v528
      %v2099 = vunpack.c.h.b16 %v528
      %v2100 = vunpack.c.l.b16 %v529
      %v2101 = vunpack.c.h.b16 %v529
      %v2102 = vunpack.c.l.b16 %v530
      %v2103 = vunpack.c.h.b16 %v530
      %v2104 = vunpack.c.l.b16 %v531
      %v2105 = vunpack.c.h.b16 %v531
      %v2106 = vunpack.c.l.b16 %v532
      %v2107 = vunpack.c.h.b16 %v532
      %v2108 = vunpack.c.l.b16 %v533
      %v2109 = vunpack.c.h.b16 %v533
      %v2110 = vunpack.c.l.b16 %v534
      %v2111 = vunpack.c.h.b16 %v534
      %v2112 = vunpack.c.l.b16 %v535
      %v2113 = vunpack.c.h.b16 %v535
      %v2114 = vunpack.c.l.b16 %v536
      %v2115 = vunpack.c.h.b16 %v536
      %v2116 = vunpack.c.l.b16 %v537
      %v2117 = vunpack.c.h.b16 %v537
      %v2118 = vunpack.c.l.b16 %v538
      %v2119 = vunpack.c.h.b16 %v538
      %v2120 = vunpack.c.l.b16 %v539
      %v2121 = vunpack.c.h.b16 %v539
      %v2122 = vunpack.c.l.b16 %v540
      %v2123 = vunpack.c.h.b16 %v540
      %v2124 = vunpack.c.l.b16 %v541
      %v2125 = vunpack.c.h.b16 %v541
      %v2126 = vunpack.c.l.b16 %v542
      %v2127 = vunpack.c.h.b16 %v542
      %v2128 = vunpack.c.l.b16 %v543
      %v2129 = vunpack.c.h.b16 %v543
      %v2130 = vunpack.c.l.b16 %v544
      %v2131 = vunpack.c.h.b16 %v544
      %v2132 = vunpack.c.l.b16 %v545
      %v2133 = vunpack.c.h.b16 %v545
      %v2134 = vunpack.c.l.b16 %v546
      %v2135 = vunpack.c.h.b16 %v546
      %v2136 = vunpack.c.l.b16 %v547
      %v2137 = vunpack.c.h.b16 %v547
      %v2138 = vunpack.c.l.b16 %v548
      %v2139 = vunpack.c.h.b16 %v548
      %v2140 = vunpack.c.l.b16 %v549
      %v2141 = vunpack.c.h.b16 %v549
      %v2142 = vunpack.c.l.b16 %v550
      %v2143 = vunpack.c.h.b16 %v550
      %v2144 = vunpack.c.l.b16 %v551
      %v2145 = vunpack.c.h.b16 %v551
      %v2146 = vunpack.c.l.b16 %v552
      %v2147 = vunpack.c.h.b16 %v552
      %v2148 = vunpack.c.l.b16 %v553
      %v2149 = vunpack.c.h.b16 %v553
      %v2150 = vunpack.c.l.b16 %v554
      %v2151 = vunpack.c.h.b16 %v554
      %v2152 = vunpack.c.l.b16 %v555
      %v2153 = vunpack.c.h.b16 %v555
      %v2154 = vunpack.c.l.b16 %v556
      %v2155 = vunpack.c.h.b16 %v556
      %v2156 = vunpack.c.l.b16 %v557
      %v2157 = vunpack.c.h.b16 %v557
      %v2158 = vunpack.c.l.b16 %v558
      %v2159 = vunpack.c.h.b16 %v558
      %v2160 = vunpack.c.l.b16 %v559
      %v2161 = vunpack.c.h.b16 %v559
      %v2162 = vunpack.c.l.b16 %v560
      %v2163 = vunpack.c.h.b16 %v560
      %v2164 = vunpack.c.l.b16 %v561
      %v2165 = vunpack.c.h.b16 %v561
      %v2166 = vunpack.c.l.b16 %v562
      %v2167 = vunpack.c.h.b16 %v562
      %v2168 = vunpack.c.l.b16 %v563
      %v2169 = vunpack.c.h.b16 %v563
      %v2170 = vunpack.c.l.b16 %v564
      %v2171 = vunpack.c.h.b16 %v564
      %v2172 = vunpack.c.l.b16 %v565
      %v2173 = vunpack.c.h.b16 %v565
      %v2174 = vunpack.c.l.b16 %v566
      %v2175 = vunpack.c.h.b16 %v566
      %v2176 = vunpack.c.l.b16 %v567
      %v2177 = vunpack.c.h.b16 %v567
      %v2178 = vunpack.c.l.b16 %v568
      %v2179 = vunpack.c.h.b16 %v568
      %v2180 = vunpack.c.l.b16 %v569
      %v2181 = vunpack.c.h.b16 %v569
      %v2182 = vunpack.c.l.b16 %v570
      %v2183 = vunpack.c.h.b16 %v570
      %v2184 = vunpack.c.l.b16 %v571
      %v2185 = vunpack.c.h.b16 %v571
      %v2186 = vunpack.c.l.b16 %v572
      %v2187 = vunpack.c.h.b16 %v572
      %v2188 = vunpack.c.l.b16 %v573
      %v2189 = vunpack.c.h.b16 %v573
      %v2190 = vunpack.c.l.b16 %v574
      %v2191 = vunpack.c.h.b16 %v574
      %v2192 = vunpack.c.l.b16 %v575
      %v2193 = vunpack.c.h.b16 %v575
      %v2194 = vunpack.c.l.b16 %v576
      %v2195 = vunpack.c.h.b16 %v576
      %v2196 = vunpack.c.l.b16 %v577
      %v2197 = vunpack.c.h.b16 %v577
      %v2198 = vunpack.c.l.b16 %v578
      %v2199 = vunpack.c.h.b16 %v578
      %v2200 = vunpack.c.l.b16 %v579
      %v2201 = vunpack.c.h.b16 %v579
      %v2202 = vunpack.c.l.b16 %v580
      %v2203 = vunpack.c.h.b16 %v580
      %v2204 = vunpack.c.l.b16 %v581
      %v2205 = vunpack.c.h.b16 %v581
      %v2206 = vunpack.c.l.b16 %v582
      %v2207 = vunpack.c.h.b16 %v582
      %v2208 = vunpack.c.l.b16 %v583
      %v2209 = vunpack.c.h.b16 %v583
      %v2210 = vunpack.c.l.b16 %v584
      %v2211 = vunpack.c.h.b16 %v584
      %v2212 = vunpack.c.l.b16 %v585
      %v2213 = vunpack.c.h.b16 %v585
      %v2214 = vunpack.c.l.b16 %v586
      %v2215 = vunpack.c.h.b16 %v586
      %v2216 = vunpack.c.l.b16 %v587
      %v2217 = vunpack.c.h.b16 %v587
      %v2218 = vunpack.c.l.b16 %v588
      %v2219 = vunpack.c.h.b16 %v588
      %v2220 = vunpack.c.l.b16 %v589
      %v2221 = vunpack.c.h.b16 %v589
      %v2222 = vunpack.c.l.b16 %v590
      %v2223 = vunpack.c.h.b16 %v590
      %v2224 = vunpack.c.l.b16 %v591
      %v2225 = vunpack.c.h.b16 %v591
      %v2226 = vunpack.c.l.b16 %v592
      %v2227 = vunpack.c.h.b16 %v592
      %v2228 = vunpack.c.l.b16 %v593
      %v2229 = vunpack.c.h.b16 %v593
      %v2230 = vunpack.c.l.b16 %v594
      %v2231 = vunpack.c.h.b16 %v594
      %v2232 = vunpack.c.l.b16 %v595
      %v2233 = vunpack.c.h.b16 %v595
      %v2234 = vunpack.c.l.b16 %v596
      %v2235 = vunpack.c.h.b16 %v596
      %v2236 = vunpack.c.l.b16 %v597
      %v2237 = vunpack.c.h.b16 %v597
      %v2238 = vunpack.c.l.b16 %v598
      %v2239 = vunpack.c.h.b16 %v598
      %v2240 = vunpack.c.l.b16 %v599
      %v2241 = vunpack.c.h.b16 %v599
      %v2242 = vunpack.c.l.b16 %v600
      %v2243 = vunpack.c.h.b16 %v600
      %v2244 = vunpack.c.l.b16 %v601
      %v2245 = vunpack.c.h.b16 %v601
      %v2246 = vunpack.c.l.b16 %v602
      %v2247 = vunpack.c.h.b16 %v602
      %v2248 = vunpack.c.l.b16 %v603
      %v2249 = vunpack.c.h.b16 %v603
      %v2250 = vunpack.c.l.b16 %v604
      %v2251 = vunpack.c.h.b16 %v604
      %v2252 = vunpack.c.l.b16 %v605
      %v2253 = vunpack.c.h.b16 %v605
      %v2254 = vunpack.c.l.b16 %v606
      %v2255 = vunpack.c.h.b16 %v606
      %v2256 = vunpack.c.l.b16 %v607
      %v2257 = vunpack.c.h.b16 %v607
      %v2258 = vunpack.c.l.b16 %v608
      %v2259 = vunpack.c.h.b16 %v608
      %v2260 = vunpack.c.l.b16 %v609
      %v2261 = vunpack.c.h.b16 %v609
      %v2262 = vunpack.c.l.b16 %v610
      %v2263 = vunpack.c.h.b16 %v610
      %v2264 = vunpack.c.l.b16 %v611
      %v2265 = vunpack.c.h.b16 %v611
      %v2266 = vunpack.c.l.b16 %v612
      %v2267 = vunpack.c.h.b16 %v612
      %v2268 = vunpack.c.l.b16 %v613
      %v2269 = vunpack.c.h.b16 %v613
      %v2270 = vunpack.c.l.b16 %v614
      %v2271 = vunpack.c.h.b16 %v614
      %v2272 = vunpack.c.l.b16 %v615
      %v2273 = vunpack.c.h.b16 %v615
      %v2274 = vunpack.c.l.b16 %v616
      %v2275 = vunpack.c.h.b16 %v616
      %v2276 = vunpack.c.l.b16 %v617
      %v2277 = vunpack.c.h.b16 %v617
      %v2278 = vunpack.c.l.b16 %v618
      %v2279 = vunpack.c.h.b16 %v618
      %v2280 = vunpack.c.l.b16 %v619
      %v2281 = vunpack.c.h.b16 %v619
      %v2282 = vunpack.c.l.b16 %v620
      %v2283 = vunpack.c.h.b16 %v620
      %v2284 = vunpack.c.l.b16 %v621
      %v2285 = vunpack.c.h.b16 %v621
      %v2286 = vunpack.c.l.b16 %v622
      %v2287 = vunpack.c.h.b16 %v622
      %v2288 = vunpack.c.l.b16 %v623
      %v2289 = vunpack.c.h.b16 %v623
      %v2290 = vunpack.c.l.b16 %v624
      %v2291 = vunpack.c.h.b16 %v624
      %v2292 = vunpack.c.l.b16 %v625
      %v2293 = vunpack.c.h.b16 %v625
      %v2294 = vunpack.c.l.b16 %v626
      %v2295 = vunpack.c.h.b16 %v626
      %v2296 = vunpack.c.l.b16 %v627
      %v2297 = vunpack.c.h.b16 %v627
      %v2298 = vunpack.c.l.b16 %v628
      %v2299 = vunpack.c.h.b16 %v628
      %v2300 = vunpack.c.l.b16 %v629
      %v2301 = vunpack.c.h.b16 %v629
      %v2302 = vunpack.c.l.b16 %v630
      %v2303 = vunpack.c.h.b16 %v630
      %v2304 = vunpack.c.l.b16 %v631
      %v2305 = vunpack.c.h.b16 %v631
      %v2306 = vunpack.c.l.b16 %v632
      %v2307 = vunpack.c.h.b16 %v632
      %v2308 = vunpack.c.l.b16 %v633
      %v2309 = vunpack.c.h.b16 %v633
      %v2310 = vunpack.c.l.b16 %v634
      %v2311 = vunpack.c.h.b16 %v634
      %v2312 = vunpack.c.l.b16 %v635
      %v2313 = vunpack.c.h.b16 %v635
      %v2314 = vunpack.c.l.b16 %v636
      %v2315 = vunpack.c.h.b16 %v636
      %v2316 = vunpack.c.l.b16 %v637
      %v2317 = vunpack.c.h.b16 %v637
      %v2318 = vunpack.c.l.b16 %v638
      %v2319 = vunpack.c.h.b16 %v638
      %v2320 = vunpack.c.l.b16 %v639
      %v2321 = vunpack.c.h.b16 %v639
      %v2322 = vunpack.c.l.b16 %v640
      %v2323 = vunpack.c.h.b16 %v640
      %v2324 = vunpack.c.l.b16 %v641
      %v2325 = vunpack.c.h.b16 %v641
      %v2326 = vunpack.c.l.b16 %v642
      %v2327 = vunpack.c.h.b16 %v642
      %v2328 = vunpack.c.l.b16 %v643
      %v2329 = vunpack.c.h.b16 %v643
      %v2330 = vunpack.c.l.b16 %v644
      %v2331 = vunpack.c.h.b16 %v644
      %v2332 = vunpack.c.l.b16 %v645
      %v2333 = vunpack.c.h.b16 %v645
      %v2334 = vunpack.c.l.b16 %v646
      %v2335 = vunpack.c.h.b16 %v646
      %v2336 = vunpack.c.l.b16 %v647
      %v2337 = vunpack.c.h.b16 %v647
      %v2338 = vunpack.c.l.b16 %v648
      %v2339 = vunpack.c.h.b16 %v648
      %v2340 = vunpack.c.l.b16 %v649
      %v2341 = vunpack.c.h.b16 %v649
      %v2342 = vunpack.c.l.b16 %v650
      %v2343 = vunpack.c.h.b16 %v650
      %v2344 = vunpack.c.l.b16 %v651
      %v2345 = vunpack.c.h.b16 %v651
      %v2346 = vunpack.c.l.b16 %v652
      %v2347 = vunpack.c.h.b16 %v652
      %v2348 = vunpack.c.l.b16 %v653
      %v2349 = vunpack.c.h.b16 %v653
      %v2350 = vunpack.c.l.b16 %v654
      %v2351 = vunpack.c.h.b16 %v654
      %v2352 = vunpack.c.l.b16 %v655
      %v2353 = vunpack.c.h.b16 %v655
      %v2354 = vunpack.c.l.b16 %v656
      %v2355 = vunpack.c.h.b16 %v656
      %v2356 = vunpack.c.l.b16 %v657
      %v2357 = vunpack.c.h.b16 %v657
      %v2358 = vunpack.c.l.b16 %v658
      %v2359 = vunpack.c.h.b16 %v658
      %v2360 = vunpack.c.l.b16 %v659
      %v2361 = vunpack.c.h.b16 %v659
      %v2362 = vunpack.c.l.b16 %v660
      %v2363 = vunpack.c.h.b16 %v660
      %v2364 = vunpack.c.l.b16 %v661
      %v2365 = vunpack.c.h.b16 %v661
      %v2366 = vunpack.c.l.b16 %v662
      %v2367 = vunpack.c.h.b16 %v662
      %v2368 = vunpack.c.l.b16 %v663
      %v2369 = vunpack.c.h.b16 %v663
      %v2370 = vunpack.c.l.b16 %v664
      %v2371 = vunpack.c.h.b16 %v664
      %v2372 = vunpack.c.l.b16 %v665
      %v2373 = vunpack.c.h.b16 %v665
      %v2374 = vunpack.c.l.b16 %v666
      %v2375 = vunpack.c.h.b16 %v666
      %v2376 = vunpack.c.l.b16 %v667
      %v2377 = vunpack.c.h.b16 %v667
      %v2378 = vunpack.c.l.b16 %v668
      %v2379 = vunpack.c.h.b16 %v668
      %v2380 = vunpack.c.l.b16 %v669
      %v2381 = vunpack.c.h.b16 %v669
      %v2382 = vunpack.c.l.b16 %v670
      %v2383 = vunpack.c.h.b16 %v670
      %v2384 = vunpack.c.l.b16 %v671
      %v2385 = vunpack.c.h.b16 %v671
      %v2386 = vunpack.c.l.b16 %v672
      %v2387 = vunpack.c.h.b16 %v672
      %v2388 = vunpack.c.l.b16 %v673
      %v2389 = vunpack.c.h.b16 %v673
      %v2390 = vunpack.c.l.b16 %v674
      %v2391 = vunpack.c.h.b16 %v674
      %v2392 = vunpack.c.l.b16 %v675
      %v2393 = vunpack.c.h.b16 %v675
      %v2394 = vunpack.c.l.b16 %v676
      %v2395 = vunpack.c.h.b16 %v676
      %v2396 = vunpack.c.l.b16 %v677
      %v2397 = vunpack.c.h.b16 %v677
      %v2398 = vunpack.c.l.b16 %v678
      %v2399 = vunpack.c.h.b16 %v678
      %v2400 = vunpack.c.l.b16 %v679
      %v2401 = vunpack.c.h.b16 %v679
      %v2402 = vunpack.c.l.b16 %v680
      %v2403 = vunpack.c.h.b16 %v680
      %v2404 = vunpack.c.l.b16 %v681
      %v2405 = vunpack.c.h.b16 %v681
      %v2406 = vunpack.c.l.b16 %v682
      %v2407 = vunpack.c.h.b16 %v682
      %v2408 = vunpack.c.l.b16 %v683
      %v2409 = vunpack.c.h.b16 %v683
      %v2410 = vunpack.c.l.b16 %v684
      %v2411 = vunpack.c.h.b16 %v684
      %v2412 = vunpack.c.l.b16 %v685
      %v2413 = vunpack.c.h.b16 %v685
      %v2414 = vunpack.c.l.b16 %v686
      %v2415 = vunpack.c.h.b16 %v686
      %v2416 = vunpack.c.l.b16 %v687
      %v2417 = vunpack.c.h.b16 %v687
      %v2418 = vunpack.c.l.b16 %v688
      %v2419 = vunpack.c.h.b16 %v688
      %v2420 = vunpack.c.l.b16 %v689
      %v2421 = vunpack.c.h.b16 %v689
      %v2422 = vunpack.c.l.b16 %v690
      %v2423 = vunpack.c.h.b16 %v690
      %v2424 = vunpack.c.l.b16 %v691
      %v2425 = vunpack.c.h.b16 %v691
      %v2426 = vunpack.c.l.b16 %v692
      %v2427 = vunpack.c.h.b16 %v692
      %v2428 = vunpack.c.l.b16 %v693
      %v2429 = vunpack.c.h.b16 %v693
      %v2430 = vunpack.c.l.b16 %v694
      %v2431 = vunpack.c.h.b16 %v694
      %v2432 = vunpack.c.l.b16 %v695
      %v2433 = vunpack.c.h.b16 %v695
      %v2434 = vunpack.c.l.b16 %v696
      %v2435 = vunpack.c.h.b16 %v696
      %v2436 = vunpack.c.l.b16 %v697
      %v2437 = vunpack.c.h.b16 %v697
      %v2438 = vunpack.c.l.b16 %v698
      %v2439 = vunpack.c.h.b16 %v698
      %v2440 = vunpack.c.l.b16 %v699
      %v2441 = vunpack.c.h.b16 %v699
      %v2442 = vunpack.c.l.b16 %v700
      %v2443 = vunpack.c.h.b16 %v700
      %v2444 = vunpack.c.l.b16 %v701
      %v2445 = vunpack.c.h.b16 %v701
      %v2446 = vunpack.c.l.b16 %v702
      %v2447 = vunpack.c.h.b16 %v702
      %v2448 = vunpack.c.l.b16 %v703
      %v2449 = vunpack.c.h.b16 %v703
      %v2450 = vunpack.c.l.b16 %v704
      %v2451 = vunpack.c.h.b16 %v704
      %v2452 = vunpack.c.l.b16 %v705
      %v2453 = vunpack.c.h.b16 %v705
      %v2454 = vunpack.c.l.b16 %v706
      %v2455 = vunpack.c.h.b16 %v706
      %v2456 = vunpack.c.l.b16 %v707
      %v2457 = vunpack.c.h.b16 %v707
      %v2458 = vunpack.c.l.b16 %v708
      %v2459 = vunpack.c.h.b16 %v708
      %v2460 = vunpack.c.l.b16 %v709
      %v2461 = vunpack.c.h.b16 %v709
      %v2462 = vunpack.c.l.b16 %v710
      %v2463 = vunpack.c.h.b16 %v710
      %v2464 = vunpack.c.l.b16 %v711
      %v2465 = vunpack.c.h.b16 %v711
      %v2466 = vunpack.c.l.b16 %v712
      %v2467 = vunpack.c.h.b16 %v712
      %v2468 = vunpack.c.l.b16 %v713
      %v2469 = vunpack.c.h.b16 %v713
      %v2470 = vunpack.c.l.b16 %v714
      %v2471 = vunpack.c.h.b16 %v714
      %v2472 = vunpack.c.l.b16 %v715
      %v2473 = vunpack.c.h.b16 %v715
      %v2474 = vunpack.c.l.b16 %v716
      %v2475 = vunpack.c.h.b16 %v716
      %v2476 = vunpack.c.l.b16 %v717
      %v2477 = vunpack.c.h.b16 %v717
      %v2478 = vunpack.c.l.b16 %v718
      %v2479 = vunpack.c.h.b16 %v718
      %v2480 = vunpack.c.l.b16 %v719
      %v2481 = vunpack.c.h.b16 %v719
      %v2482 = vunpack.c.l.b16 %v720
      %v2483 = vunpack.c.h.b16 %v720
      %v2484 = vunpack.c.l.b16 %v721
      %v2485 = vunpack.c.h.b16 %v721
      %v2486 = vunpack.c.l.b16 %v722
      %v2487 = vunpack.c.h.b16 %v722
      %v2488 = vunpack.c.l.b16 %v723
      %v2489 = vunpack.c.h.b16 %v723
      %v2490 = vunpack.c.l.b16 %v724
      %v2491 = vunpack.c.h.b16 %v724
      %v2492 = vunpack.c.l.b16 %v725
      %v2493 = vunpack.c.h.b16 %v725
      %v2494 = vunpack.c.l.b16 %v726
      %v2495 = vunpack.c.h.b16 %v726
      %v2496 = vunpack.c.l.b16 %v727
      %v2497 = vunpack.c.h.b16 %v727
      %v2498 = vunpack.c.l.b16 %v728
      %v2499 = vunpack.c.h.b16 %v728
      %v2500 = vunpack.c.l.b16 %v729
      %v2501 = vunpack.c.h.b16 %v729
      %v2502 = vunpack.c.l.b16 %v730
      %v2503 = vunpack.c.h.b16 %v730
      %v2504 = vunpack.c.l.b16 %v731
      %v2505 = vunpack.c.h.b16 %v731
      %v2506 = vunpack.c.l.b16 %v732
      %v2507 = vunpack.c.h.b16 %v732
      %v2508 = vunpack.c.l.b16 %v733
      %v2509 = vunpack.c.h.b16 %v733
      %v2510 = vunpack.c.l.b16 %v734
      %v2511 = vunpack.c.h.b16 %v734
      %v2512 = vunpack.c.l.b16 %v735
      %v2513 = vunpack.c.h.b16 %v735
      %v2514 = vunpack.c.l.b16 %v736
      %v2515 = vunpack.c.h.b16 %v736
      %v2516 = vunpack.c.l.b16 %v737
      %v2517 = vunpack.c.h.b16 %v737
      %v2518 = vunpack.c.l.b16 %v738
      %v2519 = vunpack.c.h.b16 %v738
      %v2520 = vunpack.c.l.b16 %v739
      %v2521 = vunpack.c.h.b16 %v739
      %v2522 = vunpack.c.l.b16 %v740
      %v2523 = vunpack.c.h.b16 %v740
      %v2524 = vunpack.c.l.b16 %v741
      %v2525 = vunpack.c.h.b16 %v741
      %v2526 = vunpack.c.l.b16 %v742
      %v2527 = vunpack.c.h.b16 %v742
      %v2528 = vunpack.c.l.b16 %v743
      %v2529 = vunpack.c.h.b16 %v743
      %v2530 = vunpack.c.l.b16 %v744
      %v2531 = vunpack.c.h.b16 %v744
      %v2532 = vunpack.c.l.b16 %v745
      %v2533 = vunpack.c.h.b16 %v745
      %v2534 = vunpack.c.l.b16 %v746
      %v2535 = vunpack.c.h.b16 %v746
      %v2536 = vunpack.c.l.b16 %v747
      %v2537 = vunpack.c.h.b16 %v747
      %v2538 = vunpack.c.l.b16 %v748
      %v2539 = vunpack.c.h.b16 %v748
      %v2540 = vunpack.c.l.b16 %v749
      %v2541 = vunpack.c.h.b16 %v749
      %v2542 = vunpack.c.l.b16 %v750
      %v2543 = vunpack.c.h.b16 %v750
      %v2544 = vunpack.c.l.b16 %v751
      %v2545 = vunpack.c.h.b16 %v751
      %v2546 = vunpack.c.l.b16 %v752
      %v2547 = vunpack.c.h.b16 %v752
      %v2548 = vunpack.c.l.b16 %v753
      %v2549 = vunpack.c.h.b16 %v753
      %v2550 = vunpack.c.l.b16 %v754
      %v2551 = vunpack.c.h.b16 %v754
      %v2552 = vunpack.c.l.b16 %v755
      %v2553 = vunpack.c.h.b16 %v755
      %v2554 = vunpack.c.l.b16 %v756
      %v2555 = vunpack.c.h.b16 %v756
      %v2556 = vunpack.c.l.b16 %v757
      %v2557 = vunpack.c.h.b16 %v757
      %v2558 = vunpack.c.l.b16 %v758
      %v2559 = vunpack.c.h.b16 %v758
      %v2560 = vunpack.c.l.b16 %v759
      %v2561 = vunpack.c.h.b16 %v759
      %v2562 = vunpack.c.l.b16 %v760
      %v2563 = vunpack.c.h.b16 %v760
      %v2564 = vunpack.c.l.b16 %v761
      %v2565 = vunpack.c.h.b16 %v761
      %v2566 = vunpack.c.l.b16 %v762
      %v2567 = vunpack.c.h.b16 %v762
      %v2568 = vunpack.c.l.b16 %v763
      %v2569 = vunpack.c.h.b16 %v763
      %v2570 = vunpack.c.l.b16 %v764
      %v2571 = vunpack.c.h.b16 %v764
      %v2572 = vunpack.c.l.b16 %v765
      %v2573 = vunpack.c.h.b16 %v765
      %v2574 = vunpack.c.l.b16 %v766
      %v2575 = vunpack.c.h.b16 %v766
      %v2576 = vunpack.c.l.b16 %v767
      %v2577 = vunpack.c.h.b16 %v767
      %v2578 = vunpack.c.l.b16 %v768
      %v2579 = vunpack.c.h.b16 %v768
      %v2580 = vunpack.c.l.b16 %v769
      %v2581 = vunpack.c.h.b16 %v769
      %v2582 = vunpack.c.l.b16 %v770
      %v2583 = vunpack.c.h.b16 %v770
      %v2584 = vunpack.c.l.b16 %v771
      %v2585 = vunpack.c.h.b16 %v771
      %v2586 = vunpack.c.l.b16 %v772
      %v2587 = vunpack.c.h.b16 %v772
      %v2588 = vunpack.c.l.b16 %v773
      %v2589 = vunpack.c.h.b16 %v773
      %v2590 = vunpack.c.l.b16 %v774
      %v2591 = vunpack.c.h.b16 %v774
      %v2592 = vunpack.c.l.b16 %v775
      %v2593 = vunpack.c.h.b16 %v775
      %v2594 = vunpack.c.l.b16 %v776
      %v2595 = vunpack.c.h.b16 %v776
      %v2596 = vunpack.c.l.b16 %v777
      %v2597 = vunpack.c.h.b16 %v777
      %v2598 = vunpack.c.l.b16 %v778
      %v2599 = vunpack.c.h.b16 %v778
      %v2600 = vunpack.c.l.b16 %v779
      %v2601 = vunpack.c.h.b16 %v779
      %v2602 = vunpack.c.l.b16 %v780
      %v2603 = vunpack.c.h.b16 %v780
      %v2604 = vunpack.c.l.b16 %v781
      %v2605 = vunpack.c.h.b16 %v781
      %v2606 = vunpack.c.l.b16 %v782
      %v2607 = vunpack.c.h.b16 %v782
      %v2608 = vunpack.c.l.b16 %v783
      %v2609 = vunpack.c.h.b16 %v783
      %v2610 = vunpack.c.l.b16 %v784
      %v2611 = vunpack.c.h.b16 %v784
      %v2612 = vunpack.c.l.b16 %v785
      %v2613 = vunpack.c.h.b16 %v785
      %v2614 = vunpack.c.l.b16 %v786
      %v2615 = vunpack.c.h.b16 %v786
      %v2616 = vunpack.c.l.b16 %v787
      %v2617 = vunpack.c.h.b16 %v787
      %v2618 = vunpack.c.l.b16 %v788
      %v2619 = vunpack.c.h.b16 %v788
      %v2620 = vunpack.c.l.b16 %v789
      %v2621 = vunpack.c.h.b16 %v789
      %v2622 = vunpack.c.l.b16 %v790
      %v2623 = vunpack.c.h.b16 %v790
      %v2624 = vunpack.c.l.b16 %v791
      %v2625 = vunpack.c.h.b16 %v791
      %v2626 = vunpack.c.l.b16 %v792
      %v2627 = vunpack.c.h.b16 %v792
      %v2628 = vunpack.c.l.b16 %v793
      %v2629 = vunpack.c.h.b16 %v793
      %v2630 = vunpack.c.l.b16 %v794
      %v2631 = vunpack.c.h.b16 %v794
      %v2632 = vunpack.c.l.b16 %v795
      %v2633 = vunpack.c.h.b16 %v795
      %v2634 = vunpack.c.l.b16 %v796
      %v2635 = vunpack.c.h.b16 %v796
      %v2636 = vunpack.c.l.b16 %v797
      %v2637 = vunpack.c.h.b16 %v797
      %v2638 = vpack.c.b16 %v1490, %v1486
      %v2639 = vpack.c.b16 %v1491, %v1487
      %v2640 = vpack.c.b16 %v1492, %v1488
      %v2641 = vpack.c.b16 %v1493, %v1489
      %v2642 = vpack.c.b16 %v1498, %v1494
      %v2643 = vpack.c.b16 %v1499, %v1495
      %v2644 = vpack.c.b16 %v1500, %v1496
      %v2645 = vpack.c.b16 %v1501, %v1497
      %v2646 = vpack.c.b16 %v1506, %v1502
      %v2647 = vpack.c.b16 %v1507, %v1503
      %v2648 = vpack.c.b16 %v1508, %v1504
      %v2649 = vpack.c.b16 %v1509, %v1505
      %v2650 = vpack.c.b16 %v1514, %v1510
      %v2651 = vpack.c.b16 %v1515, %v1511
      %v2652 = vpack.c.b16 %v1516, %v1512
      %v2653 = vpack.c.b16 %v1517, %v1513
      %v2654 = vpack.c.b16 %v1522, %v1518
      %v2655 = vpack.c.b16 %v1523, %v1519
      %v2656 = vpack.c.b16 %v1524, %v1520
      %v2657 = vpack.c.b16 %v1525, %v1521
      %v2658 = vpack.c.b16 %v1530, %v1526
      %v2659 = vpack.c.b16 %v1531, %v1527
      %v2660 = vpack.c.b16 %v1532, %v1528
      %v2661 = vpack.c.b16 %v1533, %v1529
      %v2662 = vpack.c.b16 %v1538, %v1534
      %v2663 = vpack.c.b16 %v1539, %v1535
      %v2664 = vpack.c.b16 %v1540, %v1536
      %v2665 = vpack.c.b16 %v1541, %v1537
      %v2666 = vpack.c.b16 %v1546, %v1542
      %v2667 = vpack.c.b16 %v1547, %v1543
      %v2668 = vpack.c.b16 %v1548, %v1544
      %v2669 = vpack.c.b16 %v1549, %v1545
      %v2670 = vpack.c.b16 %v1554, %v1550
      %v2671 = vpack.c.b16 %v1555, %v1551
      %v2672 = vpack.c.b16 %v1556, %v1552
      %v2673 = vpack.c.b16 %v1557, %v1553
      %v2674 = vpack.c.b16 %v1562, %v1558
      %v2675 = vpack.c.b16 %v1563, %v1559
      %v2676 = vpack.c.b16 %v1564, %v1560
      %v2677 = vpack.c.b16 %v1565, %v1561
      %v2678 = vpack.c.b16 %v1570, %v1566
      %v2679 = vpack.c.b16 %v1571, %v1567
      %v2680 = vpack.c.b16 %v1572, %v1568
      %v2681 = vpack.c.b16 %v1573, %v1569
      %v2682 = vpack.c.b16 %v1578, %v1574
      %v2683 = vpack.c.b16 %v1579, %v1575
      %v2684 = vpack.c.b16 %v1580, %v1576
      %v2685 = vpack.c.b16 %v1581, %v1577
      %v2686 = vpack.c.b16 %v1586, %v1582
      %v2687 = vpack.c.b16 %v1587, %v1583
      %v2688 = vpack.c.b16 %v1588, %v1584
      %v2689 = vpack.c.b16 %v1589, %v1585
      %v2690 = vpack.c.b16 %v1594, %v1590
      %v2691 = vpack.c.b16 %v1595, %v1591
      %v2692 = vpack.c.b16 %v1596, %v1592
      %v2693 = vpack.c.b16 %v1597, %v1593
      %v2694 = vpack.c.b16 %v1602, %v1598
      %v2695 = vpack.c.b16 %v1603, %v1599
      %v2696 = vpack.c.b16 %v1604, %v1600
      %v2697 = vpack.c.b16 %v1605, %v1601
      %v2698 = vpack.c.b16 %v1610, %v1606
      %v2699 = vpack.c.b16 %v1611, %v1607
      %v2700 = vpack.c.b16 %v1612, %v1608
      %v2701 = vpack.c.b16 %v1613, %v1609
      %v2702 = vpack.c.b16 %v1618, %v1614
      %v2703 = vpack.c.b16 %v1619, %v1615
      %v2704 = vpack.c.b16 %v1620, %v1616
      %v2705 = vpack.c.b16 %v1621, %v1617
      %v2706 = vpack.c.b16 %v1626, %v1622
      %v2707 = vpack.c.b16 %v1627, %v1623
      %v2708 = vpack.c.b16 %v1628, %v1624
      %v2709 = vpack.c.b16 %v1629, %v1625
      %v2710 = vpack.c.b16 %v1634, %v1630
      %v2711 = vpack.c.b16 %v1635, %v1631
      %v2712 = vpack.c.b16 %v1636, %v1632
      %v2713 = vpack.c.b16 %v1637, %v1633
      %v2714 = vpack.c.b16 %v1642, %v1638
      %v2715 = vpack.c.b16 %v1643, %v1639
      %v2716 = vpack.c.b16 %v1644, %v1640
      %v2717 = vpack.c.b16 %v1645, %v1641
      %v2718 = vpack.c.b16 %v1650, %v1646
      %v2719 = vpack.c.b16 %v1651, %v1647
      %v2720 = vpack.c.b16 %v1652, %v1648
      %v2721 = vpack.c.b16 %v1653, %v1649
      %v2722 = vpack.c.b16 %v1658, %v1654
      %v2723 = vpack.c.b16 %v1659, %v1655
      %v2724 = vpack.c.b16 %v1660, %v1656
      %v2725 = vpack.c.b16 %v1661, %v1657
      %v2726 = vpack.c.b16 %v1666, %v1662
      %v2727 = vpack.c.b16 %v1667, %v1663
      %v2728 = vpack.c.b16 %v1668, %v1664
      %v2729 = vpack.c.b16 %v1669, %v1665
      %v2730 = vpack.c.b16 %v1674, %v1670
      %v2731 = vpack.c.b16 %v1675, %v1671
      %v2732 = vpack.c.b16 %v1676, %v1672
      %v2733 = vpack.c.b16 %v1677, %v1673
      %v2734 = vpack.c.b16 %v1682, %v1678
      %v2735 = vpack.c.b16 %v1683, %v1679
      %v2736 = vpack.c.b16 %v1684, %v1680
      %v2737 = vpack.c.b16 %v1685, %v1681
      %v2738 = vpack.c.b16 %v1690, %v1686
      %v2739 = vpack.c.b16 %v1691, %v1687
      %v2740 = vpack.c.b16 %v1692, %v1688
      %v2741 = vpack.c.b16 %v1693, %v1689
      %v2742 = vpack.c.b16 %v1698, %v1694
      %v2743 = vpack.c.b16 %v1699, %v1695
      %v2744 = vpack.c.b16 %v1700, %v1696
      %v2745 = vpack.c.b16 %v1701, %v1697
      %v2746 = vpack.c.b16 %v1706, %v1702
      %v2747 = vpack.c.b16 %v1707, %v1703
      %v2748 = vpack.c.b16 %v1708, %v1704
      %v2749 = vpack.c.b16 %v1709, %v1705
      %v2750 = vpack.c.b16 %v1714, %v1710
      %v2751 = vpack.c.b16 %v1715, %v1711
      %v2752 = vpack.c.b16 %v1716, %v1712
      %v2753 = vpack.c.b16 %v1717, %v1713
      %v2754 = vpack.c.b16 %v1722, %v1718
      %v2755 = vpack.c.b16 %v1723, %v1719
      %v2756 = vpack.c.b16 %v1724, %v1720
      %v2757 = vpack.c.b16 %v1725, %v1721
      %v2758 = vpack.c.b16 %v1730, %v1726
      %v2759 = vpack.c.b16 %v1731, %v1727
      %v2760 = vpack.c.b16 %v1732, %v1728
      %v2761 = vpack.c.b16 %v1733, %v1729
      %v2762 = vpack.c.b16 %v1738, %v1734
      %v2763 = vpack.c.b16 %v1739, %v1735
      %v2764 = vpack.c.b16 %v1740, %v1736
      %v2765 = vpack.c.b16 %v1741, %v1737
      %v2766 = vpack.c.b16 %v1746, %v1742
      %v2767 = vpack.c.b16 %v1747, %v1743
      %v2768 = vpack.c.b16 %v1748, %v1744
      %v2769 = vpack.c.b16 %v1749, %v1745
      %v2770 = vpack.c.b16 %v1754, %v1750
      %v2771 = vpack.c.b16 %v1755, %v1751
      %v2772 = vpack.c.b16 %v1756, %v1752
      %v2773 = vpack.c.b16 %v1757, %v1753
      %v2774 = vpack.c.b16 %v1762, %v1758
      %v2775 = vpack.c.b16 %v1763, %v1759
      %v2776 = vpack.c.b16 %v1764, %v1760
      %v2777 = vpack.c.b16 %v1765, %v1761
      %v2778 = vpack.c.b16 %v1770, %v1766
      %v2779 = vpack.c.b16 %v1771, %v1767
      %v2780 = vpack.c.b16 %v1772, %v1768
      %v2781 = vpack.c.b16 %v1773, %v1769
      %v2782 = vpack.c.b16 %v1778, %v1774
      %v2783 = vpack.c.b16 %v1779, %v1775
      %v2784 = vpack.c.b16 %v1780, %v1776
      %v2785 = vpack.c.b16 %v1781, %v1777
      %v2786 = vpack.c.b16 %v1786, %v1782
      %v2787 = vpack.c.b16 %v1787, %v1783
      %v2788 = vpack.c.b16 %v1788, %v1784
      %v2789 = vpack.c.b16 %v1789, %v1785
      %v2790 = vpack.c.b16 %v1794, %v1790
      %v2791 = vpack.c.b16 %v1795, %v1791
      %v2792 = vpack.c.b16 %v1796, %v1792
      %v2793 = vpack.c.b16 %v1797, %v1793
      %v2794 = vpack.c.b16 %v1802, %v1798
      %v2795 = vpack.c.b16 %v1803, %v1799
      %v2796 = vpack.c.b16 %v1804, %v1800
      %v2797 = vpack.c.b16 %v1805, %v1801
      %v2798 = vpack.c.b16 %v1810, %v1806
      %v2799 = vpack.c.b16 %v1811, %v1807
      %v2800 = vpack.c.b16 %v1812, %v1808
      %v2801 = vpack.c.b16 %v1813, %v1809
      %v2802 = vpack.c.b16 %v1818, %v1814
      %v2803 = vpack.c.b16 %v1819, %v1815
      %v2804 = vpack.c.b16 %v1820, %v1816
      %v2805 = vpack.c.b16 %v1821, %v1817
      %v2806 = vpack.c.b16 %v1826, %v1822
      %v2807 = vpack.c.b16 %v1827, %v1823
      %v2808 = vpack.c.b16 %v1828, %v1824
      %v2809 = vpack.c.b16 %v1829, %v1825
      %v2810 = vpack.c.b16 %v1834, %v1830
      %v2811 = vpack.c.b16 %v1835, %v1831
      %v2812 = vpack.c.b16 %v1836, %v1832
      %v2813 = vpack.c.b16 %v1837, %v1833
      %v2814 = vpack.c.b16 %v1842, %v1838
      %v2815 = vpack.c.b16 %v1843, %v1839
      %v2816 = vpack.c.b16 %v1844, %v1840
      %v2817 = vpack.c.b16 %v1845, %v1841
      %v2818 = vpack.c.b16 %v1850, %v1846
      %v2819 = vpack.c.b16 %v1851, %v1847
      %v2820 = vpack.c.b16 %v1852, %v1848
      %v2821 = vpack.c.b16 %v1853, %v1849
      %v2822 = vpack.c.b16 %v1858, %v1854
      %v2823 = vpack.c.b16 %v1859, %v1855
      %v2824 = vpack.c.b16 %v1860, %v1856
      %v2825 = vpack.c.b16 %v1861, %v1857
      %v2826 = vpack.c.b16 %v1866, %v1862
      %v2827 = vpack.c.b16 %v1867, %v1863
      %v2828 = vpack.c.b16 %v1868, %v1864
      %v2829 = vpack.c.b16 %v1869, %v1865
      %v2830 = vpack.c.b16 %v1874, %v1870
      %v2831 = vpack.c.b16 %v1875, %v1871
      %v2832 = vpack.c.b16 %v1876, %v1872
      %v2833 = vpack.c.b16 %v1877, %v1873
      %v2834 = vpack.c.b16 %v1882, %v1878
      %v2835 = vpack.c.b16 %v1883, %v1879
      %v2836 = vpack.c.b16 %v1884, %v1880
      %v2837 = vpack.c.b16 %v1885, %v1881
      %v2838 = vpack.c.b16 %v1890, %v1886
      %v2839 = vpack.c.b16 %v1891, %v1887
      %v2840 = vpack.c.b16 %v1892, %v1888
      %v2841 = vpack.c.b16 %v1893, %v1889
      %v2842 = vpack.c.b16 %v1898, %v1894
      %v2843 = vpack.c.b16 %v1899, %v1895
      %v2844 = vpack.c.b16 %v1900, %v1896
      %v2845 = vpack.c.b16 %v1901, %v1897
      %v2846 = vpack.c.b16 %v1906, %v1902
      %v2847 = vpack.c.b16 %v1907, %v1903
      %v2848 = vpack.c.b16 %v1908, %v1904
      %v2849 = vpack.c.b16 %v1909, %v1905
      %v2850 = vpack.c.b16 %v1914, %v1910
      %v2851 = vpack.c.b16 %v1915, %v1911
      %v2852 = vpack.c.b16 %v1916, %v1912
      %v2853 = vpack.c.b16 %v1917, %v1913
      %v2854 = vpack.c.b16 %v1922, %v1918
      %v2855 = vpack.c.b16 %v1923, %v1919
      %v2856 = vpack.c.b16 %v1924, %v1920
      %v2857 = vpack.c.b16 %v1925, %v1921
      %v2858 = vpack.c.b16 %v1930, %v1926
      %v2859 = vpack.c.b16 %v1931, %v1927
      %v2860 = vpack.c.b16 %v1932, %v1928
      %v2861 = vpack.c.b16 %v1933, %v1929
      %v2862 = vpack.c.b16 %v1938, %v1934
      %v2863 = vpack.c.b16 %v1939, %v1935
      %v2864 = vpack.c.b16 %v1940, %v1936
      %v2865 = vpack.c.b16 %v1941, %v1937
      %v2866 = vpack.c.b16 %v1946, %v1942
      %v2867 = vpack.c.b16 %v1947, %v1943
      %v2868 = vpack.c.b16 %v1948, %v1944
      %v2869 = vpack.c.b16 %v1949, %v1945
      %v2870 = vpack.c.b16 %v1954, %v1950
      %v2871 = vpack.c.b16 %v1955, %v1951
      %v2872 = vpack.c.b16 %v1956, %v1952
      %v2873 = vpack.c.b16 %v1957, %v1953
      %v2874 = vpack.c.b16 %v1962, %v1958
      %v2875 = vpack.c.b16 %v1963, %v1959
      %v2876 = vpack.c.b16 %v1964, %v1960
      %v2877 = vpack.c.b16 %v1965, %v1961
      %v2878 = vpack.c.b16 %v1970, %v1966
      %v2879 = vpack.c.b16 %v1971, %v1967
      %v2880 = vpack.c.b16 %v1972, %v1968
      %v2881 = vpack.c.b16 %v1973, %v1969
      %v2882 = vpack.c.b16 %v1978, %v1974
      %v2883 = vpack.c.b16 %v1979, %v1975
      %v2884 = vpack.c.b16 %v1980, %v1976
      %v2885 = vpack.c.b16 %v1981, %v1977
      %v2886 = vpack.c.b16 %v1986, %v1982
      %v2887 = vpack.c.b16 %v1987, %v1983
      %v2888 = vpack.c.b16 %v1988, %v1984
      %v2889 = vpack.c.b16 %v1989, %v1985
      %v2890 = vpack.c.b16 %v1994, %v1990
      %v2891 = vpack.c.b16 %v1995, %v1991
      %v2892 = vpack.c.b16 %v1996, %v1992
      %v2893 = vpack.c.b16 %v1997, %v1993
      %v2894 = vpack.c.b16 %v2002, %v1998
      %v2895 = vpack.c.b16 %v2003, %v1999
      %v2896 = vpack.c.b16 %v2004, %v2000
      %v2897 = vpack.c.b16 %v2005, %v2001
      %v2898 = vpack.c.b16 %v2010, %v2006
      %v2899 = vpack.c.b16 %v2011, %v2007
      %v2900 = vpack.c.b16 %v2012, %v2008
      %v2901 = vpack.c.b16 %v2013, %v2009
      %v2902 = vpack.c.b16 %v2018, %v2014
      %v2903 = vpack.c.b16 %v2019, %v2015
      %v2904 = vpack.c.b16 %v2020, %v2016
      %v2905 = vpack.c.b16 %v2021, %v2017
      %v2906 = vpack.c.b16 %v2026, %v2022
      %v2907 = vpack.c.b16 %v2027, %v2023
      %v2908 = vpack.c.b16 %v2028, %v2024
      %v2909 = vpack.c.b16 %v2029, %v2025
      %v2910 = vpack.c.b16 %v2034, %v2030
      %v2911 = vpack.c.b16 %v2035, %v2031
      %v2912 = vpack.c.b16 %v2036, %v2032
      %v2913 = vpack.c.b16 %v2037, %v2033
      %v2914 = vpack.c.b16 %v2042, %v2038
      %v2915 = vpack.c.b16 %v2043, %v2039
      %v2916 = vpack.c.b16 %v2044, %v2040
      %v2917 = vpack.c.b16 %v2045, %v2041
      %v2918 = vpack.c.b16 %v2050, %v2046
      %v2919 = vpack.c.b16 %v2051, %v2047
      %v2920 = vpack.c.b16 %v2052, %v2048
      %v2921 = vpack.c.b16 %v2053, %v2049
      %v2922 = vpack.c.b16 %v2058, %v2054
      %v2923 = vpack.c.b16 %v2059, %v2055
      %v2924 = vpack.c.b16 %v2060, %v2056
      %v2925 = vpack.c.b16 %v2061, %v2057
      %v2926 = vpack.c.b16 %v2066, %v2062
      %v2927 = vpack.c.b16 %v2067, %v2063
      %v2928 = vpack.c.b16 %v2068, %v2064
      %v2929 = vpack.c.b16 %v2069, %v2065
      %v2930 = vpack.c.b16 %v2074, %v2070
      %v2931 = vpack.c.b16 %v2075, %v2071
      %v2932 = vpack.c.b16 %v2076, %v2072
      %v2933 = vpack.c.b16 %v2077, %v2073
      %v2934 = vpack.c.b16 %v2082, %v2078
      %v2935 = vpack.c.b16 %v2083, %v2079
      %v2936 = vpack.c.b16 %v2084, %v2080
      %v2937 = vpack.c.b16 %v2085, %v2081
      %v2938 = vpack.c.b16 %v2090, %v2086
      %v2939 = vpack.c.b16 %v2091, %v2087
      %v2940 = vpack.c.b16 %v2092, %v2088
      %v2941 = vpack.c.b16 %v2093, %v2089
      %v2942 = vpack.c.b16 %v2098, %v2094
      %v2943 = vpack.c.b16 %v2099, %v2095
      %v2944 = vpack.c.b16 %v2100, %v2096
      %v2945 = vpack.c.b16 %v2101, %v2097
      %v2946 = vpack.c.b16 %v2106, %v2102
      %v2947 = vpack.c.b16 %v2107, %v2103
      %v2948 = vpack.c.b16 %v2108, %v2104
      %v2949 = vpack.c.b16 %v2109, %v2105
      %v2950 = vpack.c.b16 %v2114, %v2110
      %v2951 = vpack.c.b16 %v2115, %v2111
      %v2952 = vpack.c.b16 %v2116, %v2112
      %v2953 = vpack.c.b16 %v2117, %v2113
      %v2954 = vpack.c.b16 %v2122, %v2118
      %v2955 = vpack.c.b16 %v2123, %v2119
      %v2956 = vpack.c.b16 %v2124, %v2120
      %v2957 = vpack.c.b16 %v2125, %v2121
      %v2958 = vpack.c.b16 %v2130, %v2126
      %v2959 = vpack.c.b16 %v2131, %v2127
      %v2960 = vpack.c.b16 %v2132, %v2128
      %v2961 = vpack.c.b16 %v2133, %v2129
      %v2962 = vpack.c.b16 %v2138, %v2134
      %v2963 = vpack.c.b16 %v2139, %v2135
      %v2964 = vpack.c.b16 %v2140, %v2136
      %v2965 = vpack.c.b16 %v2141, %v2137
      %v2966 = vpack.c.b16 %v2146, %v2142
      %v2967 = vpack.c.b16 %v2147, %v2143
      %v2968 = vpack.c.b16 %v2148, %v2144
      %v2969 = vpack.c.b16 %v2149, %v2145
      %v2970 = vpack.c.b16 %v2154, %v2150
      %v2971 = vpack.c.b16 %v2155, %v2151
      %v2972 = vpack.c.b16 %v2156, %v2152
      %v2973 = vpack.c.b16 %v2157, %v2153
      %v2974 = vpack.c.b16 %v2162, %v2158
      %v2975 = vpack.c.b16 %v2163, %v2159
      %v2976 = vpack.c.b16 %v2164, %v2160
      %v2977 = vpack.c.b16 %v2165, %v2161
      %v2978 = vpack.c.b16 %v2170, %v2166
      %v2979 = vpack.c.b16 %v2171, %v2167
      %v2980 = vpack.c.b16 %v2172, %v2168
      %v2981 = vpack.c.b16 %v2173, %v2169
      %v2982 = vpack.c.b16 %v2178, %v2174
      %v2983 = vpack.c.b16 %v2179, %v2175
      %v2984 = vpack.c.b16 %v2180, %v2176
      %v2985 = vpack.c.b16 %v2181, %v2177
      %v2986 = vpack.c.b16 %v2186, %v2182
      %v2987 = vpack.c.b16 %v2187, %v2183
      %v2988 = vpack.c.b16 %v2188, %v2184
      %v2989 = vpack.c.b16 %v2189, %v2185
      %v2990 = vpack.c.b16 %v2194, %v2190
      %v2991 = vpack.c.b16 %v2195, %v2191
      %v2992 = vpack.c.b16 %v2196, %v2192
      %v2993 = vpack.c.b16 %v2197, %v2193
      %v2994 = vpack.c.b16 %v2202, %v2198
      %v2995 = vpack.c.b16 %v2203, %v2199
      %v2996 = vpack.c.b16 %v2204, %v2200
      %v2997 = vpack.c.b16 %v2205, %v2201
      %v2998 = vpack.c.b16 %v2210, %v2206
      %v2999 = vpack.c.b16 %v2211, %v2207
      %v3000 = vpack.c.b16 %v2212, %v2208
      %v3001 = vpack.c.b16 %v2213, %v2209
      %v3002 = vpack.c.b16 %v2218, %v2214
      %v3003 = vpack.c.b16 %v2219, %v2215
      %v3004 = vpack.c.b16 %v2220, %v2216
      %v3005 = vpack.c.b16 %v2221, %v2217
      %v3006 = vpack.c.b16 %v2226, %v2222
      %v3007 = vpack.c.b16 %v2227, %v2223
      %v3008 = vpack.c.b16 %v2228, %v2224
      %v3009 = vpack.c.b16 %v2229, %v2225
      %v3010 = vpack.c.b16 %v2234, %v2230
      %v3011 = vpack.c.b16 %v2235, %v2231
      %v3012 = vpack.c.b16 %v2236, %v2232
      %v3013 = vpack.c.b16 %v2237, %v2233
      %v3014 = vpack.c.b16 %v2242, %v2238
      %v3015 = vpack.c.b16 %v2243, %v2239
      %v3016 = vpack.c.b16 %v2244, %v2240
      %v3017 = vpack.c.b16 %v2245, %v2241
      %v3018 = vpack.c.b16 %v2250, %v2246
      %v3019 = vpack.c.b16 %v2251, %v2247
      %v3020 = vpack.c.b16 %v2252, %v2248
      %v3021 = vpack.c.b16 %v2253, %v2249
      %v3022 = vpack.c.b16 %v2258, %v2254
      %v3023 = vpack.c.b16 %v2259, %v2255
      %v3024 = vpack.c.b16 %v2260, %v2256
      %v3025 = vpack.c.b16 %v2261, %v2257
      %v3026 = vpack.c.b16 %v2266, %v2262
      %v3027 = vpack.c.b16 %v2267, %v2263
      %v3028 = vpack.c.b16 %v2268, %v2264
      %v3029 = vpack.c.b16 %v2269, %v2265
      %v3030 = vpack.c.b16 %v2274, %v2270
      %v3031 = vpack.c.b16 %v2275, %v2271
      %v3032 = vpack.c.b16 %v2276, %v2272
      %v3033 = vpack.c.b16 %v2277, %v2273
      %v3034 = vpack.c.b16 %v2282, %v2278
      %v3035 = vpack.c.b16 %v2283, %v2279
      %v3036 = vpack.c.b16 %v2284, %v2280
      %v3037 = vpack.c.b16 %v2285, %v2281
      %v3038 = vpack.c.b16 %v2290, %v2286
      %v3039 = vpack.c.b16 %v2291, %v2287
      %v3040 = vpack.c.b16 %v2292, %v2288
      %v3041 = vpack.c.b16 %v2293, %v2289
      %v3042 = vpack.c.b16 %v2298, %v2294
      %v3043 = vpack.c.b16 %v2299, %v2295
      %v3044 = vpack.c.b16 %v2300, %v2296
      %v3045 = vpack.c.b16 %v2301, %v2297
      %v3046 = vpack.c.b16 %v2306, %v2302
      %v3047 = vpack.c.b16 %v2307, %v2303
      %v3048 = vpack.c.b16 %v2308, %v2304
      %v3049 = vpack.c.b16 %v2309, %v2305
      %v3050 = vpack.c.b16 %v2314, %v2310
      %v3051 = vpack.c.b16 %v2315, %v2311
      %v3052 = vpack.c.b16 %v2316, %v2312
      %v3053 = vpack.c.b16 %v2317, %v2313
      %v3054 = vpack.c.b16 %v2322, %v2318
      %v3055 = vpack.c.b16 %v2323, %v2319
      %v3056 = vpack.c.b16 %v2324, %v2320
      %v3057 = vpack.c.b16 %v2325, %v2321
      %v3058 = vpack.c.b16 %v2330, %v2326
      %v3059 = vpack.c.b16 %v2331, %v2327
      %v3060 = vpack.c.b16 %v2332, %v2328
      %v3061 = vpack.c.b16 %v2333, %v2329
      %v3062 = vpack.c.b16 %v2338, %v2334
      %v3063 = vpack.c.b16 %v2339, %v2335
      %v3064 = vpack.c.b16 %v2340, %v2336
      %v3065 = vpack.c.b16 %v2341, %v2337
      %v3066 = vpack.c.b16 %v2346, %v2342
      %v3067 = vpack.c.b16 %v2347, %v2343
      %v3068 = vpack.c.b16 %v2348, %v2344
      %v3069 = vpack.c.b16 %v2349, %v2345
      %v3070 = vpack.c.b16 %v2354, %v2350
      %v3071 = vpack.c.b16 %v2355, %v2351
      %v3072 = vpack.c.b16 %v2356, %v2352
      %v3073 = vpack.c.b16 %v2357, %v2353
      %v3074 = vpack.c.b16 %v2362, %v2358
      %v3075 = vpack.c.b16 %v2363, %v2359
      %v3076 = vpack.c.b16 %v2364, %v2360
      %v3077 = vpack.c.b16 %v2365, %v2361
      %v3078 = vpack.c.b16 %v2370, %v2366
      %v3079 = vpack.c.b16 %v2371, %v2367
      %v3080 = vpack.c.b16 %v2372, %v2368
      %v3081 = vpack.c.b16 %v2373, %v2369
      %v3082 = vpack.c.b16 %v2378, %v2374
      %v3083 = vpack.c.b16 %v2379, %v2375
      %v3084 = vpack.c.b16 %v2380, %v2376
      %v3085 = vpack.c.b16 %v2381, %v2377
      %v3086 = vpack.c.b16 %v2386, %v2382
      %v3087 = vpack.c.b16 %v2387, %v2383
      %v3088 = vpack.c.b16 %v2388, %v2384
      %v3089 = vpack.c.b16 %v2389, %v2385
      %v3090 = vpack.c.b16 %v2394, %v2390
      %v3091 = vpack.c.b16 %v2395, %v2391
      %v3092 = vpack.c.b16 %v2396, %v2392
      %v3093 = vpack.c.b16 %v2397, %v2393
      %v3094 = vpack.c.b16 %v2402, %v2398
      %v3095 = vpack.c.b16 %v2403, %v2399
      %v3096 = vpack.c.b16 %v2404, %v2400
      %v3097 = vpack.c.b16 %v2405, %v2401
      %v3098 = vpack.c.b16 %v2410, %v2406
      %v3099 = vpack.c.b16 %v2411, %v2407
      %v3100 = vpack.c.b16 %v2412, %v2408
      %v3101 = vpack.c.b16 %v2413, %v2409
      %v3102 = vpack.c.b16 %v2418, %v2414
      %v3103 = vpack.c.b16 %v2419, %v2415
      %v3104 = vpack.c.b16 %v2420, %v2416
      %v3105 = vpack.c.b16 %v2421, %v2417
      %v3106 = vpack.c.b16 %v2426, %v2422
      %v3107 = vpack.c.b16 %v2427, %v2423
      %v3108 = vpack.c.b16 %v2428, %v2424
      %v3109 = vpack.c.b16 %v2429, %v2425
      %v3110 = vpack.c.b16 %v2434, %v2430
      %v3111 = vpack.c.b16 %v2435, %v2431
      %v3112 = vpack.c.b16 %v2436, %v2432
      %v3113 = vpack.c.b16 %v2437, %v2433
      %v3114 = vpack.c.b16 %v2442, %v2438
      %v3115 = vpack.c.b16 %v2443, %v2439
      %v3116 = vpack.c.b16 %v2444, %v2440
      %v3117 = vpack.c.b16 %v2445, %v2441
      %v3118 = vpack.c.b16 %v2450, %v2446
      %v3119 = vpack.c.b16 %v2451, %v2447
      %v3120 = vpack.c.b16 %v2452, %v2448
      %v3121 = vpack.c.b16 %v2453, %v2449
      %v3122 = vpack.c.b16 %v2458, %v2454
      %v3123 = vpack.c.b16 %v2459, %v2455
      %v3124 = vpack.c.b16 %v2460, %v2456
      %v3125 = vpack.c.b16 %v2461, %v2457
      %v3126 = vpack.c.b16 %v2466, %v2462
      %v3127 = vpack.c.b16 %v2467, %v2463
      %v3128 = vpack.c.b16 %v2468, %v2464
      %v3129 = vpack.c.b16 %v2469, %v2465
      %v3130 = vpack.c.b16 %v2474, %v2470
      %v3131 = vpack.c.b16 %v2475, %v2471
      %v3132 = vpack.c.b16 %v2476, %v2472
      %v3133 = vpack.c.b16 %v2477, %v2473
      %v3134 = vpack.c.b16 %v2482, %v2478
      %v3135 = vpack.c.b16 %v2483, %v2479
      %v3136 = vpack.c.b16 %v2484, %v2480
      %v3137 = vpack.c.b16 %v2485, %v2481
      %v3138 = vpack.c.b16 %v2490, %v2486
      %v3139 = vpack.c.b16 %v2491, %v2487
      %v3140 = vpack.c.b16 %v2492, %v2488
      %v3141 = vpack.c.b16 %v2493, %v2489
      %v3142 = vpack.c.b16 %v2498, %v2494
      %v3143 = vpack.c.b16 %v2499, %v2495
      %v3144 = vpack.c.b16 %v2500, %v2496
      %v3145 = vpack.c.b16 %v2501, %v2497
      %v3146 = vpack.c.b16 %v2506, %v2502
      %v3147 = vpack.c.b16 %v2507, %v2503
      %v3148 = vpack.c.b16 %v2508, %v2504
      %v3149 = vpack.c.b16 %v2509, %v2505
      %v3150 = vpack.c.b16 %v2514, %v2510
      %v3151 = vpack.c.b16 %v2515, %v2511
      %v3152 = vpack.c.b16 %v2516, %v2512
      %v3153 = vpack.c.b16 %v2517, %v2513
      %v3154 = vpack.c.b16 %v2522, %v2518
      %v3155 = vpack.c.b16 %v2523, %v2519
      %v3156 = vpack.c.b16 %v2524, %v2520
      %v3157 = vpack.c.b16 %v2525, %v2521
      %v3158 = vpack.c.b16 %v2530, %v2526
      %v3159 = vpack.c.b16 %v2531, %v2527
      %v3160 = vpack.c.b16 %v2532, %v2528
      %v3161 = vpack.c.b16 %v2533, %v2529
      %v3162 = vpack.c.b16 %v2538, %v2534
      %v3163 = vpack.c.b16 %v2539, %v2535
      %v3164 = vpack.c.b16 %v2540, %v2536
      %v3165 = vpack.c.b16 %v2541, %v2537
      %v3166 = vpack.c.b16 %v2546, %v2542
      %v3167 = vpack.c.b16 %v2547, %v2543
      %v3168 = vpack.c.b16 %v2548, %v2544
      %v3169 = vpack.c.b16 %v2549, %v2545
      %v3170 = vpack.c.b16 %v2554, %v2550
      %v3171 = vpack.c.b16 %v2555, %v2551
      %v3172 = vpack.c.b16 %v2556, %v2552
      %v3173 = vpack.c.b16 %v2557, %v2553
      %v3174 = vpack.c.b16 %v2562, %v2558
      %v3175 = vpack.c.b16 %v2563, %v2559
      %v3176 = vpack.c.b16 %v2564, %v2560
      %v3177 = vpack.c.b16 %v2565, %v2561
      %v3178 = vpack.c.b16 %v2570, %v2566
      %v3179 = vpack.c.b16 %v2571, %v2567
      %v3180 = vpack.c.b16 %v2572, %v2568
      %v3181 = vpack.c.b16 %v2573, %v2569
      %v3182 = vpack.c.b16 %v2578, %v2574
      %v3183 = vpack.c.b16 %v2579, %v2575
      %v3184 = vpack.c.b16 %v2580, %v2576
      %v3185 = vpack.c.b16 %v2581, %v2577
      %v3186 = vpack.c.b16 %v2586, %v2582
      %v3187 = vpack.c.b16 %v2587, %v2583
      %v3188 = vpack.c.b16 %v2588, %v2584
      %v3189 = vpack.c.b16 %v2589, %v2585
      %v3190 = vpack.c.b16 %v2594, %v2590
      %v3191 = vpack.c.b16 %v2595, %v2591
      %v3192 = vpack.c.b16 %v2596, %v2592
      %v3193 = vpack.c.b16 %v2597, %v2593
      %v3194 = vpack.c.b16 %v2602, %v2598
      %v3195 = vpack.c.b16 %v2603, %v2599
      %v3196 = vpack.c.b16 %v2604, %v2600
      %v3197 = vpack.c.b16 %v2605, %v2601
      %v3198 = vpack.c.b16 %v2610, %v2606
      %v3199 = vpack.c.b16 %v2611, %v2607
      %v3200 = vpack.c.b16 %v2612, %v2608
      %v3201 = vpack.c.b16 %v2613, %v2609
      %v3202 = vpack.c.b16 %v2618, %v2614
      %v3203 = vpack.c.b16 %v2619, %v2615
      %v3204 = vpack.c.b16 %v2620, %v2616
      %v3205 = vpack.c.b16 %v2621, %v2617
      %v3206 = vpack.c.b16 %v2626, %v2622
      %v3207 = vpack.c.b16 %v2627, %v2623
      %v3208 = vpack.c.b16 %v2628, %v2624
      %v3209 = vpack.c.b16 %v2629, %v2625
      %v3210 = vpack.c.b16 %v2634, %v2630
      %v3211 = vpack.c.b16 %v2635, %v2631
      %v3212 = vpack.c.b16 %v2636, %v2632
      %v3213 = vpack.c.b16 %v2637, %v2633
      %3790 = vmatprep.subr.bf16.mxu0 %v2639
      %3791 = vmatpush1.bf16.msra.mxu0 %v2638
      %3792 = vmatprep.subr.bf16.mxu0 %v2643
      %3793 = vmatpush1.bf16.msra.mxu0 %v2642
      %3794 = vmatprep.subr.bf16.mxu0 %v2647
      %3795 = vmatpush1.bf16.msra.mxu0 %v2646
      %3796 = vmatprep.subr.bf16.mxu0 %v2651
      %3797 = vmatpush1.bf16.msra.mxu0 %v2650
      %3798 = vmatprep.subr.bf16.mxu0 %v2655
      %3799 = vmatpush1.bf16.msra.mxu0 %v2654
      %3800 = vmatprep.subr.bf16.mxu0 %v2659
      %3801 = vmatpush1.bf16.msra.mxu0 %v2658
      %3802 = vmatprep.subr.bf16.mxu0 %v2663
      %3803 = vmatpush1.bf16.msra.mxu0 %v2662
      %3804 = vmatprep.subr.bf16.mxu0 %v2667
      %3805 = vmatpush1.bf16.msra.mxu0 %v2666
      %3806 = vmatprep.subr.bf16.mxu0 %v2671
      %3807 = vmatpush1.bf16.msra.mxu0 %v2670
      %3808 = vmatprep.subr.bf16.mxu0 %v2675
      %3809 = vmatpush1.bf16.msra.mxu0 %v2674
      %3810 = vmatprep.subr.bf16.mxu0 %v2679
      %3811 = vmatpush1.bf16.msra.mxu0 %v2678
      %3812 = vmatprep.subr.bf16.mxu0 %v2683
      %3813 = vmatpush1.bf16.msra.mxu0 %v2682
      %3814 = vmatprep.subr.bf16.mxu0 %v2687
      %3815 = vmatpush1.bf16.msra.mxu0 %v2686
      %3816 = vmatprep.subr.bf16.mxu0 %v2691
      %3817 = vmatpush1.bf16.msra.mxu0 %v2690
      %3818 = vmatprep.subr.bf16.mxu0 %v2695
      %3819 = vmatpush1.bf16.msra.mxu0 %v2694
      %3820 = vmatprep.subr.bf16.mxu0 %v2699
      %3821 = vmatpush1.bf16.msra.mxu0 %v2698
      %3822 = vmatprep.mubr.bf16.mxu0 %v875
      %3823 = vmatmul.mubr.bf16.gmra.mrb[0].mxu0 %v874
      %v3824 = vpop.f32.mrb[0].mxu0
      %v3825 = vadd.f32 %v803, %v3824
      %v3826 = vpop.f32.mrb[0].mxu0
      %v3827 = vadd.f32 %v807, %v3826
      %v3828 = vpop.f32.mrb[0].mxu0
      %v3829 = vadd.f32 %v803, %v3828
      %v3830 = vpop.f32.mrb[0].mxu0
      %v3831 = vadd.f32 %v807, %v3830
      %3832 = vdwg.mxu0
      %3833 = vmatprep.subr.bf16.mxu0 %v2703
      %3834 = vmatpush1.bf16.msra.mxu0 %v2702
      %3835 = vmatprep.subr.bf16.mxu0 %v2707
      %3836 = vmatpush1.bf16.msra.mxu0 %v2706
      %3837 = vmatprep.subr.bf16.mxu0 %v2711
      %3838 = vmatpush1.bf16.msra.mxu0 %v2710
      %3839 = vmatprep.subr.bf16.mxu0 %v2715
      %3840 = vmatpush1.bf16.msra.mxu0 %v2714
      %3841 = vmatprep.subr.bf16.mxu0 %v2719
      %3842 = vmatpush1.bf16.msra.mxu0 %v2718
      %3843 = vmatprep.subr.bf16.mxu0 %v2723
      %3844 = vmatpush1.bf16.msra.mxu0 %v2722
      %3845 = vmatprep.subr.bf16.mxu0 %v2727
      %3846 = vmatpush1.bf16.msra.mxu0 %v2726
      %3847 = vmatprep.subr.bf16.mxu0 %v2731
      %3848 = vmatpush1.bf16.msra.mxu0 %v2730
      %3849 = vmatprep.subr.bf16.mxu0 %v2735
      %3850 = vmatpush1.bf16.msra.mxu0 %v2734
      %3851 = vmatprep.subr.bf16.mxu0 %v2739
      %3852 = vmatpush1.bf16.msra.mxu0 %v2738
      %3853 = vmatprep.subr.bf16.mxu0 %v2743
      %3854 = vmatpush1.bf16.msra.mxu0 %v2742
      %3855 = vmatprep.subr.bf16.mxu0 %v2747
      %3856 = vmatpush1.bf16.msra.mxu0 %v2746
      %3857 = vmatprep.subr.bf16.mxu0 %v2751
      %3858 = vmatpush1.bf16.msra.mxu0 %v2750
      %3859 = vmatprep.subr.bf16.mxu0 %v2755
      %3860 = vmatpush1.bf16.msra.mxu0 %v2754
      %3861 = vmatprep.subr.bf16.mxu0 %v2759
      %3862 = vmatpush1.bf16.msra.mxu0 %v2758
      %3863 = vmatprep.subr.bf16.mxu0 %v2763
      %3864 = vmatpush1.bf16.msra.mxu0 %v2762
      %3865 = vmatprep.mubr.bf16.mxu0 %v877
      %3866 = vmatmul.mubr.bf16.gmra.mrb[0].mxu0 %v876
      %v3867 = vpop.f32.mrb[0].mxu0
      %v3868 = vadd.f32 %v3825, %v3867
      %v3869 = vpop.f32.mrb[0].mxu0
      %v3870 = vadd.f32 %v3827, %v3869
      %v3871 = vpop.f32.mrb[0].mxu0
      %v3872 = vadd.f32 %v3829, %v3871
      %v3873 = vpop.f32.mrb[0].mxu0
      %v3874 = vadd.f32 %v3831, %v3873
      %3875 = vdwg.mxu0
      %3876 = vmatprep.subr.bf16.mxu0 %v2767
      %3877 = vmatpush1.bf16.msra.mxu0 %v2766
      %3878 = vmatprep.subr.bf16.mxu0 %v2771
      %3879 = vmatpush1.bf16.msra.mxu0 %v2770
      %3880 = vmatprep.subr.bf16.mxu0 %v2775
      %3881 = vmatpush1.bf16.msra.mxu0 %v2774
      %3882 = vmatprep.subr.bf16.mxu0 %v2779
      %3883 = vmatpush1.bf16.msra.mxu0 %v2778
      %3884 = vmatprep.subr.bf16.mxu0 %v2783
      %3885 = vmatpush1.bf16.msra.mxu0 %v2782
      %3886 = vmatprep.subr.bf16.mxu0 %v2787
      %3887 = vmatpush1.bf16.msra.mxu0 %v2786
      %3888 = vmatprep.subr.bf16.mxu0 %v2791
      %3889 = vmatpush1.bf16.msra.mxu0 %v2790
      %3890 = vmatprep.subr.bf16.mxu0 %v2795
      %3891 = vmatpush1.bf16.msra.mxu0 %v2794
      %3892 = vmatprep.subr.bf16.mxu0 %v2799
      %3893 = vmatpush1.bf16.msra.mxu0 %v2798
      %3894 = vmatprep.subr.bf16.mxu0 %v2803
      %3895 = vmatpush1.bf16.msra.mxu0 %v2802
      %3896 = vmatprep.subr.bf16.mxu0 %v2807
      %3897 = vmatpush1.bf16.msra.mxu0 %v2806
      %3898 = vmatprep.subr.bf16.mxu0 %v2811
      %3899 = vmatpush1.bf16.msra.mxu0 %v2810
      %3900 = vmatprep.subr.bf16.mxu0 %v2815
      %3901 = vmatpush1.bf16.msra.mxu0 %v2814
      %3902 = vmatprep.subr.bf16.mxu0 %v2819
      %3903 = vmatpush1.bf16.msra.mxu0 %v2818
      %3904 = vmatprep.subr.bf16.mxu0 %v2823
      %3905 = vmatpush1.bf16.msra.mxu0 %v2822
      %3906 = vmatprep.subr.bf16.mxu0 %v2827
      %3907 = vmatpush1.bf16.msra.mxu0 %v2826
      %3908 = vmatprep.mubr.bf16.mxu0 %v879
      %3909 = vmatmul.mubr.bf16.gmra.mrb[0].mxu0 %v878
      %v3910 = vpop.f32.mrb[0].mxu0
      %v3911 = vadd.f32 %v3868, %v3910
      %v3912 = vpop.f32.mrb[0].mxu0
      %v3913 = vadd.f32 %v3870, %v3912
      %v3914 = vpop.f32.mrb[0].mxu0
      %v3915 = vadd.f32 %v3872, %v3914
      %v3916 = vpop.f32.mrb[0].mxu0
      %v3917 = vadd.f32 %v3874, %v3916
      %3918 = vdwg.mxu0
      %3919 = vmatprep.subr.bf16.mxu0 %v2831
      %3920 = vmatpush1.bf16.msra.mxu0 %v2830
      %3921 = vmatprep.subr.bf16.mxu0 %v2835
      %3922 = vmatpush1.bf16.msra.mxu0 %v2834
      %3923 = vmatprep.subr.bf16.mxu0 %v2839
      %3924 = vmatpush1.bf16.msra.mxu0 %v2838
      %3925 = vmatprep.subr.bf16.mxu0 %v2843
      %3926 = vmatpush1.bf16.msra.mxu0 %v2842
      %3927 = vmatprep.subr.bf16.mxu0 %v2847
      %3928 = vmatpush1.bf16.msra.mxu0 %v2846
      %3929 = vmatprep.subr.bf16.mxu0 %v2851
      %3930 = vmatpush1.bf16.msra.mxu0 %v2850
      %3931 = vmatprep.subr.bf16.mxu0 %v2855
      %3932 = vmatpush1.bf16.msra.mxu0 %v2854
      %3933 = vmatprep.subr.bf16.mxu0 %v2859
      %3934 = vmatpush1.bf16.msra.mxu0 %v2858
      %3935 = vmatprep.subr.bf16.mxu0 %v2863
      %3936 = vmatpush1.bf16.msra.mxu0 %v2862
      %3937 = vmatprep.subr.bf16.mxu0 %v2867
      %3938 = vmatpush1.bf16.msra.mxu0 %v2866
      %3939 = vmatprep.subr.bf16.mxu0 %v2871
      %3940 = vmatpush1.bf16.msra.mxu0 %v2870
      %3941 = vmatprep.subr.bf16.mxu0 %v2875
      %3942 = vmatpush1.bf16.msra.mxu0 %v2874
      %3943 = vmatprep.subr.bf16.mxu0 %v2879
      %3944 = vmatpush1.bf16.msra.mxu0 %v2878
      %3945 = vmatprep.subr.bf16.mxu0 %v2883
      %3946 = vmatpush1.bf16.msra.mxu0 %v2882
      %3947 = vmatprep.subr.bf16.mxu0 %v2887
      %3948 = vmatpush1.bf16.msra.mxu0 %v2886
      %3949 = vmatprep.subr.bf16.mxu0 %v2891
      %3950 = vmatpush1.bf16.msra.mxu0 %v2890
      %3951 = vmatprep.mubr.bf16.mxu0 %v881
      %3952 = vmatmul.mubr.bf16.gmra.mrb[0].mxu0 %v880
      %v3953 = vpop.f32.mrb[0].mxu0
      %v3954 = vadd.f32 %v3911, %v3953
      %v3955 = vpop.f32.mrb[0].mxu0
      %v3956 = vadd.f32 %v3913, %v3955
      %v3957 = vpop.f32.mrb[0].mxu0
      %v3958 = vadd.f32 %v3915, %v3957
      %v3959 = vpop.f32.mrb[0].mxu0
      %v3960 = vadd.f32 %v3917, %v3959
      %3961 = vdwg.mxu0
      %3962 = vmatprep.subr.bf16.mxu0 %v2895
      %3963 = vmatpush1.bf16.msra.mxu0 %v2894
      %3964 = vmatprep.subr.bf16.mxu0 %v2899
      %3965 = vmatpush1.bf16.msra.mxu0 %v2898
      %3966 = vmatprep.subr.bf16.mxu0 %v2903
      %3967 = vmatpush1.bf16.msra.mxu0 %v2902
      %3968 = vmatprep.subr.bf16.mxu0 %v2907
      %3969 = vmatpush1.bf16.msra.mxu0 %v2906
      %3970 = vmatprep.subr.bf16.mxu0 %v2911
      %3971 = vmatpush1.bf16.msra.mxu0 %v2910
      %3972 = vmatprep.subr.bf16.mxu0 %v2915
      %3973 = vmatpush1.bf16.msra.mxu0 %v2914
      %3974 = vmatprep.subr.bf16.mxu0 %v2919
      %3975 = vmatpush1.bf16.msra.mxu0 %v2918
      %3976 = vmatprep.subr.bf16.mxu0 %v2923
      %3977 = vmatpush1.bf16.msra.mxu0 %v2922
      %3978 = vmatprep.subr.bf16.mxu0 %v2927
      %3979 = vmatpush1.bf16.msra.mxu0 %v2926
      %3980 = vmatprep.subr.bf16.mxu0 %v2931
      %3981 = vmatpush1.bf16.msra.mxu0 %v2930
      %3982 = vmatprep.subr.bf16.mxu0 %v2935
      %3983 = vmatpush1.bf16.msra.mxu0 %v2934
      %3984 = vmatprep.subr.bf16.mxu0 %v2939
      %3985 = vmatpush1.bf16.msra.mxu0 %v2938
      %3986 = vmatprep.subr.bf16.mxu0 %v2943
      %3987 = vmatpush1.bf16.msra.mxu0 %v2942
      %3988 = vmatprep.subr.bf16.mxu0 %v2947
      %3989 = vmatpush1.bf16.msra.mxu0 %v2946
      %3990 = vmatprep.subr.bf16.mxu0 %v2951
      %3991 = vmatpush1.bf16.msra.mxu0 %v2950
      %3992 = vmatprep.subr.bf16.mxu0 %v2955
      %3993 = vmatpush1.bf16.msra.mxu0 %v2954
      %3994 = vmatprep.mubr.bf16.mxu0 %v883
      %3995 = vmatmul.mubr.bf16.gmra.mrb[0].mxu0 %v882
      %v3996 = vpop.f32.mrb[0].mxu0
      %v3997 = vadd.f32 %v3954, %v3996
      %v3998 = vpop.f32.mrb[0].mxu0
      %v3999 = vadd.f32 %v3956, %v3998
      %v4000 = vpop.f32.mrb[0].mxu0
      %v4001 = vadd.f32 %v3958, %v4000
      %v4002 = vpop.f32.mrb[0].mxu0
      %v4003 = vadd.f32 %v3960, %v4002
      %4004 = vdwg.mxu0
      %4005 = vmatprep.subr.bf16.mxu0 %v2959
      %4006 = vmatpush1.bf16.msra.mxu0 %v2958
      %4007 = vmatprep.subr.bf16.mxu0 %v2963
      %4008 = vmatpush1.bf16.msra.mxu0 %v2962
      %4009 = vmatprep.subr.bf16.mxu0 %v2967
      %4010 = vmatpush1.bf16.msra.mxu0 %v2966
      %4011 = vmatprep.subr.bf16.mxu0 %v2971
      %4012 = vmatpush1.bf16.msra.mxu0 %v2970
      %4013 = vmatprep.subr.bf16.mxu0 %v2975
      %4014 = vmatpush1.bf16.msra.mxu0 %v2974
      %4015 = vmatprep.subr.bf16.mxu0 %v2979
      %4016 = vmatpush1.bf16.msra.mxu0 %v2978
      %4017 = vmatprep.subr.bf16.mxu0 %v2983
      %4018 = vmatpush1.bf16.msra.mxu0 %v2982
      %4019 = vmatprep.subr.bf16.mxu0 %v2987
      %4020 = vmatpush1.bf16.msra.mxu0 %v2986
      %4021 = vmatprep.subr.bf16.mxu0 %v2991
      %4022 = vmatpush1.bf16.msra.mxu0 %v2990
      %4023 = vmatprep.subr.bf16.mxu0 %v2995
      %4024 = vmatpush1.bf16.msra.mxu0 %v2994
      %4025 = vmatprep.subr.bf16.mxu0 %v2999
      %4026 = vmatpush1.bf16.msra.mxu0 %v2998
      %4027 = vmatprep.subr.bf16.mxu0 %v3003
      %4028 = vmatpush1.bf16.msra.mxu0 %v3002
      %4029 = vmatprep.subr.bf16.mxu0 %v3007
      %4030 = vmatpush1.bf16.msra.mxu0 %v3006
      %4031 = vmatprep.subr.bf16.mxu0 %v3011
      %4032 = vmatpush1.bf16.msra.mxu0 %v3010
      %4033 = vmatprep.subr.bf16.mxu0 %v3015
      %4034 = vmatpush1.bf16.msra.mxu0 %v3014
      %4035 = vmatprep.subr.bf16.mxu0 %v3019
      %4036 = vmatpush1.bf16.msra.mxu0 %v3018
      %4037 = vmatprep.mubr.bf16.mxu0 %v885
      %4038 = vmatmul.mubr.bf16.gmra.mrb[0].mxu0 %v884
      %v4039 = vpop.f32.mrb[0].mxu0
      %v4040 = vadd.f32 %v3997, %v4039
      %v4041 = vpop.f32.mrb[0].mxu0
      %v4042 = vadd.f32 %v3999, %v4041
      %v4043 = vpop.f32.mrb[0].mxu0
      %v4044 = vadd.f32 %v4001, %v4043
      %v4045 = vpop.f32.mrb[0].mxu0
      %v4046 = vadd.f32 %v4003, %v4045
      %4047 = vdwg.mxu0
      %4048 = vmatprep.subr.bf16.mxu0 %v3023
      %4049 = vmatpush1.bf16.msra.mxu0 %v3022
      %4050 = vmatprep.subr.bf16.mxu0 %v3027
      %4051 = vmatpush1.bf16.msra.mxu0 %v3026
      %4052 = vmatprep.subr.bf16.mxu0 %v3031
      %4053 = vmatpush1.bf16.msra.mxu0 %v3030
      %4054 = vmatprep.subr.bf16.mxu0 %v3035
      %4055 = vmatpush1.bf16.msra.mxu0 %v3034
      %4056 = vmatprep.subr.bf16.mxu0 %v3039
      %4057 = vmatpush1.bf16.msra.mxu0 %v3038
      %4058 = vmatprep.subr.bf16.mxu0 %v3043
      %4059 = vmatpush1.bf16.msra.mxu0 %v3042
      %4060 = vmatprep.subr.bf16.mxu0 %v3047
      %4061 = vmatpush1.bf16.msra.mxu0 %v3046
      %4062 = vmatprep.subr.bf16.mxu0 %v3051
      %4063 = vmatpush1.bf16.msra.mxu0 %v3050
      %4064 = vmatprep.subr.bf16.mxu0 %v3055
      %4065 = vmatpush1.bf16.msra.mxu0 %v3054
      %4066 = vmatprep.subr.bf16.mxu0 %v3059
      %4067 = vmatpush1.bf16.msra.mxu0 %v3058
      %4068 = vmatprep.subr.bf16.mxu0 %v3063
      %4069 = vmatpush1.bf16.msra.mxu0 %v3062
      %4070 = vmatprep.subr.bf16.mxu0 %v3067
      %4071 = vmatpush1.bf16.msra.mxu0 %v3066
      %4072 = vmatprep.subr.bf16.mxu0 %v3071
      %4073 = vmatpush1.bf16.msra.mxu0 %v3070
      %4074 = vmatprep.subr.bf16.mxu0 %v3075
      %4075 = vmatpush1.bf16.msra.mxu0 %v3074
      %4076 = vmatprep.subr.bf16.mxu0 %v3079
      %4077 = vmatpush1.bf16.msra.mxu0 %v3078
      %4078 = vmatprep.subr.bf16.mxu0 %v3083
      %4079 = vmatpush1.bf16.msra.mxu0 %v3082
      %4080 = vmatprep.mubr.bf16.mxu0 %v887
      %4081 = vmatmul.mubr.bf16.gmra.mrb[0].mxu0 %v886
      %v4082 = vpop.f32.mrb[0].mxu0
      %v4083 = vadd.f32 %v4040, %v4082
      %v4084 = vpop.f32.mrb[0].mxu0
      %v4085 = vadd.f32 %v4042, %v4084
      %v4086 = vpop.f32.mrb[0].mxu0
      %v4087 = vadd.f32 %v4044, %v4086
      %v4088 = vpop.f32.mrb[0].mxu0
      %v4089 = vadd.f32 %v4046, %v4088
      %4090 = vdwg.mxu0
      %4091 = vmatprep.subr.bf16.mxu0 %v3087
      %4092 = vmatpush1.bf16.msra.mxu0 %v3086
      %4093 = vmatprep.subr.bf16.mxu0 %v3091
      %4094 = vmatpush1.bf16.msra.mxu0 %v3090
      %4095 = vmatprep.subr.bf16.mxu0 %v3095
      %4096 = vmatpush1.bf16.msra.mxu0 %v3094
      %4097 = vmatprep.subr.bf16.mxu0 %v3099
      %4098 = vmatpush1.bf16.msra.mxu0 %v3098
      %4099 = vmatprep.subr.bf16.mxu0 %v3103
      %4100 = vmatpush1.bf16.msra.mxu0 %v3102
      %4101 = vmatprep.subr.bf16.mxu0 %v3107
      %4102 = vmatpush1.bf16.msra.mxu0 %v3106
      %4103 = vmatprep.subr.bf16.mxu0 %v3111
      %4104 = vmatpush1.bf16.msra.mxu0 %v3110
      %4105 = vmatprep.subr.bf16.mxu0 %v3115
      %4106 = vmatpush1.bf16.msra.mxu0 %v3114
      %4107 = vmatprep.subr.bf16.mxu0 %v3119
      %4108 = vmatpush1.bf16.msra.mxu0 %v3118
      %4109 = vmatprep.subr.bf16.mxu0 %v3123
      %4110 = vmatpush1.bf16.msra.mxu0 %v3122
      %4111 = vmatprep.subr.bf16.mxu0 %v3127
      %4112 = vmatpush1.bf16.msra.mxu0 %v3126
      %4113 = vmatprep.subr.bf16.mxu0 %v3131
      %4114 = vmatpush1.bf16.msra.mxu0 %v3130
      %4115 = vmatprep.subr.bf16.mxu0 %v3135
      %4116 = vmatpush1.bf16.msra.mxu0 %v3134
      %4117 = vmatprep.subr.bf16.mxu0 %v3139
      %4118 = vmatpush1.bf16.msra.mxu0 %v3138
      %4119 = vmatprep.subr.bf16.mxu0 %v3143
      %4120 = vmatpush1.bf16.msra.mxu0 %v3142
      %4121 = vmatprep.subr.bf16.mxu0 %v3147
      %4122 = vmatpush1.bf16.msra.mxu0 %v3146
      %4123 = vmatprep.mubr.bf16.mxu0 %v889
      %4124 = vmatmul.mubr.bf16.gmra.mrb[0].mxu0 %v888
      %v4125 = vpop.f32.mrb[0].mxu0
      %v4126 = vadd.f32 %v4083, %v4125
      %v4127 = vpop.f32.mrb[0].mxu0
      %v4128 = vadd.f32 %v4085, %v4127
      %v4129 = vpop.f32.mrb[0].mxu0
      %v4130 = vadd.f32 %v4087, %v4129
      %v4131 = vpop.f32.mrb[0].mxu0
      %v4132 = vadd.f32 %v4089, %v4131
      %4133 = vdwg.mxu0
      %4134 = vmatprep.subr.bf16.mxu0 %v3151
      %4135 = vmatpush1.bf16.msra.mxu0 %v3150
      %4136 = vmatprep.subr.bf16.mxu0 %v3155
      %4137 = vmatpush1.bf16.msra.mxu0 %v3154
      %4138 = vmatprep.subr.bf16.mxu0 %v3159
      %4139 = vmatpush1.bf16.msra.mxu0 %v3158
      %4140 = vmatprep.subr.bf16.mxu0 %v3163
      %4141 = vmatpush1.bf16.msra.mxu0 %v3162
      %4142 = vmatprep.subr.bf16.mxu0 %v3167
      %4143 = vmatpush1.bf16.msra.mxu0 %v3166
      %4144 = vmatprep.subr.bf16.mxu0 %v3171
      %4145 = vmatpush1.bf16.msra.mxu0 %v3170
      %4146 = vmatprep.subr.bf16.mxu0 %v3175
      %4147 = vmatpush1.bf16.msra.mxu0 %v3174
      %4148 = vmatprep.subr.bf16.mxu0 %v3179
      %4149 = vmatpush1.bf16.msra.mxu0 %v3178
      %4150 = vmatprep.subr.bf16.mxu0 %v3183
      %4151 = vmatpush1.bf16.msra.mxu0 %v3182
      %4152 = vmatprep.subr.bf16.mxu0 %v3187
      %4153 = vmatpush1.bf16.msra.mxu0 %v3186
      %4154 = vmatprep.subr.bf16.mxu0 %v3191
      %4155 = vmatpush1.bf16.msra.mxu0 %v3190
      %4156 = vmatprep.subr.bf16.mxu0 %v3195
      %4157 = vmatpush1.bf16.msra.mxu0 %v3194
      %4158 = vmatprep.subr.bf16.mxu0 %v3199
      %4159 = vmatpush1.bf16.msra.mxu0 %v3198
      %4160 = vmatprep.subr.bf16.mxu0 %v3203
      %4161 = vmatpush1.bf16.msra.mxu0 %v3202
      %4162 = vmatprep.subr.bf16.mxu0 %v3207
      %4163 = vmatpush1.bf16.msra.mxu0 %v3206
      %4164 = vmatprep.subr.bf16.mxu0 %v3211
      %4165 = vmatpush1.bf16.msra.mxu0 %v3210
      %4166 = vmatprep.mubr.bf16.mxu0 %v891
      %4167 = vmatmul.mubr.bf16.gmra.mrb[0].mxu0 %v890
      %v4168 = vpop.f32.mrb[0].mxu0
      %v4169 = vadd.f32 %v4126, %v4168
      %v4170 = vpop.f32.mrb[0].mxu0
      %v4171 = vadd.f32 %v4128, %v4170
      %v4172 = vpop.f32.mrb[0].mxu0
      %v4173 = vadd.f32 %v4130, %v4172
      %v4174 = vpop.f32.mrb[0].mxu0
      %v4175 = vadd.f32 %v4132, %v4174
      %4176 = vdwg.mxu0
      %4177 = vmatprep.subr.bf16.mxu0 %v2641
      %4178 = vmatpush1.bf16.msra.mxu0 %v2640
      %4179 = vmatprep.subr.bf16.mxu0 %v2645
      %4180 = vmatpush1.bf16.msra.mxu0 %v2644
      %4181 = vmatprep.subr.bf16.mxu0 %v2649
      %4182 = vmatpush1.bf16.msra.mxu0 %v2648
      %4183 = vmatprep.subr.bf16.mxu0 %v2653
      %4184 = vmatpush1.bf16.msra.mxu0 %v2652
      %4185 = vmatprep.subr.bf16.mxu0 %v2657
      %4186 = vmatpush1.bf16.msra.mxu0 %v2656
      %4187 = vmatprep.subr.bf16.mxu0 %v2661
      %4188 = vmatpush1.bf16.msra.mxu0 %v2660
      %4189 = vmatprep.subr.bf16.mxu0 %v2665
      %4190 = vmatpush1.bf16.msra.mxu0 %v2664
      %4191 = vmatprep.subr.bf16.mxu0 %v2669
      %4192 = vmatpush1.bf16.msra.mxu0 %v2668
      %4193 = vmatprep.subr.bf16.mxu0 %v2673
      %4194 = vmatpush1.bf16.msra.mxu0 %v2672
      %4195 = vmatprep.subr.bf16.mxu0 %v2677
      %4196 = vmatpush1.bf16.msra.mxu0 %v2676
      %4197 = vmatprep.subr.bf16.mxu0 %v2681
      %4198 = vmatpush1.bf16.msra.mxu0 %v2680
      %4199 = vmatprep.subr.bf16.mxu0 %v2685
      %4200 = vmatpush1.bf16.msra.mxu0 %v2684
      %4201 = vmatprep.subr.bf16.mxu0 %v2689
      %4202 = vmatpush1.bf16.msra.mxu0 %v2688
      %4203 = vmatprep.subr.bf16.mxu0 %v2693
      %4204 = vmatpush1.bf16.msra.mxu0 %v2692
      %4205 = vmatprep.subr.bf16.mxu0 %v2697
      %4206 = vmatpush1.bf16.msra.mxu0 %v2696
      %4207 = vmatprep.subr.bf16.mxu0 %v2701
      %4208 = vmatpush1.bf16.msra.mxu0 %v2700
      %4209 = vmatprep.mubr.bf16.mxu0 %v875
      %4210 = vmatmul.mubr.bf16.gmra.mrb[0].mxu0 %v874
      %v4211 = vpop.f32.mrb[0].mxu0
      %v4212 = vadd.f32 %v811, %v4211
      %v4213 = vpop.f32.mrb[0].mxu0
      %v4214 = vadd.f32 %v815, %v4213
      %v4215 = vpop.f32.mrb[0].mxu0
      %v4216 = vadd.f32 %v811, %v4215
      %v4217 = vpop.f32.mrb[0].mxu0
      %v4218 = vadd.f32 %v815, %v4217
      %4219 = vdwg.mxu0
      %4220 = vmatprep.subr.bf16.mxu0 %v2705
      %4221 = vmatpush1.bf16.msra.mxu0 %v2704
      %4222 = vmatprep.subr.bf16.mxu0 %v2709
      %4223 = vmatpush1.bf16.msra.mxu0 %v2708
      %4224 = vmatprep.subr.bf16.mxu0 %v2713
      %4225 = vmatpush1.bf16.msra.mxu0 %v2712
      %4226 = vmatprep.subr.bf16.mxu0 %v2717
      %4227 = vmatpush1.bf16.msra.mxu0 %v2716
      %4228 = vmatprep.subr.bf16.mxu0 %v2721
      %4229 = vmatpush1.bf16.msra.mxu0 %v2720
      %4230 = vmatprep.subr.bf16.mxu0 %v2725
      %4231 = vmatpush1.bf16.msra.mxu0 %v2724
      %4232 = vmatprep.subr.bf16.mxu0 %v2729
      %4233 = vmatpush1.bf16.msra.mxu0 %v2728
      %4234 = vmatprep.subr.bf16.mxu0 %v2733
      %4235 = vmatpush1.bf16.msra.mxu0 %v2732
      %4236 = vmatprep.subr.bf16.mxu0 %v2737
      %4237 = vmatpush1.bf16.msra.mxu0 %v2736
      %4238 = vmatprep.subr.bf16.mxu0 %v2741
      %4239 = vmatpush1.bf16.msra.mxu0 %v2740
      %4240 = vmatprep.subr.bf16.mxu0 %v2745
      %4241 = vmatpush1.bf16.msra.mxu0 %v2744
      %4242 = vmatprep.subr.bf16.mxu0 %v2749
      %4243 = vmatpush1.bf16.msra.mxu0 %v2748
      %4244 = vmatprep.subr.bf16.mxu0 %v2753
      %4245 = vmatpush1.bf16.msra.mxu0 %v2752
      %4246 = vmatprep.subr.bf16.mxu0 %v2757
      %4247 = vmatpush1.bf16.msra.mxu0 %v2756
      %4248 = vmatprep.subr.bf16.mxu0 %v2761
      %4249 = vmatpush1.bf16.msra.mxu0 %v2760
      %4250 = vmatprep.subr.bf16.mxu0 %v2765
      %4251 = vmatpush1.bf16.msra.mxu0 %v2764
      %4252 = vmatprep.mubr.bf16.mxu0 %v877
      %4253 = vmatmul.mubr.bf16.gmra.mrb[0].mxu0 %v876
      %v4254 = vpop.f32.mrb[0].mxu0
      %v4255 = vadd.f32 %v4212, %v4254
      %v4256 = vpop.f32.mrb[0].mxu0
      %v4257 = vadd.f32 %v4214, %v4256
      %v4258 = vpop.f32.mrb[0].mxu0
      %v4259 = vadd.f32 %v4216, %v4258
      %v4260 = vpop.f32.mrb[0].mxu0
      %v4261 = vadd.f32 %v4218, %v4260
      %4262 = vdwg.mxu0
      %4263 = vmatprep.subr.bf16.mxu0 %v2769
      %4264 = vmatpush1.bf16.msra.mxu0 %v2768
      %4265 = vmatprep.subr.bf16.mxu0 %v2773
      %4266 = vmatpush1.bf16.msra.mxu0 %v2772
      %4267 = vmatprep.subr.bf16.mxu0 %v2777
      %4268 = vmatpush1.bf16.msra.mxu0 %v2776
      %4269 = vmatprep.subr.bf16.mxu0 %v2781
      %4270 = vmatpush1.bf16.msra.mxu0 %v2780
      %4271 = vmatprep.subr.bf16.mxu0 %v2785
      %4272 = vmatpush1.bf16.msra.mxu0 %v2784
      %4273 = vmatprep.subr.bf16.mxu0 %v2789
      %4274 = vmatpush1.bf16.msra.mxu0 %v2788
      %4275 = vmatprep.subr.bf16.mxu0 %v2793
      %4276 = vmatpush1.bf16.msra.mxu0 %v2792
      %4277 = vmatprep.subr.bf16.mxu0 %v2797
      %4278 = vmatpush1.bf16.msra.mxu0 %v2796
      %4279 = vmatprep.subr.bf16.mxu0 %v2801
      %4280 = vmatpush1.bf16.msra.mxu0 %v2800
      %4281 = vmatprep.subr.bf16.mxu0 %v2805
      %4282 = vmatpush1.bf16.msra.mxu0 %v2804
      %4283 = vmatprep.subr.bf16.mxu0 %v2809
      %4284 = vmatpush1.bf16.msra.mxu0 %v2808
      %4285 = vmatprep.subr.bf16.mxu0 %v2813
      %4286 = vmatpush1.bf16.msra.mxu0 %v2812
      %4287 = vmatprep.subr.bf16.mxu0 %v2817
      %4288 = vmatpush1.bf16.msra.mxu0 %v2816
      %4289 = vmatprep.subr.bf16.mxu0 %v2821
      %4290 = vmatpush1.bf16.msra.mxu0 %v2820
      %4291 = vmatprep.subr.bf16.mxu0 %v2825
      %4292 = vmatpush1.bf16.msra.mxu0 %v2824
      %4293 = vmatprep.subr.bf16.mxu0 %v2829
      %4294 = vmatpush1.bf16.msra.mxu0 %v2828
      %4295 = vmatprep.mubr.bf16.mxu0 %v879
      %4296 = vmatmul.mubr.bf16.gmra.mrb[0].mxu0 %v878
      %v4297 = vpop.f32.mrb[0].mxu0
      %v4298 = vadd.f32 %v4255, %v4297
      %v4299 = vpop.f32.mrb[0].mxu0
      %v4300 = vadd.f32 %v4257, %v4299
      %v4301 = vpop.f32.mrb[0].mxu0
      %v4302 = vadd.f32 %v4259, %v4301
      %v4303 = vpop.f32.mrb[0].mxu0
      %v4304 = vadd.f32 %v4261, %v4303
      %4305 = vdwg.mxu0
      %4306 = vmatprep.subr.bf16.mxu0 %v2833
      %4307 = vmatpush1.bf16.msra.mxu0 %v2832
      %4308 = vmatprep.subr.bf16.mxu0 %v2837
      %4309 = vmatpush1.bf16.msra.mxu0 %v2836
      %4310 = vmatprep.subr.bf16.mxu0 %v2841
      %4311 = vmatpush1.bf16.msra.mxu0 %v2840
      %4312 = vmatprep.subr.bf16.mxu0 %v2845
      %4313 = vmatpush1.bf16.msra.mxu0 %v2844
      %4314 = vmatprep.subr.bf16.mxu0 %v2849
      %4315 = vmatpush1.bf16.msra.mxu0 %v2848
      %4316 = vmatprep.subr.bf16.mxu0 %v2853
      %4317 = vmatpush1.bf16.msra.mxu0 %v2852
      %4318 = vmatprep.subr.bf16.mxu0 %v2857
      %4319 = vmatpush1.bf16.msra.mxu0 %v2856
      %4320 = vmatprep.subr.bf16.mxu0 %v2861
      %4321 = vmatpush1.bf16.msra.mxu0 %v2860
      %4322 = vmatprep.subr.bf16.mxu0 %v2865
      %4323 = vmatpush1.bf16.msra.mxu0 %v2864
      %4324 = vmatprep.subr.bf16.mxu0 %v2869
      %4325 = vmatpush1.bf16.msra.mxu0 %v2868
      %4326 = vmatprep.subr.bf16.mxu0 %v2873
      %4327 = vmatpush1.bf16.msra.mxu0 %v2872
      %4328 = vmatprep.subr.bf16.mxu0 %v2877
      %4329 = vmatpush1.bf16.msra.mxu0 %v2876
      %4330 = vmatprep.subr.bf16.mxu0 %v2881
      %4331 = vmatpush1.bf16.msra.mxu0 %v2880
      %4332 = vmatprep.subr.bf16.mxu0 %v2885
      %4333 = vmatpush1.bf16.msra.mxu0 %v2884
      %4334 = vmatprep.subr.bf16.mxu0 %v2889
      %4335 = vmatpush1.bf16.msra.mxu0 %v2888
      %4336 = vmatprep.subr.bf16.mxu0 %v2893
      %4337 = vmatpush1.bf16.msra.mxu0 %v2892
      %4338 = vmatprep.mubr.bf16.mxu0 %v881
      %4339 = vmatmul.mubr.bf16.gmra.mrb[0].mxu0 %v880
      %v4340 = vpop.f32.mrb[0].mxu0
      %v4341 = vadd.f32 %v4298, %v4340
      %v4342 = vpop.f32.mrb[0].mxu0
      %v4343 = vadd.f32 %v4300, %v4342
      %v4344 = vpop.f32.mrb[0].mxu0
      %v4345 = vadd.f32 %v4302, %v4344
      %v4346 = vpop.f32.mrb[0].mxu0
      %v4347 = vadd.f32 %v4304, %v4346
      %4348 = vdwg.mxu0
      %4349 = vmatprep.subr.bf16.mxu0 %v2897
      %4350 = vmatpush1.bf16.msra.mxu0 %v2896
      %4351 = vmatprep.subr.bf16.mxu0 %v2901
      %4352 = vmatpush1.bf16.msra.mxu0 %v2900
      %4353 = vmatprep.subr.bf16.mxu0 %v2905
      %4354 = vmatpush1.bf16.msra.mxu0 %v2904
      %4355 = vmatprep.subr.bf16.mxu0 %v2909
      %4356 = vmatpush1.bf16.msra.mxu0 %v2908
      %4357 = vmatprep.subr.bf16.mxu0 %v2913
      %4358 = vmatpush1.bf16.msra.mxu0 %v2912
      %4359 = vmatprep.subr.bf16.mxu0 %v2917
      %4360 = vmatpush1.bf16.msra.mxu0 %v2916
      %4361 = vmatprep.subr.bf16.mxu0 %v2921
      %4362 = vmatpush1.bf16.msra.mxu0 %v2920
      %4363 = vmatprep.subr.bf16.mxu0 %v2925
      %4364 = vmatpush1.bf16.msra.mxu0 %v2924
      %4365 = vmatprep.subr.bf16.mxu0 %v2929
      %4366 = vmatpush1.bf16.msra.mxu0 %v2928
      %4367 = vmatprep.subr.bf16.mxu0 %v2933
      %4368 = vmatpush1.bf16.msra.mxu0 %v2932
      %4369 = vmatprep.subr.bf16.mxu0 %v2937
      %4370 = vmatpush1.bf16.msra.mxu0 %v2936
      %4371 = vmatprep.subr.bf16.mxu0 %v2941
      %4372 = vmatpush1.bf16.msra.mxu0 %v2940
      %4373 = vmatprep.subr.bf16.mxu0 %v2945
      %4374 = vmatpush1.bf16.msra.mxu0 %v2944
      %4375 = vmatprep.subr.bf16.mxu0 %v2949
      %4376 = vmatpush1.bf16.msra.mxu0 %v2948
      %4377 = vmatprep.subr.bf16.mxu0 %v2953
      %4378 = vmatpush1.bf16.msra.mxu0 %v2952
      %4379 = vmatprep.subr.bf16.mxu0 %v2957
      %4380 = vmatpush1.bf16.msra.mxu0 %v2956
      %4381 = vmatprep.mubr.bf16.mxu0 %v883
      %4382 = vmatmul.mubr.bf16.gmra.mrb[0].mxu0 %v882
      %v4383 = vpop.f32.mrb[0].mxu0
      %v4384 = vadd.f32 %v4341, %v4383
      %v4385 = vpop.f32.mrb[0].mxu0
      %v4386 = vadd.f32 %v4343, %v4385
      %v4387 = vpop.f32.mrb[0].mxu0
      %v4388 = vadd.f32 %v4345, %v4387
      %v4389 = vpop.f32.mrb[0].mxu0
      %v4390 = vadd.f32 %v4347, %v4389
      %4391 = vdwg.mxu0
      %4392 = vmatprep.subr.bf16.mxu0 %v2961
      %4393 = vmatpush1.bf16.msra.mxu0 %v2960
      %4394 = vmatprep.subr.bf16.mxu0 %v2965
      %4395 = vmatpush1.bf16.msra.mxu0 %v2964
      %4396 = vmatprep.subr.bf16.mxu0 %v2969
      %4397 = vmatpush1.bf16.msra.mxu0 %v2968
      %4398 = vmatprep.subr.bf16.mxu0 %v2973
      %4399 = vmatpush1.bf16.msra.mxu0 %v2972
      %4400 = vmatprep.subr.bf16.mxu0 %v2977
      %4401 = vmatpush1.bf16.msra.mxu0 %v2976
      %4402 = vmatprep.subr.bf16.mxu0 %v2981
      %4403 = vmatpush1.bf16.msra.mxu0 %v2980
      %4404 = vmatprep.subr.bf16.mxu0 %v2985
      %4405 = vmatpush1.bf16.msra.mxu0 %v2984
      %4406 = vmatprep.subr.bf16.mxu0 %v2989
      %4407 = vmatpush1.bf16.msra.mxu0 %v2988
      %4408 = vmatprep.subr.bf16.mxu0 %v2993
      %4409 = vmatpush1.bf16.msra.mxu0 %v2992
      %4410 = vmatprep.subr.bf16.mxu0 %v2997
      %4411 = vmatpush1.bf16.msra.mxu0 %v2996
      %4412 = vmatprep.subr.bf16.mxu0 %v3001
      %4413 = vmatpush1.bf16.msra.mxu0 %v3000
      %4414 = vmatprep.subr.bf16.mxu0 %v3005
      %4415 = vmatpush1.bf16.msra.mxu0 %v3004
      %4416 = vmatprep.subr.bf16.mxu0 %v3009
      %4417 = vmatpush1.bf16.msra.mxu0 %v3008
      %4418 = vmatprep.subr.bf16.mxu0 %v3013
      %4419 = vmatpush1.bf16.msra.mxu0 %v3012
      %4420 = vmatprep.subr.bf16.mxu0 %v3017
      %4421 = vmatpush1.bf16.msra.mxu0 %v3016
      %4422 = vmatprep.subr.bf16.mxu0 %v3021
      %4423 = vmatpush1.bf16.msra.mxu0 %v3020
      %4424 = vmatprep.mubr.bf16.mxu0 %v885
      %4425 = vmatmul.mubr.bf16.gmra.mrb[0].mxu0 %v884
      %v4426 = vpop.f32.mrb[0].mxu0
      %v4427 = vadd.f32 %v4384, %v4426
      %v4428 = vpop.f32.mrb[0].mxu0
      %v4429 = vadd.f32 %v4386, %v4428
      %v4430 = vpop.f32.mrb[0].mxu0
      %v4431 = vadd.f32 %v4388, %v4430
      %v4432 = vpop.f32.mrb[0].mxu0
      %v4433 = vadd.f32 %v4390, %v4432
      %4434 = vdwg.mxu0
      %4435 = vmatprep.subr.bf16.mxu0 %v3025
      %4436 = vmatpush1.bf16.msra.mxu0 %v3024
      %4437 = vmatprep.subr.bf16.mxu0 %v3029
      %4438 = vmatpush1.bf16.msra.mxu0 %v3028
      %4439 = vmatprep.subr.bf16.mxu0 %v3033
      %4440 = vmatpush1.bf16.msra.mxu0 %v3032
      %4441 = vmatprep.subr.bf16.mxu0 %v3037
      %4442 = vmatpush1.bf16.msra.mxu0 %v3036
      %4443 = vmatprep.subr.bf16.mxu0 %v3041
      %4444 = vmatpush1.bf16.msra.mxu0 %v3040
      %4445 = vmatprep.subr.bf16.mxu0 %v3045
      %4446 = vmatpush1.bf16.msra.mxu0 %v3044
      %4447 = vmatprep.subr.bf16.mxu0 %v3049
      %4448 = vmatpush1.bf16.msra.mxu0 %v3048
      %4449 = vmatprep.subr.bf16.mxu0 %v3053
      %4450 = vmatpush1.bf16.msra.mxu0 %v3052
      %4451 = vmatprep.subr.bf16.mxu0 %v3057
      %4452 = vmatpush1.bf16.msra.mxu0 %v3056
      %4453 = vmatprep.subr.bf16.mxu0 %v3061
      %4454 = vmatpush1.bf16.msra.mxu0 %v3060
      %4455 = vmatprep.subr.bf16.mxu0 %v3065
      %4456 = vmatpush1.bf16.msra.mxu0 %v3064
      %4457 = vmatprep.subr.bf16.mxu0 %v3069
      %4458 = vmatpush1.bf16.msra.mxu0 %v3068
      %4459 = vmatprep.subr.bf16.mxu0 %v3073
      %4460 = vmatpush1.bf16.msra.mxu0 %v3072
      %4461 = vmatprep.subr.bf16.mxu0 %v3077
      %4462 = vmatpush1.bf16.msra.mxu0 %v3076
      %4463 = vmatprep.subr.bf16.mxu0 %v3081
      %4464 = vmatpush1.bf16.msra.mxu0 %v3080
      %4465 = vmatprep.subr.bf16.mxu0 %v3085
      %4466 = vmatpush1.bf16.msra.mxu0 %v3084
      %4467 = vmatprep.mubr.bf16.mxu0 %v887
      %4468 = vmatmul.mubr.bf16.gmra.mrb[0].mxu0 %v886
      %v4469 = vpop.f32.mrb[0].mxu0
      %v4470 = vadd.f32 %v4427, %v4469
      %v4471 = vpop.f32.mrb[0].mxu0
      %v4472 = vadd.f32 %v4429, %v4471
      %v4473 = vpop.f32.mrb[0].mxu0
      %v4474 = vadd.f32 %v4431, %v4473
      %v4475 = vpop.f32.mrb[0].mxu0
      %v4476 = vadd.f32 %v4433, %v4475
      %4477 = vdwg.mxu0
      %4478 = vmatprep.subr.bf16.mxu0 %v3089
      %4479 = vmatpush1.bf16.msra.mxu0 %v3088
      %4480 = vmatprep.subr.bf16.mxu0 %v3093
      %4481 = vmatpush1.bf16.msra.mxu0 %v3092
      %4482 = vmatprep.subr.bf16.mxu0 %v3097
      %4483 = vmatpush1.bf16.msra.mxu0 %v3096
      %4484 = vmatprep.subr.bf16.mxu0 %v3101
      %4485 = vmatpush1.bf16.msra.mxu0 %v3100
      %4486 = vmatprep.subr.bf16.mxu0 %v3105
      %4487 = vmatpush1.bf16.msra.mxu0 %v3104
      %4488 = vmatprep.subr.bf16.mxu0 %v3109
      %4489 = vmatpush1.bf16.msra.mxu0 %v3108
      %4490 = vmatprep.subr.bf16.mxu0 %v3113
      %4491 = vmatpush1.bf16.msra.mxu0 %v3112
      %4492 = vmatprep.subr.bf16.mxu0 %v3117
      %4493 = vmatpush1.bf16.msra.mxu0 %v3116
      %4494 = vmatprep.subr.bf16.mxu0 %v3121
      %4495 = vmatpush1.bf16.msra.mxu0 %v3120
      %4496 = vmatprep.subr.bf16.mxu0 %v3125
      %4497 = vmatpush1.bf16.msra.mxu0 %v3124
      %4498 = vmatprep.subr.bf16.mxu0 %v3129
      %4499 = vmatpush1.bf16.msra.mxu0 %v3128
      %4500 = vmatprep.subr.bf16.mxu0 %v3133
      %4501 = vmatpush1.bf16.msra.mxu0 %v3132
      %4502 = vmatprep.subr.bf16.mxu0 %v3137
      %4503 = vmatpush1.bf16.msra.mxu0 %v3136
      %4504 = vmatprep.subr.bf16.mxu0 %v3141
      %4505 = vmatpush1.bf16.msra.mxu0 %v3140
      %4506 = vmatprep.subr.bf16.mxu0 %v3145
      %4507 = vmatpush1.bf16.msra.mxu0 %v3144
      %4508 = vmatprep.subr.bf16.mxu0 %v3149
      %4509 = vmatpush1.bf16.msra.mxu0 %v3148
      %4510 = vmatprep.mubr.bf16.mxu0 %v889
      %4511 = vmatmul.mubr.bf16.gmra.mrb[0].mxu0 %v888
      %v4512 = vpop.f32.mrb[0].mxu0
      %v4513 = vadd.f32 %v4470, %v4512
      %v4514 = vpop.f32.mrb[0].mxu0
      %v4515 = vadd.f32 %v4472, %v4514
      %v4516 = vpop.f32.mrb[0].mxu0
      %v4517 = vadd.f32 %v4474, %v4516
      %v4518 = vpop.f32.mrb[0].mxu0
      %v4519 = vadd.f32 %v4476, %v4518
      %4520 = vdwg.mxu0
      %4521 = vmatprep.subr.bf16.mxu0 %v3153
      %4522 = vmatpush1.bf16.msra.mxu0 %v3152
      %4523 = vmatprep.subr.bf16.mxu0 %v3157
      %4524 = vmatpush1.bf16.msra.mxu0 %v3156
      %4525 = vmatprep.subr.bf16.mxu0 %v3161
      %4526 = vmatpush1.bf16.msra.mxu0 %v3160
      %4527 = vmatprep.subr.bf16.mxu0 %v3165
      %4528 = vmatpush1.bf16.msra.mxu0 %v3164
      %4529 = vmatprep.subr.bf16.mxu0 %v3169
      %4530 = vmatpush1.bf16.msra.mxu0 %v3168
      %4531 = vmatprep.subr.bf16.mxu0 %v3173
      %4532 = vmatpush1.bf16.msra.mxu0 %v3172
      %4533 = vmatprep.subr.bf16.mxu0 %v3177
      %4534 = vmatpush1.bf16.msra.mxu0 %v3176
      %4535 = vmatprep.subr.bf16.mxu0 %v3181
      %4536 = vmatpush1.bf16.msra.mxu0 %v3180
      %4537 = vmatprep.subr.bf16.mxu0 %v3185
      %4538 = vmatpush1.bf16.msra.mxu0 %v3184
      %4539 = vmatprep.subr.bf16.mxu0 %v3189
      %4540 = vmatpush1.bf16.msra.mxu0 %v3188
      %4541 = vmatprep.subr.bf16.mxu0 %v3193
      %4542 = vmatpush1.bf16.msra.mxu0 %v3192
      %4543 = vmatprep.subr.bf16.mxu0 %v3197
      %4544 = vmatpush1.bf16.msra.mxu0 %v3196
      %4545 = vmatprep.subr.bf16.mxu0 %v3201
      %4546 = vmatpush1.bf16.msra.mxu0 %v3200
      %4547 = vmatprep.subr.bf16.mxu0 %v3205
      %4548 = vmatpush1.bf16.msra.mxu0 %v3204
      %4549 = vmatprep.subr.bf16.mxu0 %v3209
      %4550 = vmatpush1.bf16.msra.mxu0 %v3208
      %4551 = vmatprep.subr.bf16.mxu0 %v3213
      %4552 = vmatpush1.bf16.msra.mxu0 %v3212
      %4553 = vmatprep.mubr.bf16.mxu0 %v891
      %4554 = vmatmul.mubr.bf16.gmra.mrb[0].mxu0 %v890
      %v4555 = vpop.f32.mrb[0].mxu0
      %v4556 = vadd.f32 %v4513, %v4555
      %v4557 = vpop.f32.mrb[0].mxu0
      %v4558 = vadd.f32 %v4515, %v4557
      %v4559 = vpop.f32.mrb[0].mxu0
      %v4560 = vadd.f32 %v4517, %v4559
      %v4561 = vpop.f32.mrb[0].mxu0
      %v4562 = vadd.f32 %v4519, %v4561
      %4563 = vdwg.mxu0
      %vm4564 = vcmp.ge.f32.partialorder %v4169, 0.0
      %vm4565 = vcmp.ge.f32.partialorder %v4171, 0.0
      %vm4566 = vcmp.ge.f32.partialorder %v4556, 0.0
      %vm4567 = vcmp.ge.f32.partialorder %v4558, 0.0
      %vm4568 = vcmp.ge.f32.partialorder %v4173, 0.0
      %vm4569 = vcmp.ge.f32.partialorder %v4175, 0.0
      %vm4570 = vcmp.ge.f32.partialorder %v4560, 0.0
      %vm4571 = vcmp.ge.f32.partialorder %v4562, 0.0
      %v4572 = vmul.f32 %v4169, 0.01
      %v4573 = vmul.f32 %v4171, 0.01
      %v4574 = vmul.f32 %v4556, 0.01
      %v4575 = vmul.f32 %v4558, 0.01
      %v4576 = vmul.f32 %v4173, 0.01
      %v4577 = vmul.f32 %v4175, 0.01
      %v4578 = vmul.f32 %v4560, 0.01
      %v4579 = vmul.f32 %v4562, 0.01
      %v4580 = vsel %vm4564, %v4169, %v4572
      %v4581 = vsel %vm4565, %v4171, %v4573
      %v4582 = vsel %vm4566, %v4556, %v4574
      %v4583 = vsel %vm4567, %v4558, %v4575
      %v4584 = vsel %vm4568, %v4173, %v4576
      %v4585 = vsel %vm4569, %v4175, %v4577
      %v4586 = vsel %vm4570, %v4560, %v4578
      %v4587 = vsel %vm4571, %v4562, %v4579
      %v4588 = vld [vmem:[%s3] sm:$0xff]
      %v4589 = vld [vmem:[%s3 + $0x8] sm:$0xff]
      %v4590 = vld [vmem:[%s3 + $0x10] sm:$0xff]
      %v4591 = vld [vmem:[%s3 + $0x18] sm:$0xff]
      %v4592 = vld [vmem:[%s3 + $0x20] sm:$0xff]
      %v4593 = vld [vmem:[%s3 + $0x28] sm:$0xff]
      %v4594 = vld [vmem:[%s3 + $0x30] sm:$0xff]
      %v4595 = vld [vmem:[%s3 + $0x38] sm:$0xff]
      %v4596 = vmul.f32 %v4580, %v4588
      %v4597 = vmul.f32 %v4581, %v4589
      %v4598 = vmul.f32 %v4582, %v4590
      %v4599 = vmul.f32 %v4583, %v4591
      %v4600 = vmul.f32 %v4584, %v4592
      %v4601 = vmul.f32 %v4585, %v4593
      %v4602 = vmul.f32 %v4586, %v4594
      %v4603 = vmul.f32 %v4587, %v4595
      %v4604 = vadd.f32 %v4596, %v4597
      %v4605 = vadd.f32 %v4604, %v4598
      %v4606 = vadd.f32 %v4605, %v4599
      %4607 = vadd.xlane.f32.xlu0 %v4606
      %v4608 = vpop.xlane.xlu0 %4607
      %v4609 = vadd.f32 %v4600, %v4601
      %v4610 = vadd.f32 %v4609, %v4602
      %v4611 = vadd.f32 %v4610, %v4603
      %4612 = vadd.xlane.f32.xlu0 %v4611
      %v4613 = vpop.xlane.xlu0 %4612
      %vm4614 = vcmask 7168
      %4615 = vst.msk [vmem:[%s202] sm:$0xff] %vm4614, %v4608
      %4616 = vst.msk [vmem:[%s202 + $0x8] sm:$0xff] %vm4614, %v4613
      %s4617 = smul.u32 2, %s15
      %p4618 = scmp.lt.s32.totalorder %s4617, 3
      %s4619 = scalar_select %p4618, %s4617, 3
      %s4620 = smul.addr %s4619, 8
      %s4621 = scalar_lea.vmem %s4, %s4620
      // Predicated region
      $region37: #{discriminator_forward.5} parent=35 // pred_check
        %p4622 = pneg %p122
      $region38: #{discriminator_forward.5} parent=35 // pred_check_branch
        %4624 = sbr.rel (%p4622) target = $region40
      $region39: #{discriminator_forward.5} parent=35 // pred_region
        %s4625 = smul.u32 2, %s15
      $region40: #{discriminator_forward.5} parent=35 // pred_fallthru
        _
    $region36: #{discriminator_forward.5} parent=5 // pred_fallthru
      _
    %p4626 = scmp.le.s32.totalorder 2, %s10
    // Predicated region
    $region41: #{discriminator_forward.5} parent=5 // pred_check
      %p4627 = pneg %p4626
    $region42: #{discriminator_forward.5} parent=5 // pred_check_branch
      %4629 = sbr.rel (%p4627) target = $region44
    $region43: #{discriminator_forward.5} parent=5 // pred_region
      %s4630 = ssub.s32 %s10, 2
      // Predicated region
      $region45: #{discriminator_forward.5} parent=43 // pred_check
        %p4631 = pneg %p128
      $region46: #{discriminator_forward.5} parent=43 // pred_check_branch
        %4633 = sbr.rel (%p4631) target = $region48
      $region47: #{discriminator_forward.5} parent=43 // pred_region
        %s4634 = smul.u32 2, %s16
        %p4635 = scmp.lt.s32.totalorder %s4634, 3
        %s4636 = scalar_select %p4635, %s4634, 3
        %s4637 = smul.addr %s4636, 8
        %s4638 = scalar_lea.vmem %s4, %s4637
      $region48: #{discriminator_forward.5} parent=43 // pred_fallthru
        _
    $region44: #{discriminator_forward.5} parent=5 // pred_fallthru
      _
  $region6: #{discriminator_forward.5} parent=0 // loop_footer
    %s14 = sadd.s32 1, %s10
  $region7: #{discriminator_forward.5} parent=0 // loop_footer_branch
    %9 = sbr.rel target = $region3
  $region8: #{discriminator_forward.5} parent=0 // loop_exit
    _

</llo_original>
